<compile_context>
chip_gen: v5e
topology: v5e:2x2
jax: 0.10.0
libtpu: 0.0.40
codegen_flags: <defaults>
</compile_context>

<pallas_src>
import jax
import jax.numpy as jnp
import numpy as np
from jax import lax
from jax.experimental import pallas as pl
from jax.experimental.pallas import tpu as pltpu

_HIDDEN1 = 512
_HIDDEN2 = 256
_OUT_ROWS = 8     # sublane-padded row count of the transposed final layer
_MAX_TM = 512     # max rows per batch tile


def _round_up(v, m):
    return ((v + m - 1) // m) * m


def _leaky_relu(x, negative_slope=0.2):
    return jnp.where(x > 0, x, negative_slope * x)


def discriminator_kernel(x_ref, w1_ref, b1_ref, w2_ref, b2_ref, w3_ref, b3_ref,
                         out_ref):
    # One fused MLP tile: three MXU matmuls (bf16 in, f32 acc), VPU bias +
    # LeakyReLU, EUP exp + approximate reciprocal for the sigmoid.
    x = x_ref[...].astype(jnp.bfloat16)                                # (TM, D)

    h1 = jnp.dot(x, w1_ref[...], preferred_element_type=jnp.float32)   # (TM, 512)
    h1 = _leaky_relu(h1 + b1_ref[...])

    h2 = jnp.dot(h1.astype(jnp.bfloat16), w2_ref[...],
                 preferred_element_type=jnp.float32)                   # (TM, 256)
    h2 = _leaky_relu(h2 + b2_ref[...])

    # Final Linear(256, 1) computed transposed: (8, 256) contract (TM, 256) on
    # their last dims -> (8, TM). Only row 0 carries real weights; the rest are
    # zero padding so the result tile is sublane-aligned.
    logits_t = lax.dot_general(
        w3_ref[...], h2.astype(jnp.bfloat16),
        dimension_numbers=(((1,), (1,)), ((), ())),
        preferred_element_type=jnp.float32)                            # (8, TM)
    logits_t = logits_t + b3_ref[0]

    # sigmoid(x) = 1 / (1 + exp(-x)); reciprocal routed to EUP (approx vrcp).
    out_ref[...] = pl.reciprocal(1.0 + jnp.exp(-logits_t), approx=True)


def init_params(key, in_features, hidden1=_HIDDEN1, hidden2=_HIDDEN2,
                out_features=1):
    """Deterministic PyTorch-style init: U(-1/sqrt(fan_in), 1/sqrt(fan_in))."""
    ks = jax.random.split(key, 6)

    def linear(kw, kb, fan_in, fan_out):
        bound = 1.0 / np.sqrt(fan_in)
        w = jax.random.uniform(kw, (fan_out, fan_in), jnp.float32, -bound, bound)
        b = jax.random.uniform(kb, (fan_out,), jnp.float32, -bound, bound)
        return w, b

    w1, b1 = linear(ks[0], ks[1], in_features, hidden1)
    w2, b2 = linear(ks[2], ks[3], hidden1, hidden2)
    w3, b3 = linear(ks[4], ks[5], hidden2, out_features)
    return (w1, b1, w2, b2, w3, b3)


def prepare_params(params):
    """One-time layout prep: (in, out) transpose, bf16 cast, sublane-pad layer 3."""
    w1, b1, w2, b2, w3, b3 = params
    w1t = w1.T.astype(jnp.bfloat16)                                 # (D, 512)
    w2t = w2.T.astype(jnp.bfloat16)                                 # (512, 256)
    w3r = jnp.zeros((_OUT_ROWS, w3.shape[1]), jnp.bfloat16)         # (8, 256)
    w3r = w3r.at[:w3.shape[0], :].set(w3.astype(jnp.bfloat16))      # row 0 = weights
    b1r = b1.reshape(1, -1).astype(jnp.float32)                     # (1, 512)
    b2r = b2.reshape(1, -1).astype(jnp.float32)                     # (1, 256)
    b3s = b3.reshape(-1).astype(jnp.float32)                        # (1,) SMEM scalar
    return (w1t, b1r, w2t, b2r, w3r, b3s)


def _vmem_limit_bytes(TM, D):
    """Scoped-VMEM budget from actual tile sizes (worst case: everything 2x-buffered)."""
    x_bytes = 2 * TM * D * 4                                           # f32 input tile
    w_bytes = 2 * (D * _HIDDEN1 + _HIDDEN1 * _HIDDEN2
                   + _OUT_ROWS * _HIDDEN2) * 2                         # bf16 weights
    b_bytes = 2 * (_HIDDEN1 + _HIDDEN2) * 4
    out_bytes = 2 * _OUT_ROWS * TM * 4
    act_bytes = TM * (_HIDDEN1 + _HIDDEN2) * (4 + 2)                   # f32 + bf16 h1/h2
    total = x_bytes + w_bytes + b_bytes + out_bytes + act_bytes + (4 << 20)
    return int(min(max(total, 16 << 20), 64 << 20))


def _build_call(TM, D, n_tiles, single_buffer_weights):
    """Construct the pallas_call; resident params optionally single-buffered."""
    def resident(shape):
        if single_buffer_weights:
            return pl.BlockSpec(shape, lambda i: (0, 0),
                                pipeline_mode=pl.Buffered(1))
        return pl.BlockSpec(shape, lambda i: (0, 0))

    return pl.pallas_call(
        discriminator_kernel,
        out_shape=jax.ShapeDtypeStruct((n_tiles * _OUT_ROWS, TM), jnp.float32),
        grid=(n_tiles,),
        in_specs=[
            pl.BlockSpec((TM, D), lambda i: (i, 0)),          # x tiles stream (f32)
            resident((D, _HIDDEN1)),                          # w1 (bf16) resident
            resident((1, _HIDDEN1)),                          # b1
            resident((_HIDDEN1, _HIDDEN2)),                   # w2
            resident((1, _HIDDEN2)),                          # b2
            resident((_OUT_ROWS, _HIDDEN2)),                  # w3 (transposed rows)
            pl.BlockSpec(memory_space=pltpu.MemorySpace.SMEM),  # b3 scalar
        ],
        out_specs=pl.BlockSpec((_OUT_ROWS, TM), lambda i: (i, 0)),
        compiler_params=pltpu.CompilerParams(
            dimension_semantics=("parallel",),
            vmem_limit_bytes=_vmem_limit_bytes(TM, D),
        ),
    )


def discriminator_forward(img, prepared_params):
    w1t, b1r, w2t, b2r, w3r, b3s = prepared_params

    B = img.shape[0]
    x = img.reshape(B, -1).astype(jnp.float32)   # (B, C*H*W); bf16 cast is in-kernel
    D = x.shape[1]

    # Batch tile: large enough to amortize per-grid-step overhead, sublane
    # aligned, and chosen so that B > 8 always yields >= 2 ("parallel") tiles
    # (keeps both v7x TensorCores busy).
    if B <= 8:
        TM = 8
    else:
        TM = min(_MAX_TM, _round_up(pl.cdiv(B, 2), 8))
    n_tiles = pl.cdiv(B, TM)

    args = (x, w1t, b1r, w2t, b2r, w3r, b3s)
    try:
        out = _build_call(TM, D, n_tiles, single_buffer_weights=True)(*args)
    except Exception:
        # Fallback: some Pallas builds reject pl.Buffered(1) on top-level
        # pallas_call specs; re-run with default double-buffered residents.
        out = _build_call(TM, D, n_tiles, single_buffer_weights=False)(*args)

    # Row 0 of each (8, TM) tile holds the real sigmoid outputs for rows
    # [i*TM, i*TM + TM); trailing rows of a partial final tile are discarded.
    out = out.reshape(n_tiles, _OUT_ROWS, TM)[:, 0, :]       # (n_tiles, TM)
    return out.reshape(n_tiles * TM)[:B].reshape(B, 1)       # (B, 1)


def reference_forward(img, params):
    """Pure-JAX f32 reference reproducing the PyTorch module."""
    w1, b1, w2, b2, w3, b3 = params
    x = img.reshape(img.shape[0], -1).astype(jnp.float32)
    h1 = x @ w1.T + b1
    h1 = jnp.where(h1 > 0, h1, 0.2 * h1)
    h2 = h1 @ w2.T + b2
    h2 = jnp.where(h2 > 0, h2, 0.2 * h2)
    return jax.nn.sigmoid(h2 @ w3.T + b3)


if __name__ == "__main__":
    # Small shapes consistent with the module: channels=4, img_size=16 -> D=1024
    B, C, H, W = 2, 4, 16, 16
    key = jax.random.PRNGKey(0)
    k_img, k_par, k_img2 = jax.random.split(key, 3)

    params = init_params(k_par, in_features=C * H * W)
    prepared = prepare_params(params)

    # Tiny-batch path (single, partial tile; exercises no-pad handling).
    img = jax.random.normal(k_img, (B, C, H, W), jnp.float32)
    validity = jax.block_until_ready(discriminator_forward(img, prepared))
    ref = reference_forward(img, params)
    np.testing.assert_allclose(np.asarray(validity), np.asarray(ref),
                               rtol=0, atol=1e-2)
    assert validity.shape == (B, 1)

    # Multi-tile path with a partial final block (no jnp.pad, 2 parallel tiles).
    B2 = 200
    img2 = jax.random.normal(k_img2, (B2, C, H, W), jnp.float32)
    validity2 = jax.block_until_ready(discriminator_forward(img2, prepared))
    ref2 = reference_forward(img2, params)
    np.testing.assert_allclose(np.asarray(validity2), np.asarray(ref2),
                               rtol=0, atol=1e-2)
    assert validity2.shape == (B2, 1)

    print("KERNEL_OK")
</pallas_src>

<mosaic_0001>
module attributes {stable_mosaic.version = 11 : i64} {
  func.func @discriminator_kernel(%arg0: i32, %arg1: memref<8x1024xf32, #tpu.memory_space<vmem>>, %arg2: memref<1024x512xbf16, #tpu.memory_space<vmem>>, %arg3: memref<1x512xf32, #tpu.memory_space<vmem>>, %arg4: memref<512x256xbf16, #tpu.memory_space<vmem>>, %arg5: memref<1x256xf32, #tpu.memory_space<vmem>>, %arg6: memref<8x256xbf16, #tpu.memory_space<vmem>>, %arg7: memref<1xf32, #tpu.memory_space<smem>>, %arg8: memref<8x8xf32, #tpu.memory_space<vmem>>) attributes {dimension_semantics = [#tpu.dimension_semantics<parallel>], iteration_bounds = array<i64: 1>, scalar_prefetch = 0 : i64, scratch_operands = 0 : i64, tpu.core_type = #tpu.core_type<tc>, window_params = [{transform_indices = @transform_0, window_bounds = array<i64: 8, 1024>}, {pipeline_mode = #tpu.pipeline_mode<synchronous>, transform_indices = @transform_1, window_bounds = array<i64: 1024, 512>}, {pipeline_mode = #tpu.pipeline_mode<synchronous>, transform_indices = @transform_2, window_bounds = array<i64: 1, 512>}, {pipeline_mode = #tpu.pipeline_mode<synchronous>, transform_indices = @transform_3, window_bounds = array<i64: 512, 256>}, {pipeline_mode = #tpu.pipeline_mode<synchronous>, transform_indices = @transform_4, window_bounds = array<i64: 1, 256>}, {pipeline_mode = #tpu.pipeline_mode<synchronous>, transform_indices = @transform_5, window_bounds = array<i64: 8, 256>}, {transform_indices = @transform_6, window_bounds = array<i64: 1>}, {transform_indices = @transform_7, window_bounds = array<i64: 8, 8>}]} {
    %c0 = arith.constant 0 : index
    %c0_0 = arith.constant 0 : index
    %0 = vector.load %arg1[%c0, %c0_0] : memref<8x1024xf32, #tpu.memory_space<vmem>>, vector<8x1024xf32>
    %1 = arith.truncf %0 : vector<8x1024xf32> to vector<8x1024xbf16>
    %c0_1 = arith.constant 0 : index
    %c0_2 = arith.constant 0 : index
    %2 = vector.load %arg2[%c0_1, %c0_2] : memref<1024x512xbf16, #tpu.memory_space<vmem>>, vector<1024x512xbf16>
    %cst = arith.constant dense<0.000000e+00> : vector<8x512xf32>
    %3 = tpu.matmul %1, %2, %cst {dimension_numbers = #tpu.dot_dimension_numbers<[1], [0], [0], [1], [0, 0, 1, 1], [], []>} : vector<8x1024xbf16>, vector<1024x512xbf16>, vector<8x512xf32> -> vector<8x512xf32>
    %c0_3 = arith.constant 0 : index
    %c0_4 = arith.constant 0 : index
    %4 = vector.load %arg3[%c0_3, %c0_4] : memref<1x512xf32, #tpu.memory_space<vmem>>, vector<1x512xf32>
    %5 = vector.broadcast %4 : vector<1x512xf32> to vector<8x512xf32>
    %6 = arith.addf %3, %5 : vector<8x512xf32>
    %cst_5 = arith.constant 0.000000e+00 : f32
    %7 = vector.broadcast %cst_5 : f32 to vector<8x512xf32>
    %8 = arith.cmpf ogt, %6, %7 : vector<8x512xf32>
    %cst_6 = arith.constant 2.000000e-01 : f32
    %9 = vector.broadcast %cst_6 : f32 to vector<8x512xf32>
    %10 = arith.mulf %9, %6 : vector<8x512xf32>
    %11 = arith.select %8, %6, %10 : vector<8x512xi1>, vector<8x512xf32>
    %12 = arith.truncf %11 : vector<8x512xf32> to vector<8x512xbf16>
    %c0_7 = arith.constant 0 : index
    %c0_8 = arith.constant 0 : index
    %13 = vector.load %arg4[%c0_7, %c0_8] : memref<512x256xbf16, #tpu.memory_space<vmem>>, vector<512x256xbf16>
    %cst_9 = arith.constant dense<0.000000e+00> : vector<8x256xf32>
    %14 = tpu.matmul %12, %13, %cst_9 {dimension_numbers = #tpu.dot_dimension_numbers<[1], [0], [0], [1], [0, 0, 1, 1], [], []>} : vector<8x512xbf16>, vector<512x256xbf16>, vector<8x256xf32> -> vector<8x256xf32>
    %c0_10 = arith.constant 0 : index
    %c0_11 = arith.constant 0 : index
    %15 = vector.load %arg5[%c0_10, %c0_11] : memref<1x256xf32, #tpu.memory_space<vmem>>, vector<1x256xf32>
    %16 = vector.broadcast %15 : vector<1x256xf32> to vector<8x256xf32>
    %17 = arith.addf %14, %16 : vector<8x256xf32>
    %cst_12 = arith.constant 0.000000e+00 : f32
    %18 = vector.broadcast %cst_12 : f32 to vector<8x256xf32>
    %19 = arith.cmpf ogt, %17, %18 : vector<8x256xf32>
    %cst_13 = arith.constant 2.000000e-01 : f32
    %20 = vector.broadcast %cst_13 : f32 to vector<8x256xf32>
    %21 = arith.mulf %20, %17 : vector<8x256xf32>
    %22 = arith.select %19, %17, %21 : vector<8x256xi1>, vector<8x256xf32>
    %c0_14 = arith.constant 0 : index
    %c0_15 = arith.constant 0 : index
    %23 = vector.load %arg6[%c0_14, %c0_15] : memref<8x256xbf16, #tpu.memory_space<vmem>>, vector<8x256xbf16>
    %24 = arith.truncf %22 : vector<8x256xf32> to vector<8x256xbf16>
    %cst_16 = arith.constant dense<0.000000e+00> : vector<8x8xf32>
    %25 = tpu.matmul %23, %24, %cst_16 {dimension_numbers = #tpu.dot_dimension_numbers<[1], [1], [0], [0], [0, 0, 1, 0], [], []>} : vector<8x256xbf16>, vector<8x256xbf16>, vector<8x8xf32> -> vector<8x8xf32>
    %c0_17 = arith.constant 0 : index
    %26 = memref.load %arg7[%c0_17] : memref<1xf32, #tpu.memory_space<smem>>
    %27 = vector.broadcast %26 : f32 to vector<8x8xf32>
    %28 = arith.addf %25, %27 : vector<8x8xf32>
    %cst_18 = arith.constant 0.000000e+00 : f32
    %29 = vector.broadcast %cst_18 : f32 to vector<8x8xf32>
    %30 = arith.subf %29, %28 : vector<8x8xf32>
    %31 = math.exp %30 : vector<8x8xf32>
    %cst_19 = arith.constant 1.000000e+00 : f32
    %32 = vector.broadcast %cst_19 : f32 to vector<8x8xf32>
    %33 = arith.addf %32, %31 : vector<8x8xf32>
    %34 = tpu.reciprocal %33 {approx = true} : vector<8x8xf32> -> vector<8x8xf32>
    %c0_20 = arith.constant 0 : index
    %c0_21 = arith.constant 0 : index
    %35 = vector.load %arg8[%c0_20, %c0_21] : memref<8x8xf32, #tpu.memory_space<vmem>>, vector<8x8xf32>
    tpu.vector_store %arg8[%c0_20, %c0_21], %34 {strides = array<i32>} : memref<8x8xf32, #tpu.memory_space<vmem>>, vector<8x8xf32>,
    return
  }
  func.func @transform_0(%arg0: i32) -> (i32, i32) {
    %c0_i32 = arith.constant 0 : i32
    %c0_i32_0 = arith.constant 0 : i32
    return %arg0, %c0_i32 : i32, i32
  }
  func.func @transform_1(%arg0: i32) -> (i32, i32) {
    %c0_i32 = arith.constant 0 : i32
    %c0_i32_0 = arith.constant 0 : i32
    %c0_i32_1 = arith.constant 0 : i32
    return %c0_i32, %c0_i32_0 : i32, i32
  }
  func.func @transform_2(%arg0: i32) -> (i32, i32) {
    %c0_i32 = arith.constant 0 : i32
    %c0_i32_0 = arith.constant 0 : i32
    %c0_i32_1 = arith.constant 0 : i32
    return %c0_i32, %c0_i32_0 : i32, i32
  }
  func.func @transform_3(%arg0: i32) -> (i32, i32) {
    %c0_i32 = arith.constant 0 : i32
    %c0_i32_0 = arith.constant 0 : i32
    %c0_i32_1 = arith.constant 0 : i32
    return %c0_i32, %c0_i32_0 : i32, i32
  }
  func.func @transform_4(%arg0: i32) -> (i32, i32) {
    %c0_i32 = arith.constant 0 : i32
    %c0_i32_0 = arith.constant 0 : i32
    %c0_i32_1 = arith.constant 0 : i32
    return %c0_i32, %c0_i32_0 : i32, i32
  }
  func.func @transform_5(%arg0: i32) -> (i32, i32) {
    %c0_i32 = arith.constant 0 : i32
    %c0_i32_0 = arith.constant 0 : i32
    %c0_i32_1 = arith.constant 0 : i32
    return %c0_i32, %c0_i32_0 : i32, i32
  }
  func.func @transform_6(%arg0: i32) -> i32 {
    %c0_i32 = arith.constant 0 : i32
    %c0_i32_0 = arith.constant 0 : i32
    return %c0_i32 : i32
  }
  func.func @transform_7(%arg0: i32) -> (i32, i32) {
    %c0_i32 = arith.constant 0 : i32
    %c0_i32_0 = arith.constant 0 : i32
    return %arg0, %c0_i32 : i32, i32
  }
}

module attributes {stable_mosaic.version = 11 : i64} {
  func.func @discriminator_kernel(%arg0: i32, %arg1: memref<8x1024xf32, #tpu.memory_space<vmem>>, %arg2: memref<1024x512xbf16, #tpu.memory_space<vmem>>, %arg3: memref<1x512xf32, #tpu.memory_space<vmem>>, %arg4: memref<512x256xbf16, #tpu.memory_space<vmem>>, %arg5: memref<1x256xf32, #tpu.memory_space<vmem>>, %arg6: memref<8x256xbf16, #tpu.memory_space<vmem>>, %arg7: memref<1xf32, #tpu.memory_space<smem>>, %arg8: memref<8x8xf32, #tpu.memory_space<vmem>>) attributes {dimension_semantics = [#tpu.dimension_semantics<parallel>], iteration_bounds = array<i64: 1>, scalar_prefetch = 0 : i64, scratch_operands = 0 : i64, tpu.core_type = #tpu.core_type<tc>, window_params = [{transform_indices = @transform_0, window_bounds = array<i64: 8, 1024>}, {pipeline_mode = #tpu.pipeline_mode<synchronous>, transform_indices = @transform_1, window_bounds = array<i64: 1024, 512>}, {pipeline_mode = #tpu.pipeline_mode<synchronous>, transform_indices = @transform_2, window_bounds = array<i64: 1, 512>}, {pipeline_mode = #tpu.pipeline_mode<synchronous>, transform_indices = @transform_3, window_bounds = array<i64: 512, 256>}, {pipeline_mode = #tpu.pipeline_mode<synchronous>, transform_indices = @transform_4, window_bounds = array<i64: 1, 256>}, {pipeline_mode = #tpu.pipeline_mode<synchronous>, transform_indices = @transform_5, window_bounds = array<i64: 8, 256>}, {transform_indices = @transform_6, window_bounds = array<i64: 1>}, {transform_indices = @transform_7, window_bounds = array<i64: 8, 8>}]} {
    %c0 = arith.constant 0 : index
    %c0_0 = arith.constant 0 : index
    %0 = vector.load %arg1[%c0, %c0_0] : memref<8x1024xf32, #tpu.memory_space<vmem>>, vector<8x1024xf32>
    %1 = arith.truncf %0 : vector<8x1024xf32> to vector<8x1024xbf16>
    %c0_1 = arith.constant 0 : index
    %c0_2 = arith.constant 0 : index
    %2 = vector.load %arg2[%c0_1, %c0_2] : memref<1024x512xbf16, #tpu.memory_space<vmem>>, vector<1024x512xbf16>
    %cst = arith.constant dense<0.000000e+00> : vector<8x512xf32>
    %3 = tpu.matmul %1, %2, %cst {dimension_numbers = #tpu.dot_dimension_numbers<[1], [0], [0], [1], [0, 0, 1, 1], [], []>} : vector<8x1024xbf16>, vector<1024x512xbf16>, vector<8x512xf32> -> vector<8x512xf32>
    %c0_3 = arith.constant 0 : index
    %c0_4 = arith.constant 0 : index
    %4 = vector.load %arg3[%c0_3, %c0_4] : memref<1x512xf32, #tpu.memory_space<vmem>>, vector<1x512xf32>
    %5 = vector.broadcast %4 : vector<1x512xf32> to vector<8x512xf32>
    %6 = arith.addf %3, %5 : vector<8x512xf32>
    %cst_5 = arith.constant 0.000000e+00 : f32
    %7 = vector.broadcast %cst_5 : f32 to vector<8x512xf32>
    %8 = arith.cmpf ogt, %6, %7 : vector<8x512xf32>
    %cst_6 = arith.constant 2.000000e-01 : f32
    %9 = vector.broadcast %cst_6 : f32 to vector<8x512xf32>
    %10 = arith.mulf %9, %6 : vector<8x512xf32>
    %11 = arith.select %8, %6, %10 : vector<8x512xi1>, vector<8x512xf32>
    %12 = arith.truncf %11 : vector<8x512xf32> to vector<8x512xbf16>
    %c0_7 = arith.constant 0 : index
    %c0_8 = arith.constant 0 : index
    %13 = vector.load %arg4[%c0_7, %c0_8] : memref<512x256xbf16, #tpu.memory_space<vmem>>, vector<512x256xbf16>
    %cst_9 = arith.constant dense<0.000000e+00> : vector<8x256xf32>
    %14 = tpu.matmul %12, %13, %cst_9 {dimension_numbers = #tpu.dot_dimension_numbers<[1], [0], [0], [1], [0, 0, 1, 1], [], []>} : vector<8x512xbf16>, vector<512x256xbf16>, vector<8x256xf32> -> vector<8x256xf32>
    %c0_10 = arith.constant 0 : index
    %c0_11 = arith.constant 0 : index
    %15 = vector.load %arg5[%c0_10, %c0_11] : memref<1x256xf32, #tpu.memory_space<vmem>>, vector<1x256xf32>
    %16 = vector.broadcast %15 : vector<1x256xf32> to vector<8x256xf32>
    %17 = arith.addf %14, %16 : vector<8x256xf32>
    %cst_12 = arith.constant 0.000000e+00 : f32
    %18 = vector.broadcast %cst_12 : f32 to vector<8x256xf32>
    %19 = arith.cmpf ogt, %17, %18 : vector<8x256xf32>
    %cst_13 = arith.constant 2.000000e-01 : f32
    %20 = vector.broadcast %cst_13 : f32 to vector<8x256xf32>
    %21 = arith.mulf %20, %17 : vector<8x256xf32>
    %22 = arith.select %19, %17, %21 : vector<8x256xi1>, vector<8x256xf32>
    %c0_14 = arith.constant 0 : index
    %c0_15 = arith.constant 0 : index
    %23 = vector.load %arg6[%c0_14, %c0_15] : memref<8x256xbf16, #tpu.memory_space<vmem>>, vector<8x256xbf16>
    %24 = arith.truncf %22 : vector<8x256xf32> to vector<8x256xbf16>
    %cst_16 = arith.constant dense<0.000000e+00> : vector<8x8xf32>
    %25 = tpu.matmul %23, %24, %cst_16 {dimension_numbers = #tpu.dot_dimension_numbers<[1], [1], [0], [0], [0, 0, 1, 0], [], []>} : vector<8x256xbf16>, vector<8x256xbf16>, vector<8x8xf32> -> vector<8x8xf32>
    %c0_17 = arith.constant 0 : index
    %26 = memref.load %arg7[%c0_17] : memref<1xf32, #tpu.memory_space<smem>>
    %27 = vector.broadcast %26 : f32 to vector<8x8xf32>
    %28 = arith.addf %25, %27 : vector<8x8xf32>
    %cst_18 = arith.constant 0.000000e+00 : f32
    %29 = vector.broadcast %cst_18 : f32 to vector<8x8xf32>
    %30 = arith.subf %29, %28 : vector<8x8xf32>
    %31 = math.exp %30 : vector<8x8xf32>
    %cst_19 = arith.constant 1.000000e+00 : f32
    %32 = vector.broadcast %cst_19 : f32 to vector<8x8xf32>
    %33 = arith.addf %32, %31 : vector<8x8xf32>
    %34 = tpu.reciprocal %33 {approx = true} : vector<8x8xf32> -> vector<8x8xf32>
    %c0_20 = arith.constant 0 : index
    %c0_21 = arith.constant 0 : index
    %35 = vector.load %arg8[%c0_20, %c0_21] : memref<8x8xf32, #tpu.memory_space<vmem>>, vector<8x8xf32>
    tpu.vector_store %arg8[%c0_20, %c0_21], %34 {strides = array<i32>} : memref<8x8xf32, #tpu.memory_space<vmem>>, vector<8x8xf32>,
    return
  }
  func.func @transform_0(%arg0: i32) -> (i32, i32) {
    %c0_i32 = arith.constant 0 : i32
    %c0_i32_0 = arith.constant 0 : i32
    return %arg0, %c0_i32 : i32, i32
  }
  func.func @transform_1(%arg0: i32) -> (i32, i32) {
    %c0_i32 = arith.constant 0 : i32
    %c0_i32_0 = arith.constant 0 : i32
    %c0_i32_1 = arith.constant 0 : i32
    return %c0_i32, %c0_i32_0 : i32, i32
  }
  func.func @transform_2(%arg0: i32) -> (i32, i32) {
    %c0_i32 = arith.constant 0 : i32
    %c0_i32_0 = arith.constant 0 : i32
    %c0_i32_1 = arith.constant 0 : i32
    return %c0_i32, %c0_i32_0 : i32, i32
  }
  func.func @transform_3(%arg0: i32) -> (i32, i32) {
    %c0_i32 = arith.constant 0 : i32
    %c0_i32_0 = arith.constant 0 : i32
    %c0_i32_1 = arith.constant 0 : i32
    return %c0_i32, %c0_i32_0 : i32, i32
  }
  func.func @transform_4(%arg0: i32) -> (i32, i32) {
    %c0_i32 = arith.constant 0 : i32
    %c0_i32_0 = arith.constant 0 : i32
    %c0_i32_1 = arith.constant 0 : i32
    return %c0_i32, %c0_i32_0 : i32, i32
  }
  func.func @transform_5(%arg0: i32) -> (i32, i32) {
    %c0_i32 = arith.constant 0 : i32
    %c0_i32_0 = arith.constant 0 : i32
    %c0_i32_1 = arith.constant 0 : i32
    return %c0_i32, %c0_i32_0 : i32, i32
  }
  func.func @transform_6(%arg0: i32) -> i32 {
    %c0_i32 = arith.constant 0 : i32
    %c0_i32_0 = arith.constant 0 : i32
    return %c0_i32 : i32
  }
  func.func @transform_7(%arg0: i32) -> (i32, i32) {
    %c0_i32 = arith.constant 0 : i32
    %c0_i32_0 = arith.constant 0 : i32
    return %arg0, %c0_i32 : i32, i32
  }
}

</mosaic_0001>

<llo_original>
// kernel: tpu_custom_call.1
$region0: #{tpu_custom_call.1}
  #allocation0 [shape = 'u32[]', space=smem, size = 0x4, offset = 0x4, fixed_abs, tag = 'smem constant byte address 0x4 - core index']
  #allocation1 [shape = 'u32[72,128]{1,0:T(1,128)}', space=vmem, size = 0x9000, scoped, tag = 'internal scratch']
  #allocation2 [shape = 'f32[1]{0:T(128)S(6)}', space=smem, size = 0x200, scoped, tag = 'scoped memory for tpu_custom_call.1']
  %s0 = inlined_call_operand.hbm [shape: f32[2,1024], index: 0, kind: input, shape index: {}]
  %s1 = inlined_call_operand.hbm [shape: bf16[1024,512], index: 1, kind: input, shape index: {}]
  %s2 = inlined_call_operand.hbm [shape: f32[1,512], index: 2, kind: input, shape index: {}]
  %s3 = inlined_call_operand.hbm [shape: bf16[512,256], index: 3, kind: input, shape index: {}]
  %s4 = inlined_call_operand.vmem [shape: f32[1,256], index: 4, kind: input, shape index: {}]
  %s5 = inlined_call_operand.hbm [shape: bf16[8,256], index: 5, kind: input, shape index: {}]
  %s6 = inlined_call_operand.<no memory space> [shape: f32[1], index: 6, kind: input, shape index: {}]
  %s7 = inlined_call_operand.hbm [shape: f32[8,8], index: 7, kind: output, shape index: {}]
  %s8 = sld [smem:[#allocation0]]
  $region58: #{tpu_custom_call.1} parent=0
    _
  %s10 = ssub.s32 1, %s8
  %s11 = scalar_select 0, %s10, %s8
  %12 = sst [smem:[#allocation2]] %s6
  $region1: #{tpu_custom_call.1} parent=0
    #allocation3 [shape = 'u8[32768]{0}', space=vmem, size = 0x8000, scoped, tag = 'input window, operand 0, single buffered']
    #allocation4 [shape = 's32[1]{0}', space=sflag, size = 0x4, scoped, tag = 'scoped memory for tpu_custom_call.1']
    #allocation5 [shape = 's32[1]{0}', space=sflag, size = 0x4, scoped, tag = 'scoped memory for tpu_custom_call.1']
    #allocation6 [shape = 'u8[1048576]{0}', space=vmem, size = 0x100000, scoped, tag = 'input window, operand 1, single buffered']
    #allocation7 [shape = 's32[1]{0}', space=sflag, size = 0x4, scoped, tag = 'scoped memory for tpu_custom_call.1']
    #allocation8 [shape = 'u8[2048]{0}', space=vmem, size = 0x800, scoped, tag = 'input window, operand 2, single buffered']
    #allocation9 [shape = 'u8[262144]{0}', space=vmem, size = 0x40000, scoped, tag = 'input window, operand 3, single buffered']
    #allocation10 [shape = 's32[1]{0}', space=sflag, size = 0x4, scoped, tag = 'scoped memory for tpu_custom_call.1']
    #allocation11 [shape = 'u8[4096]{0}', space=vmem, size = 0x1000, scoped, tag = 'input window, operand 5, single buffered']
    #allocation12 [shape = 'u8[4096]{0}', space=vmem, size = 0x1000, scoped, tag = 'output window, operand 0, single buffered']
    %13 = vsyncpa [#allocation4], 0
    %14 = vsyncpa [#allocation7], 0
    %15 = vsyncpa [#allocation10], 0
    %16 = vsyncpa [#allocation5], 0
    // Predicated region
    $region2: #{tpu_custom_call.1} parent=1 // pred_check
      _
    $region3: #{tpu_custom_call.1} parent=1 // pred_check_branch
      %18 = sbr.rel (0) target = $region5
    $region4: #{tpu_custom_call.1} parent=1 // pred_region
      %20 = vsyncadd [#allocation4], 768
      %s21 = sshll.u32 %s0, 4
      %s22 = int_to_ptr.hbm [resolvable:$true] %s21
      %s23 = sshll.u32 [#allocation3], 4
      %s24 = int_to_ptr.vmem [resolvable:$true] %s23
      %29 = dma.hbm_to_vmem [thread:$0]  %s22, 256, %s24, [#allocation4], 256, 256, 16
    $region5: #{tpu_custom_call.1} parent=1 // pred_fallthru
      _
    // Predicated region
    $region6: #{tpu_custom_call.1} parent=1 // pred_check
      _
    $region7: #{tpu_custom_call.1} parent=1 // pred_check_branch
      %31 = sbr.rel (0) target = $region9
    $region8: #{tpu_custom_call.1} parent=1 // pred_region
      %33 = vsyncadd [#allocation7], 0
      %s34 = sshll.u32 %s1, 4
      %s35 = int_to_ptr.hbm [resolvable:$true] %s34
      %s36 = sshll.u32 [#allocation6], 4
      %s37 = int_to_ptr.vmem [resolvable:$true] %s36
      %42 = dma.hbm_to_vmem [thread:$0]  %s35, 32768, %s37, [#allocation7], 256, 256, 16
    $region9: #{tpu_custom_call.1} parent=1 // pred_fallthru
      _
    // Predicated region
    $region10: #{tpu_custom_call.1} parent=1 // pred_check
      _
    $region11: #{tpu_custom_call.1} parent=1 // pred_check_branch
      %44 = sbr.rel (0) target = $region13
    $region12: #{tpu_custom_call.1} parent=1 // pred_region
      %46 = vsyncadd [#allocation7], 0
      %s48 = sshll.u32 %s2, 4
      %s49 = int_to_ptr.hbm [resolvable:$true] %s48
      %s50 = sshll.u32 [#allocation8], 4
      %s51 = int_to_ptr.vmem [resolvable:$true] %s50
      %53 = dma.hbm_to_vmem [thread:$0]  %s49, 64, %s51, [#allocation7]
    $region13: #{tpu_custom_call.1} parent=1 // pred_fallthru
      _
    // Predicated region
    $region14: #{tpu_custom_call.1} parent=1 // pred_check
      _
    $region15: #{tpu_custom_call.1} parent=1 // pred_check_branch
      %55 = sbr.rel (0) target = $region17
    $region16: #{tpu_custom_call.1} parent=1 // pred_region
      %57 = vsyncadd [#allocation10], 0
      %s58 = sshll.u32 %s3, 4
      %s59 = int_to_ptr.hbm [resolvable:$true] %s58
      %s60 = sshll.u32 [#allocation9], 4
      %s61 = int_to_ptr.vmem [resolvable:$true] %s60
      %66 = dma.hbm_to_vmem [thread:$0]  %s59, 8192, %s61, [#allocation10], 128, 128, 8
    $region17: #{tpu_custom_call.1} parent=1 // pred_fallthru
      _
    // Predicated region
    $region18: #{tpu_custom_call.1} parent=1 // pred_check
      _
    $region19: #{tpu_custom_call.1} parent=1 // pred_check_branch
      %68 = sbr.rel (0) target = $region21
    $region20: #{tpu_custom_call.1} parent=1 // pred_region
      _
    $region21: #{tpu_custom_call.1} parent=1 // pred_fallthru
      _
    // Predicated region
    $region22: #{tpu_custom_call.1} parent=1 // pred_check
      _
    $region23: #{tpu_custom_call.1} parent=1 // pred_check_branch
      %70 = sbr.rel (0) target = $region25
    $region24: #{tpu_custom_call.1} parent=1 // pred_region
      %72 = vsyncadd [#allocation10], 0
      %s74 = sshll.u32 %s5, 4
      %s75 = int_to_ptr.hbm [resolvable:$true] %s74
      %s76 = sshll.u32 [#allocation11], 4
      %s77 = int_to_ptr.vmem [resolvable:$true] %s76
      %79 = dma.hbm_to_vmem [thread:$0]  %s75, 128, %s77, [#allocation10]
    $region25: #{tpu_custom_call.1} parent=1 // pred_fallthru
      _
    // Predicated region
    $region26: #{tpu_custom_call.1} parent=1 // pred_check
      _
    $region27: #{tpu_custom_call.1} parent=1 // pred_check_branch
      %81 = sbr.rel (0) target = $region29
    $region28: #{tpu_custom_call.1} parent=1 // pred_region
      _
    $region29: #{tpu_custom_call.1} parent=1 // pred_fallthru
      _
    // Predicated region
    $region30: #{tpu_custom_call.1} parent=1 // pred_check
      _
    $region31: #{tpu_custom_call.1} parent=1 // pred_check_branch
      %83 = sbr.rel (0) target = $region33
    $region32: #{tpu_custom_call.1} parent=1 // pred_region
      %85 = dma.done [#allocation4], 1024
    $region33: #{tpu_custom_call.1} parent=1 // pred_fallthru
      _
    // Predicated region
    $region34: #{tpu_custom_call.1} parent=1 // pred_check
      _
    $region35: #{tpu_custom_call.1} parent=1 // pred_check_branch
      %87 = sbr.rel (0) target = $region37
    $region36: #{tpu_custom_call.1} parent=1 // pred_region
      %89 = dma.done [#allocation7], 32768
    $region37: #{tpu_custom_call.1} parent=1 // pred_fallthru
      _
    // Predicated region
    $region38: #{tpu_custom_call.1} parent=1 // pred_check
      _
    $region39: #{tpu_custom_call.1} parent=1 // pred_check_branch
      %91 = sbr.rel (0) target = $region41
    $region40: #{tpu_custom_call.1} parent=1 // pred_region
      %93 = dma.done [#allocation7], 64
    $region41: #{tpu_custom_call.1} parent=1 // pred_fallthru
      _
    // Predicated region
    $region42: #{tpu_custom_call.1} parent=1 // pred_check
      _
    $region43: #{tpu_custom_call.1} parent=1 // pred_check_branch
      %95 = sbr.rel (0) target = $region45
    $region44: #{tpu_custom_call.1} parent=1 // pred_region
      %97 = dma.done [#allocation10], 8192
    $region45: #{tpu_custom_call.1} parent=1 // pred_fallthru
      _
    // Predicated region
    $region46: #{tpu_custom_call.1} parent=1 // pred_check
      _
    $region47: #{tpu_custom_call.1} parent=1 // pred_check_branch
      %99 = sbr.rel (0) target = $region49
    $region48: #{tpu_custom_call.1} parent=1 // pred_region
      %101 = dma.done [#allocation10], 128
    $region49: #{tpu_custom_call.1} parent=1 // pred_fallthru
      _
    %v103 = vld [vmem:[#allocation3] sm:$0xff]
    %v104 = vld [vmem:[#allocation3 + $0x8] sm:$0xff]
    %v105 = vld [vmem:[#allocation3 + $0x10] sm:$0xff]
    %v106 = vld [vmem:[#allocation3 + $0x18] sm:$0xff]
    %v107 = vld [vmem:[#allocation3 + $0x20] sm:$0xff]
    %v108 = vld [vmem:[#allocation3 + $0x28] sm:$0xff]
    %v109 = vld [vmem:[#allocation3 + $0x30] sm:$0xff]
    %v110 = vld [vmem:[#allocation3 + $0x38] sm:$0xff]
    %119 = vst [vmem:[#allocation1] ss:$4 sm:$0xff] %v103
    %s120 = scalar_lea.vmem [#allocation1], 1
    %121 = vst [vmem:[%s120] ss:$4 sm:$0xff] %v105
    %s122 = scalar_lea.vmem [#allocation1], 2
    %123 = vst [vmem:[%s122] ss:$4 sm:$0xff] %v107
    %s124 = scalar_lea.vmem [#allocation1], 3
    %125 = vst [vmem:[%s124] ss:$4 sm:$0xff] %v109
    %s126 = scalar_lea.vmem [#allocation1], 32
    %127 = vst [vmem:[%s126] ss:$4 sm:$0xff] %v104
    %s128 = scalar_lea.vmem [#allocation1], 33
    %129 = vst [vmem:[%s128] ss:$4 sm:$0xff] %v106
    %s130 = scalar_lea.vmem [#allocation1], 34
    %131 = vst [vmem:[%s130] ss:$4 sm:$0xff] %v108
    %s132 = scalar_lea.vmem [#allocation1], 35
    %133 = vst [vmem:[%s132] ss:$4 sm:$0xff] %v110
    %v134 = vld.sshfl [vmem:[#allocation1] sm:$0xff pattern:$0x73625140]
    %v135 = vld.sshfl [vmem:[#allocation1 + $0x8] sm:$0xff pattern:$0x73625140]
    %v136 = vld.sshfl [vmem:[#allocation1 + $0x10] sm:$0xff pattern:$0x73625140]
    %v137 = vld.sshfl [vmem:[#allocation1 + $0x18] sm:$0xff pattern:$0x73625140]
    %v138 = vld.sshfl [vmem:[#allocation1 + $0x20] sm:$0xff pattern:$0x73625140]
    %v139 = vld.sshfl [vmem:[#allocation1 + $0x28] sm:$0xff pattern:$0x73625140]
    %v140 = vld.sshfl [vmem:[#allocation1 + $0x30] sm:$0xff pattern:$0x73625140]
    %v141 = vld.sshfl [vmem:[#allocation1 + $0x38] sm:$0xff pattern:$0x73625140]
    %v150 = vpack.c.bf16 %v134, %v134
    %v151 = vpack.c.bf16 %v135, %v135
    %v152 = vpack.c.bf16 %v136, %v136
    %v153 = vpack.c.bf16 %v137, %v137
    %v154 = vpack.c.bf16 %v138, %v138
    %v155 = vpack.c.bf16 %v139, %v139
    %v156 = vpack.c.bf16 %v140, %v140
    %v157 = vpack.c.bf16 %v141, %v141
    %v158 = vld [vmem:[#allocation6] sm:$0xff]
    %v159 = vld [vmem:[#allocation6 + $0x8] sm:$0xff]
    %v160 = vld [vmem:[#allocation6 + $0x10] sm:$0xff]
    %v161 = vld [vmem:[#allocation6 + $0x18] sm:$0xff]
    %v162 = vld [vmem:[#allocation6 + $0x20] sm:$0xff]
    %v163 = vld [vmem:[#allocation6 + $0x28] sm:$0xff]
    %v164 = vld [vmem:[#allocation6 + $0x30] sm:$0xff]
    %v165 = vld [vmem:[#allocation6 + $0x38] sm:$0xff]
    %v166 = vld [vmem:[#allocation6 + $0x40] sm:$0xff]
    %v167 = vld [vmem:[#allocation6 + $0x48] sm:$0xff]
    %v168 = vld [vmem:[#allocation6 + $0x50] sm:$0xff]
    %v169 = vld [vmem:[#allocation6 + $0x58] sm:$0xff]
    %v170 = vld [vmem:[#allocation6 + $0x60] sm:$0xff]
    %v171 = vld [vmem:[#allocation6 + $0x68] sm:$0xff]
    %v172 = vld [vmem:[#allocation6 + $0x70] sm:$0xff]
    %v173 = vld [vmem:[#allocation6 + $0x78] sm:$0xff]
    %v174 = vld [vmem:[#allocation6 + $0x80] sm:$0xff]
    %v175 = vld [vmem:[#allocation6 + $0x88] sm:$0xff]
    %v176 = vld [vmem:[#allocation6 + $0x90] sm:$0xff]
    %v177 = vld [vmem:[#allocation6 + $0x98] sm:$0xff]
    %v178 = vld [vmem:[#allocation6 + $0xa0] sm:$0xff]
    %v179 = vld [vmem:[#allocation6 + $0xa8] sm:$0xff]
    %v180 = vld [vmem:[#allocation6 + $0xb0] sm:$0xff]
    %v181 = vld [vmem:[#allocation6 + $0xb8] sm:$0xff]
    %v182 = vld [vmem:[#allocation6 + $0xc0] sm:$0xff]
    %v183 = vld [vmem:[#allocation6 + $0xc8] sm:$0xff]
    %v184 = vld [vmem:[#allocation6 + $0xd0] sm:$0xff]
    %v185 = vld [vmem:[#allocation6 + $0xd8] sm:$0xff]
    %v186 = vld [vmem:[#allocation6 + $0xe0] sm:$0xff]
    %v187 = vld [vmem:[#allocation6 + $0xe8] sm:$0xff]
    %v188 = vld [vmem:[#allocation6 + $0xf0] sm:$0xff]
    %v189 = vld [vmem:[#allocation6 + $0xf8] sm:$0xff]
    %v190 = vld [vmem:[#allocation6 + $0x100] sm:$0xff]
    %v191 = vld [vmem:[#allocation6 + $0x108] sm:$0xff]
    %v192 = vld [vmem:[#allocation6 + $0x110] sm:$0xff]
    %v193 = vld [vmem:[#allocation6 + $0x118] sm:$0xff]
    %v194 = vld [vmem:[#allocation6 + $0x120] sm:$0xff]
    %v195 = vld [vmem:[#allocation6 + $0x128] sm:$0xff]
    %v196 = vld [vmem:[#allocation6 + $0x130] sm:$0xff]
    %v197 = vld [vmem:[#allocation6 + $0x138] sm:$0xff]
    %v198 = vld [vmem:[#allocation6 + $0x140] sm:$0xff]
    %v199 = vld [vmem:[#allocation6 + $0x148] sm:$0xff]
    %v200 = vld [vmem:[#allocation6 + $0x150] sm:$0xff]
    %v201 = vld [vmem:[#allocation6 + $0x158] sm:$0xff]
    %v202 = vld [vmem:[#allocation6 + $0x160] sm:$0xff]
    %v203 = vld [vmem:[#allocation6 + $0x168] sm:$0xff]
    %v204 = vld [vmem:[#allocation6 + $0x170] sm:$0xff]
    %v205 = vld [vmem:[#allocation6 + $0x178] sm:$0xff]
    %v206 = vld [vmem:[#allocation6 + $0x180] sm:$0xff]
    %v207 = vld [vmem:[#allocation6 + $0x188] sm:$0xff]
    %v208 = vld [vmem:[#allocation6 + $0x190] sm:$0xff]
    %v209 = vld [vmem:[#allocation6 + $0x198] sm:$0xff]
    %v210 = vld [vmem:[#allocation6 + $0x1a0] sm:$0xff]
    %v211 = vld [vmem:[#allocation6 + $0x1a8] sm:$0xff]
    %v212 = vld [vmem:[#allocation6 + $0x1b0] sm:$0xff]
    %v213 = vld [vmem:[#allocation6 + $0x1b8] sm:$0xff]
    %v214 = vld [vmem:[#allocation6 + $0x1c0] sm:$0xff]
    %v215 = vld [vmem:[#allocation6 + $0x1c8] sm:$0xff]
    %v216 = vld [vmem:[#allocation6 + $0x1d0] sm:$0xff]
    %v217 = vld [vmem:[#allocation6 + $0x1d8] sm:$0xff]
    %v218 = vld [vmem:[#allocation6 + $0x1e0] sm:$0xff]
    %v219 = vld [vmem:[#allocation6 + $0x1e8] sm:$0xff]
    %v220 = vld [vmem:[#allocation6 + $0x1f0] sm:$0xff]
    %v221 = vld [vmem:[#allocation6 + $0x1f8] sm:$0xff]
    %v222 = vld [vmem:[#allocation6 + $0x200] sm:$0xff]
    %v223 = vld [vmem:[#allocation6 + $0x208] sm:$0xff]
    %v224 = vld [vmem:[#allocation6 + $0x210] sm:$0xff]
    %v225 = vld [vmem:[#allocation6 + $0x218] sm:$0xff]
    %v226 = vld [vmem:[#allocation6 + $0x220] sm:$0xff]
    %v227 = vld [vmem:[#allocation6 + $0x228] sm:$0xff]
    %v228 = vld [vmem:[#allocation6 + $0x230] sm:$0xff]
    %v229 = vld [vmem:[#allocation6 + $0x238] sm:$0xff]
    %v230 = vld [vmem:[#allocation6 + $0x240] sm:$0xff]
    %v231 = vld [vmem:[#allocation6 + $0x248] sm:$0xff]
    %v232 = vld [vmem:[#allocation6 + $0x250] sm:$0xff]
    %v233 = vld [vmem:[#allocation6 + $0x258] sm:$0xff]
    %v234 = vld [vmem:[#allocation6 + $0x260] sm:$0xff]
    %v235 = vld [vmem:[#allocation6 + $0x268] sm:$0xff]
    %v236 = vld [vmem:[#allocation6 + $0x270] sm:$0xff]
    %v237 = vld [vmem:[#allocation6 + $0x278] sm:$0xff]
    %v238 = vld [vmem:[#allocation6 + $0x280] sm:$0xff]
    %v239 = vld [vmem:[#allocation6 + $0x288] sm:$0xff]
    %v240 = vld [vmem:[#allocation6 + $0x290] sm:$0xff]
    %v241 = vld [vmem:[#allocation6 + $0x298] sm:$0xff]
    %v242 = vld [vmem:[#allocation6 + $0x2a0] sm:$0xff]
    %v243 = vld [vmem:[#allocation6 + $0x2a8] sm:$0xff]
    %v244 = vld [vmem:[#allocation6 + $0x2b0] sm:$0xff]
    %v245 = vld [vmem:[#allocation6 + $0x2b8] sm:$0xff]
    %v246 = vld [vmem:[#allocation6 + $0x2c0] sm:$0xff]
    %v247 = vld [vmem:[#allocation6 + $0x2c8] sm:$0xff]
    %v248 = vld [vmem:[#allocation6 + $0x2d0] sm:$0xff]
    %v249 = vld [vmem:[#allocation6 + $0x2d8] sm:$0xff]
    %v250 = vld [vmem:[#allocation6 + $0x2e0] sm:$0xff]
    %v251 = vld [vmem:[#allocation6 + $0x2e8] sm:$0xff]
    %v252 = vld [vmem:[#allocation6 + $0x2f0] sm:$0xff]
    %v253 = vld [vmem:[#allocation6 + $0x2f8] sm:$0xff]
    %v254 = vld [vmem:[#allocation6 + $0x300] sm:$0xff]
    %v255 = vld [vmem:[#allocation6 + $0x308] sm:$0xff]
    %v256 = vld [vmem:[#allocation6 + $0x310] sm:$0xff]
    %v257 = vld [vmem:[#allocation6 + $0x318] sm:$0xff]
    %v258 = vld [vmem:[#allocation6 + $0x320] sm:$0xff]
    %v259 = vld [vmem:[#allocation6 + $0x328] sm:$0xff]
    %v260 = vld [vmem:[#allocation6 + $0x330] sm:$0xff]
    %v261 = vld [vmem:[#allocation6 + $0x338] sm:$0xff]
    %v262 = vld [vmem:[#allocation6 + $0x340] sm:$0xff]
    %v263 = vld [vmem:[#allocation6 + $0x348] sm:$0xff]
    %v264 = vld [vmem:[#allocation6 + $0x350] sm:$0xff]
    %v265 = vld [vmem:[#allocation6 + $0x358] sm:$0xff]
    %v266 = vld [vmem:[#allocation6 + $0x360] sm:$0xff]
    %v267 = vld [vmem:[#allocation6 + $0x368] sm:$0xff]
    %v268 = vld [vmem:[#allocation6 + $0x370] sm:$0xff]
    %v269 = vld [vmem:[#allocation6 + $0x378] sm:$0xff]
    %v270 = vld [vmem:[#allocation6 + $0x380] sm:$0xff]
    %v271 = vld [vmem:[#allocation6 + $0x388] sm:$0xff]
    %v272 = vld [vmem:[#allocation6 + $0x390] sm:$0xff]
    %v273 = vld [vmem:[#allocation6 + $0x398] sm:$0xff]
    %v274 = vld [vmem:[#allocation6 + $0x3a0] sm:$0xff]
    %v275 = vld [vmem:[#allocation6 + $0x3a8] sm:$0xff]
    %v276 = vld [vmem:[#allocation6 + $0x3b0] sm:$0xff]
    %v277 = vld [vmem:[#allocation6 + $0x3b8] sm:$0xff]
    %v278 = vld [vmem:[#allocation6 + $0x3c0] sm:$0xff]
    %v279 = vld [vmem:[#allocation6 + $0x3c8] sm:$0xff]
    %v280 = vld [vmem:[#allocation6 + $0x3d0] sm:$0xff]
    %v281 = vld [vmem:[#allocation6 + $0x3d8] sm:$0xff]
    %v282 = vld [vmem:[#allocation6 + $0x3e0] sm:$0xff]
    %v283 = vld [vmem:[#allocation6 + $0x3e8] sm:$0xff]
    %v284 = vld [vmem:[#allocation6 + $0x3f0] sm:$0xff]
    %v285 = vld [vmem:[#allocation6 + $0x3f8] sm:$0xff]
    %v286 = vld [vmem:[#allocation6 + $0x400] sm:$0xff]
    %v287 = vld [vmem:[#allocation6 + $0x408] sm:$0xff]
    %v288 = vld [vmem:[#allocation6 + $0x410] sm:$0xff]
    %v289 = vld [vmem:[#allocation6 + $0x418] sm:$0xff]
    %v290 = vld [vmem:[#allocation6 + $0x420] sm:$0xff]
    %v291 = vld [vmem:[#allocation6 + $0x428] sm:$0xff]
    %v292 = vld [vmem:[#allocation6 + $0x430] sm:$0xff]
    %v293 = vld [vmem:[#allocation6 + $0x438] sm:$0xff]
    %v294 = vld [vmem:[#allocation6 + $0x440] sm:$0xff]
    %v295 = vld [vmem:[#allocation6 + $0x448] sm:$0xff]
    %v296 = vld [vmem:[#allocation6 + $0x450] sm:$0xff]
    %v297 = vld [vmem:[#allocation6 + $0x458] sm:$0xff]
    %v298 = vld [vmem:[#allocation6 + $0x460] sm:$0xff]
    %v299 = vld [vmem:[#allocation6 + $0x468] sm:$0xff]
    %v300 = vld [vmem:[#allocation6 + $0x470] sm:$0xff]
    %v301 = vld [vmem:[#allocation6 + $0x478] sm:$0xff]
    %v302 = vld [vmem:[#allocation6 + $0x480] sm:$0xff]
    %v303 = vld [vmem:[#allocation6 + $0x488] sm:$0xff]
    %v304 = vld [vmem:[#allocation6 + $0x490] sm:$0xff]
    %v305 = vld [vmem:[#allocation6 + $0x498] sm:$0xff]
    %v306 = vld [vmem:[#allocation6 + $0x4a0] sm:$0xff]
    %v307 = vld [vmem:[#allocation6 + $0x4a8] sm:$0xff]
    %v308 = vld [vmem:[#allocation6 + $0x4b0] sm:$0xff]
    %v309 = vld [vmem:[#allocation6 + $0x4b8] sm:$0xff]
    %v310 = vld [vmem:[#allocation6 + $0x4c0] sm:$0xff]
    %v311 = vld [vmem:[#allocation6 + $0x4c8] sm:$0xff]
    %v312 = vld [vmem:[#allocation6 + $0x4d0] sm:$0xff]
    %v313 = vld [vmem:[#allocation6 + $0x4d8] sm:$0xff]
    %v314 = vld [vmem:[#allocation6 + $0x4e0] sm:$0xff]
    %v315 = vld [vmem:[#allocation6 + $0x4e8] sm:$0xff]
    %v316 = vld [vmem:[#allocation6 + $0x4f0] sm:$0xff]
    %v317 = vld [vmem:[#allocation6 + $0x4f8] sm:$0xff]
    %v318 = vld [vmem:[#allocation6 + $0x500] sm:$0xff]
    %v319 = vld [vmem:[#allocation6 + $0x508] sm:$0xff]
    %v320 = vld [vmem:[#allocation6 + $0x510] sm:$0xff]
    %v321 = vld [vmem:[#allocation6 + $0x518] sm:$0xff]
    %v322 = vld [vmem:[#allocation6 + $0x520] sm:$0xff]
    %v323 = vld [vmem:[#allocation6 + $0x528] sm:$0xff]
    %v324 = vld [vmem:[#allocation6 + $0x530] sm:$0xff]
    %v325 = vld [vmem:[#allocation6 + $0x538] sm:$0xff]
    %v326 = vld [vmem:[#allocation6 + $0x540] sm:$0xff]
    %v327 = vld [vmem:[#allocation6 + $0x548] sm:$0xff]
    %v328 = vld [vmem:[#allocation6 + $0x550] sm:$0xff]
    %v329 = vld [vmem:[#allocation6 + $0x558] sm:$0xff]
    %v330 = vld [vmem:[#allocation6 + $0x560] sm:$0xff]
    %v331 = vld [vmem:[#allocation6 + $0x568] sm:$0xff]
    %v332 = vld [vmem:[#allocation6 + $0x570] sm:$0xff]
    %v333 = vld [vmem:[#allocation6 + $0x578] sm:$0xff]
    %v334 = vld [vmem:[#allocation6 + $0x580] sm:$0xff]
    %v335 = vld [vmem:[#allocation6 + $0x588] sm:$0xff]
    %v336 = vld [vmem:[#allocation6 + $0x590] sm:$0xff]
    %v337 = vld [vmem:[#allocation6 + $0x598] sm:$0xff]
    %v338 = vld [vmem:[#allocation6 + $0x5a0] sm:$0xff]
    %v339 = vld [vmem:[#allocation6 + $0x5a8] sm:$0xff]
    %v340 = vld [vmem:[#allocation6 + $0x5b0] sm:$0xff]
    %v341 = vld [vmem:[#allocation6 + $0x5b8] sm:$0xff]
    %v342 = vld [vmem:[#allocation6 + $0x5c0] sm:$0xff]
    %v343 = vld [vmem:[#allocation6 + $0x5c8] sm:$0xff]
    %v344 = vld [vmem:[#allocation6 + $0x5d0] sm:$0xff]
    %v345 = vld [vmem:[#allocation6 + $0x5d8] sm:$0xff]
    %v346 = vld [vmem:[#allocation6 + $0x5e0] sm:$0xff]
    %v347 = vld [vmem:[#allocation6 + $0x5e8] sm:$0xff]
    %v348 = vld [vmem:[#allocation6 + $0x5f0] sm:$0xff]
    %v349 = vld [vmem:[#allocation6 + $0x5f8] sm:$0xff]
    %v350 = vld [vmem:[#allocation6 + $0x600] sm:$0xff]
    %v351 = vld [vmem:[#allocation6 + $0x608] sm:$0xff]
    %v352 = vld [vmem:[#allocation6 + $0x610] sm:$0xff]
    %v353 = vld [vmem:[#allocation6 + $0x618] sm:$0xff]
    %v354 = vld [vmem:[#allocation6 + $0x620] sm:$0xff]
    %v355 = vld [vmem:[#allocation6 + $0x628] sm:$0xff]
    %v356 = vld [vmem:[#allocation6 + $0x630] sm:$0xff]
    %v357 = vld [vmem:[#allocation6 + $0x638] sm:$0xff]
    %v358 = vld [vmem:[#allocation6 + $0x640] sm:$0xff]
    %v359 = vld [vmem:[#allocation6 + $0x648] sm:$0xff]
    %v360 = vld [vmem:[#allocation6 + $0x650] sm:$0xff]
    %v361 = vld [vmem:[#allocation6 + $0x658] sm:$0xff]
    %v362 = vld [vmem:[#allocation6 + $0x660] sm:$0xff]
    %v363 = vld [vmem:[#allocation6 + $0x668] sm:$0xff]
    %v364 = vld [vmem:[#allocation6 + $0x670] sm:$0xff]
    %v365 = vld [vmem:[#allocation6 + $0x678] sm:$0xff]
    %v366 = vld [vmem:[#allocation6 + $0x680] sm:$0xff]
    %v367 = vld [vmem:[#allocation6 + $0x688] sm:$0xff]
    %v368 = vld [vmem:[#allocation6 + $0x690] sm:$0xff]
    %v369 = vld [vmem:[#allocation6 + $0x698] sm:$0xff]
    %v370 = vld [vmem:[#allocation6 + $0x6a0] sm:$0xff]
    %v371 = vld [vmem:[#allocation6 + $0x6a8] sm:$0xff]
    %v372 = vld [vmem:[#allocation6 + $0x6b0] sm:$0xff]
    %v373 = vld [vmem:[#allocation6 + $0x6b8] sm:$0xff]
    %v374 = vld [vmem:[#allocation6 + $0x6c0] sm:$0xff]
    %v375 = vld [vmem:[#allocation6 + $0x6c8] sm:$0xff]
    %v376 = vld [vmem:[#allocation6 + $0x6d0] sm:$0xff]
    %v377 = vld [vmem:[#allocation6 + $0x6d8] sm:$0xff]
    %v378 = vld [vmem:[#allocation6 + $0x6e0] sm:$0xff]
    %v379 = vld [vmem:[#allocation6 + $0x6e8] sm:$0xff]
    %v380 = vld [vmem:[#allocation6 + $0x6f0] sm:$0xff]
    %v381 = vld [vmem:[#allocation6 + $0x6f8] sm:$0xff]
    %v382 = vld [vmem:[#allocation6 + $0x700] sm:$0xff]
    %v383 = vld [vmem:[#allocation6 + $0x708] sm:$0xff]
    %v384 = vld [vmem:[#allocation6 + $0x710] sm:$0xff]
    %v385 = vld [vmem:[#allocation6 + $0x718] sm:$0xff]
    %v386 = vld [vmem:[#allocation6 + $0x720] sm:$0xff]
    %v387 = vld [vmem:[#allocation6 + $0x728] sm:$0xff]
    %v388 = vld [vmem:[#allocation6 + $0x730] sm:$0xff]
    %v389 = vld [vmem:[#allocation6 + $0x738] sm:$0xff]
    %v390 = vld [vmem:[#allocation6 + $0x740] sm:$0xff]
    %v391 = vld [vmem:[#allocation6 + $0x748] sm:$0xff]
    %v392 = vld [vmem:[#allocation6 + $0x750] sm:$0xff]
    %v393 = vld [vmem:[#allocation6 + $0x758] sm:$0xff]
    %v394 = vld [vmem:[#allocation6 + $0x760] sm:$0xff]
    %v395 = vld [vmem:[#allocation6 + $0x768] sm:$0xff]
    %v396 = vld [vmem:[#allocation6 + $0x770] sm:$0xff]
    %v397 = vld [vmem:[#allocation6 + $0x778] sm:$0xff]
    %v398 = vld [vmem:[#allocation6 + $0x780] sm:$0xff]
    %v399 = vld [vmem:[#allocation6 + $0x788] sm:$0xff]
    %v400 = vld [vmem:[#allocation6 + $0x790] sm:$0xff]
    %v401 = vld [vmem:[#allocation6 + $0x798] sm:$0xff]
    %v402 = vld [vmem:[#allocation6 + $0x7a0] sm:$0xff]
    %v403 = vld [vmem:[#allocation6 + $0x7a8] sm:$0xff]
    %v404 = vld [vmem:[#allocation6 + $0x7b0] sm:$0xff]
    %v405 = vld [vmem:[#allocation6 + $0x7b8] sm:$0xff]
    %v406 = vld [vmem:[#allocation6 + $0x7c0] sm:$0xff]
    %v407 = vld [vmem:[#allocation6 + $0x7c8] sm:$0xff]
    %v408 = vld [vmem:[#allocation6 + $0x7d0] sm:$0xff]
    %v409 = vld [vmem:[#allocation6 + $0x7d8] sm:$0xff]
    %v410 = vld [vmem:[#allocation6 + $0x7e0] sm:$0xff]
    %v411 = vld [vmem:[#allocation6 + $0x7e8] sm:$0xff]
    %v412 = vld [vmem:[#allocation6 + $0x7f0] sm:$0xff]
    %v413 = vld [vmem:[#allocation6 + $0x7f8] sm:$0xff]
    %v414 = vld [vmem:[#allocation8] sm:$0xf]
    %v416 = vperm.slane %v414, 0
    %v417 = vperm.slane %v414, 1
    %v418 = vperm.slane %v414, 2
    %v419 = vperm.slane %v414, 3
    %v680 = vunpack.c.l.b16 %v158
    %v681 = vunpack.c.h.b16 %v158
    %v682 = vunpack.c.l.b16 %v159
    %v683 = vunpack.c.h.b16 %v159
    %v684 = vunpack.c.l.b16 %v160
    %v685 = vunpack.c.h.b16 %v160
    %v686 = vunpack.c.l.b16 %v161
    %v687 = vunpack.c.h.b16 %v161
    %v688 = vunpack.c.l.b16 %v162
    %v689 = vunpack.c.h.b16 %v162
    %v690 = vunpack.c.l.b16 %v163
    %v691 = vunpack.c.h.b16 %v163
    %v692 = vunpack.c.l.b16 %v164
    %v693 = vunpack.c.h.b16 %v164
    %v694 = vunpack.c.l.b16 %v165
    %v695 = vunpack.c.h.b16 %v165
    %v696 = vunpack.c.l.b16 %v166
    %v697 = vunpack.c.h.b16 %v166
    %v698 = vunpack.c.l.b16 %v167
    %v699 = vunpack.c.h.b16 %v167
    %v700 = vunpack.c.l.b16 %v168
    %v701 = vunpack.c.h.b16 %v168
    %v702 = vunpack.c.l.b16 %v169
    %v703 = vunpack.c.h.b16 %v169
    %v704 = vunpack.c.l.b16 %v170
    %v705 = vunpack.c.h.b16 %v170
    %v706 = vunpack.c.l.b16 %v171
    %v707 = vunpack.c.h.b16 %v171
    %v708 = vunpack.c.l.b16 %v172
    %v709 = vunpack.c.h.b16 %v172
    %v710 = vunpack.c.l.b16 %v173
    %v711 = vunpack.c.h.b16 %v173
    %v712 = vunpack.c.l.b16 %v174
    %v713 = vunpack.c.h.b16 %v174
    %v714 = vunpack.c.l.b16 %v175
    %v715 = vunpack.c.h.b16 %v175
    %v716 = vunpack.c.l.b16 %v176
    %v717 = vunpack.c.h.b16 %v176
    %v718 = vunpack.c.l.b16 %v177
    %v719 = vunpack.c.h.b16 %v177
    %v720 = vunpack.c.l.b16 %v178
    %v721 = vunpack.c.h.b16 %v178
    %v722 = vunpack.c.l.b16 %v179
    %v723 = vunpack.c.h.b16 %v179
    %v724 = vunpack.c.l.b16 %v180
    %v725 = vunpack.c.h.b16 %v180
    %v726 = vunpack.c.l.b16 %v181
    %v727 = vunpack.c.h.b16 %v181
    %v728 = vunpack.c.l.b16 %v182
    %v729 = vunpack.c.h.b16 %v182
    %v730 = vunpack.c.l.b16 %v183
    %v731 = vunpack.c.h.b16 %v183
    %v732 = vunpack.c.l.b16 %v184
    %v733 = vunpack.c.h.b16 %v184
    %v734 = vunpack.c.l.b16 %v185
    %v735 = vunpack.c.h.b16 %v185
    %v736 = vunpack.c.l.b16 %v186
    %v737 = vunpack.c.h.b16 %v186
    %v738 = vunpack.c.l.b16 %v187
    %v739 = vunpack.c.h.b16 %v187
    %v740 = vunpack.c.l.b16 %v188
    %v741 = vunpack.c.h.b16 %v188
    %v742 = vunpack.c.l.b16 %v189
    %v743 = vunpack.c.h.b16 %v189
    %v744 = vunpack.c.l.b16 %v190
    %v745 = vunpack.c.h.b16 %v190
    %v746 = vunpack.c.l.b16 %v191
    %v747 = vunpack.c.h.b16 %v191
    %v748 = vunpack.c.l.b16 %v192
    %v749 = vunpack.c.h.b16 %v192
    %v750 = vunpack.c.l.b16 %v193
    %v751 = vunpack.c.h.b16 %v193
    %v752 = vunpack.c.l.b16 %v194
    %v753 = vunpack.c.h.b16 %v194
    %v754 = vunpack.c.l.b16 %v195
    %v755 = vunpack.c.h.b16 %v195
    %v756 = vunpack.c.l.b16 %v196
    %v757 = vunpack.c.h.b16 %v196
    %v758 = vunpack.c.l.b16 %v197
    %v759 = vunpack.c.h.b16 %v197
    %v760 = vunpack.c.l.b16 %v198
    %v761 = vunpack.c.h.b16 %v198
    %v762 = vunpack.c.l.b16 %v199
    %v763 = vunpack.c.h.b16 %v199
    %v764 = vunpack.c.l.b16 %v200
    %v765 = vunpack.c.h.b16 %v200
    %v766 = vunpack.c.l.b16 %v201
    %v767 = vunpack.c.h.b16 %v201
    %v768 = vunpack.c.l.b16 %v202
    %v769 = vunpack.c.h.b16 %v202
    %v770 = vunpack.c.l.b16 %v203
    %v771 = vunpack.c.h.b16 %v203
    %v772 = vunpack.c.l.b16 %v204
    %v773 = vunpack.c.h.b16 %v204
    %v774 = vunpack.c.l.b16 %v205
    %v775 = vunpack.c.h.b16 %v205
    %v776 = vunpack.c.l.b16 %v206
    %v777 = vunpack.c.h.b16 %v206
    %v778 = vunpack.c.l.b16 %v207
    %v779 = vunpack.c.h.b16 %v207
    %v780 = vunpack.c.l.b16 %v208
    %v781 = vunpack.c.h.b16 %v208
    %v782 = vunpack.c.l.b16 %v209
    %v783 = vunpack.c.h.b16 %v209
    %v784 = vunpack.c.l.b16 %v210
    %v785 = vunpack.c.h.b16 %v210
    %v786 = vunpack.c.l.b16 %v211
    %v787 = vunpack.c.h.b16 %v211
    %v788 = vunpack.c.l.b16 %v212
    %v789 = vunpack.c.h.b16 %v212
    %v790 = vunpack.c.l.b16 %v213
    %v791 = vunpack.c.h.b16 %v213
    %v792 = vunpack.c.l.b16 %v214
    %v793 = vunpack.c.h.b16 %v214
    %v794 = vunpack.c.l.b16 %v215
    %v795 = vunpack.c.h.b16 %v215
    %v796 = vunpack.c.l.b16 %v216
    %v797 = vunpack.c.h.b16 %v216
    %v798 = vunpack.c.l.b16 %v217
    %v799 = vunpack.c.h.b16 %v217
    %v800 = vunpack.c.l.b16 %v218
    %v801 = vunpack.c.h.b16 %v218
    %v802 = vunpack.c.l.b16 %v219
    %v803 = vunpack.c.h.b16 %v219
    %v804 = vunpack.c.l.b16 %v220
    %v805 = vunpack.c.h.b16 %v220
    %v806 = vunpack.c.l.b16 %v221
    %v807 = vunpack.c.h.b16 %v221
    %v808 = vunpack.c.l.b16 %v222
    %v809 = vunpack.c.h.b16 %v222
    %v810 = vunpack.c.l.b16 %v223
    %v811 = vunpack.c.h.b16 %v223
    %v812 = vunpack.c.l.b16 %v224
    %v813 = vunpack.c.h.b16 %v224
    %v814 = vunpack.c.l.b16 %v225
    %v815 = vunpack.c.h.b16 %v225
    %v816 = vunpack.c.l.b16 %v226
    %v817 = vunpack.c.h.b16 %v226
    %v818 = vunpack.c.l.b16 %v227
    %v819 = vunpack.c.h.b16 %v227
    %v820 = vunpack.c.l.b16 %v228
    %v821 = vunpack.c.h.b16 %v228
    %v822 = vunpack.c.l.b16 %v229
    %v823 = vunpack.c.h.b16 %v229
    %v824 = vunpack.c.l.b16 %v230
    %v825 = vunpack.c.h.b16 %v230
    %v826 = vunpack.c.l.b16 %v231
    %v827 = vunpack.c.h.b16 %v231
    %v828 = vunpack.c.l.b16 %v232
    %v829 = vunpack.c.h.b16 %v232
    %v830 = vunpack.c.l.b16 %v233
    %v831 = vunpack.c.h.b16 %v233
    %v832 = vunpack.c.l.b16 %v234
    %v833 = vunpack.c.h.b16 %v234
    %v834 = vunpack.c.l.b16 %v235
    %v835 = vunpack.c.h.b16 %v235
    %v836 = vunpack.c.l.b16 %v236
    %v837 = vunpack.c.h.b16 %v236
    %v838 = vunpack.c.l.b16 %v237
    %v839 = vunpack.c.h.b16 %v237
    %v840 = vunpack.c.l.b16 %v238
    %v841 = vunpack.c.h.b16 %v238
    %v842 = vunpack.c.l.b16 %v239
    %v843 = vunpack.c.h.b16 %v239
    %v844 = vunpack.c.l.b16 %v240
    %v845 = vunpack.c.h.b16 %v240
    %v846 = vunpack.c.l.b16 %v241
    %v847 = vunpack.c.h.b16 %v241
    %v848 = vunpack.c.l.b16 %v242
    %v849 = vunpack.c.h.b16 %v242
    %v850 = vunpack.c.l.b16 %v243
    %v851 = vunpack.c.h.b16 %v243
    %v852 = vunpack.c.l.b16 %v244
    %v853 = vunpack.c.h.b16 %v244
    %v854 = vunpack.c.l.b16 %v245
    %v855 = vunpack.c.h.b16 %v245
    %v856 = vunpack.c.l.b16 %v246
    %v857 = vunpack.c.h.b16 %v246
    %v858 = vunpack.c.l.b16 %v247
    %v859 = vunpack.c.h.b16 %v247
    %v860 = vunpack.c.l.b16 %v248
    %v861 = vunpack.c.h.b16 %v248
    %v862 = vunpack.c.l.b16 %v249
    %v863 = vunpack.c.h.b16 %v249
    %v864 = vunpack.c.l.b16 %v250
    %v865 = vunpack.c.h.b16 %v250
    %v866 = vunpack.c.l.b16 %v251
    %v867 = vunpack.c.h.b16 %v251
    %v868 = vunpack.c.l.b16 %v252
    %v869 = vunpack.c.h.b16 %v252
    %v870 = vunpack.c.l.b16 %v253
    %v871 = vunpack.c.h.b16 %v253
    %v872 = vunpack.c.l.b16 %v254
    %v873 = vunpack.c.h.b16 %v254
    %v874 = vunpack.c.l.b16 %v255
    %v875 = vunpack.c.h.b16 %v255
    %v876 = vunpack.c.l.b16 %v256
    %v877 = vunpack.c.h.b16 %v256
    %v878 = vunpack.c.l.b16 %v257
    %v879 = vunpack.c.h.b16 %v257
    %v880 = vunpack.c.l.b16 %v258
    %v881 = vunpack.c.h.b16 %v258
    %v882 = vunpack.c.l.b16 %v259
    %v883 = vunpack.c.h.b16 %v259
    %v884 = vunpack.c.l.b16 %v260
    %v885 = vunpack.c.h.b16 %v260
    %v886 = vunpack.c.l.b16 %v261
    %v887 = vunpack.c.h.b16 %v261
    %v888 = vunpack.c.l.b16 %v262
    %v889 = vunpack.c.h.b16 %v262
    %v890 = vunpack.c.l.b16 %v263
    %v891 = vunpack.c.h.b16 %v263
    %v892 = vunpack.c.l.b16 %v264
    %v893 = vunpack.c.h.b16 %v264
    %v894 = vunpack.c.l.b16 %v265
    %v895 = vunpack.c.h.b16 %v265
    %v896 = vunpack.c.l.b16 %v266
    %v897 = vunpack.c.h.b16 %v266
    %v898 = vunpack.c.l.b16 %v267
    %v899 = vunpack.c.h.b16 %v267
    %v900 = vunpack.c.l.b16 %v268
    %v901 = vunpack.c.h.b16 %v268
    %v902 = vunpack.c.l.b16 %v269
    %v903 = vunpack.c.h.b16 %v269
    %v904 = vunpack.c.l.b16 %v270
    %v905 = vunpack.c.h.b16 %v270
    %v906 = vunpack.c.l.b16 %v271
    %v907 = vunpack.c.h.b16 %v271
    %v908 = vunpack.c.l.b16 %v272
    %v909 = vunpack.c.h.b16 %v272
    %v910 = vunpack.c.l.b16 %v273
    %v911 = vunpack.c.h.b16 %v273
    %v912 = vunpack.c.l.b16 %v274
    %v913 = vunpack.c.h.b16 %v274
    %v914 = vunpack.c.l.b16 %v275
    %v915 = vunpack.c.h.b16 %v275
    %v916 = vunpack.c.l.b16 %v276
    %v917 = vunpack.c.h.b16 %v276
    %v918 = vunpack.c.l.b16 %v277
    %v919 = vunpack.c.h.b16 %v277
    %v920 = vunpack.c.l.b16 %v278
    %v921 = vunpack.c.h.b16 %v278
    %v922 = vunpack.c.l.b16 %v279
    %v923 = vunpack.c.h.b16 %v279
    %v924 = vunpack.c.l.b16 %v280
    %v925 = vunpack.c.h.b16 %v280
    %v926 = vunpack.c.l.b16 %v281
    %v927 = vunpack.c.h.b16 %v281
    %v928 = vunpack.c.l.b16 %v282
    %v929 = vunpack.c.h.b16 %v282
    %v930 = vunpack.c.l.b16 %v283
    %v931 = vunpack.c.h.b16 %v283
    %v932 = vunpack.c.l.b16 %v284
    %v933 = vunpack.c.h.b16 %v284
    %v934 = vunpack.c.l.b16 %v285
    %v935 = vunpack.c.h.b16 %v285
    %v936 = vunpack.c.l.b16 %v286
    %v937 = vunpack.c.h.b16 %v286
    %v938 = vunpack.c.l.b16 %v287
    %v939 = vunpack.c.h.b16 %v287
    %v940 = vunpack.c.l.b16 %v288
    %v941 = vunpack.c.h.b16 %v288
    %v942 = vunpack.c.l.b16 %v289
    %v943 = vunpack.c.h.b16 %v289
    %v944 = vunpack.c.l.b16 %v290
    %v945 = vunpack.c.h.b16 %v290
    %v946 = vunpack.c.l.b16 %v291
    %v947 = vunpack.c.h.b16 %v291
    %v948 = vunpack.c.l.b16 %v292
    %v949 = vunpack.c.h.b16 %v292
    %v950 = vunpack.c.l.b16 %v293
    %v951 = vunpack.c.h.b16 %v293
    %v952 = vunpack.c.l.b16 %v294
    %v953 = vunpack.c.h.b16 %v294
    %v954 = vunpack.c.l.b16 %v295
    %v955 = vunpack.c.h.b16 %v295
    %v956 = vunpack.c.l.b16 %v296
    %v957 = vunpack.c.h.b16 %v296
    %v958 = vunpack.c.l.b16 %v297
    %v959 = vunpack.c.h.b16 %v297
    %v960 = vunpack.c.l.b16 %v298
    %v961 = vunpack.c.h.b16 %v298
    %v962 = vunpack.c.l.b16 %v299
    %v963 = vunpack.c.h.b16 %v299
    %v964 = vunpack.c.l.b16 %v300
    %v965 = vunpack.c.h.b16 %v300
    %v966 = vunpack.c.l.b16 %v301
    %v967 = vunpack.c.h.b16 %v301
    %v968 = vunpack.c.l.b16 %v302
    %v969 = vunpack.c.h.b16 %v302
    %v970 = vunpack.c.l.b16 %v303
    %v971 = vunpack.c.h.b16 %v303
    %v972 = vunpack.c.l.b16 %v304
    %v973 = vunpack.c.h.b16 %v304
    %v974 = vunpack.c.l.b16 %v305
    %v975 = vunpack.c.h.b16 %v305
    %v976 = vunpack.c.l.b16 %v306
    %v977 = vunpack.c.h.b16 %v306
    %v978 = vunpack.c.l.b16 %v307
    %v979 = vunpack.c.h.b16 %v307
    %v980 = vunpack.c.l.b16 %v308
    %v981 = vunpack.c.h.b16 %v308
    %v982 = vunpack.c.l.b16 %v309
    %v983 = vunpack.c.h.b16 %v309
    %v984 = vunpack.c.l.b16 %v310
    %v985 = vunpack.c.h.b16 %v310
    %v986 = vunpack.c.l.b16 %v311
    %v987 = vunpack.c.h.b16 %v311
    %v988 = vunpack.c.l.b16 %v312
    %v989 = vunpack.c.h.b16 %v312
    %v990 = vunpack.c.l.b16 %v313
    %v991 = vunpack.c.h.b16 %v313
    %v992 = vunpack.c.l.b16 %v314
    %v993 = vunpack.c.h.b16 %v314
    %v994 = vunpack.c.l.b16 %v315
    %v995 = vunpack.c.h.b16 %v315
    %v996 = vunpack.c.l.b16 %v316
    %v997 = vunpack.c.h.b16 %v316
    %v998 = vunpack.c.l.b16 %v317
    %v999 = vunpack.c.h.b16 %v317
    %v1000 = vunpack.c.l.b16 %v318
    %v1001 = vunpack.c.h.b16 %v318
    %v1002 = vunpack.c.l.b16 %v319
    %v1003 = vunpack.c.h.b16 %v319
    %v1004 = vunpack.c.l.b16 %v320
    %v1005 = vunpack.c.h.b16 %v320
    %v1006 = vunpack.c.l.b16 %v321
    %v1007 = vunpack.c.h.b16 %v321
    %v1008 = vunpack.c.l.b16 %v322
    %v1009 = vunpack.c.h.b16 %v322
    %v1010 = vunpack.c.l.b16 %v323
    %v1011 = vunpack.c.h.b16 %v323
    %v1012 = vunpack.c.l.b16 %v324
    %v1013 = vunpack.c.h.b16 %v324
    %v1014 = vunpack.c.l.b16 %v325
    %v1015 = vunpack.c.h.b16 %v325
    %v1016 = vunpack.c.l.b16 %v326
    %v1017 = vunpack.c.h.b16 %v326
    %v1018 = vunpack.c.l.b16 %v327
    %v1019 = vunpack.c.h.b16 %v327
    %v1020 = vunpack.c.l.b16 %v328
    %v1021 = vunpack.c.h.b16 %v328
    %v1022 = vunpack.c.l.b16 %v329
    %v1023 = vunpack.c.h.b16 %v329
    %v1024 = vunpack.c.l.b16 %v330
    %v1025 = vunpack.c.h.b16 %v330
    %v1026 = vunpack.c.l.b16 %v331
    %v1027 = vunpack.c.h.b16 %v331
    %v1028 = vunpack.c.l.b16 %v332
    %v1029 = vunpack.c.h.b16 %v332
    %v1030 = vunpack.c.l.b16 %v333
    %v1031 = vunpack.c.h.b16 %v333
    %v1032 = vunpack.c.l.b16 %v334
    %v1033 = vunpack.c.h.b16 %v334
    %v1034 = vunpack.c.l.b16 %v335
    %v1035 = vunpack.c.h.b16 %v335
    %v1036 = vunpack.c.l.b16 %v336
    %v1037 = vunpack.c.h.b16 %v336
    %v1038 = vunpack.c.l.b16 %v337
    %v1039 = vunpack.c.h.b16 %v337
    %v1040 = vunpack.c.l.b16 %v338
    %v1041 = vunpack.c.h.b16 %v338
    %v1042 = vunpack.c.l.b16 %v339
    %v1043 = vunpack.c.h.b16 %v339
    %v1044 = vunpack.c.l.b16 %v340
    %v1045 = vunpack.c.h.b16 %v340
    %v1046 = vunpack.c.l.b16 %v341
    %v1047 = vunpack.c.h.b16 %v341
    %v1048 = vunpack.c.l.b16 %v342
    %v1049 = vunpack.c.h.b16 %v342
    %v1050 = vunpack.c.l.b16 %v343
    %v1051 = vunpack.c.h.b16 %v343
    %v1052 = vunpack.c.l.b16 %v344
    %v1053 = vunpack.c.h.b16 %v344
    %v1054 = vunpack.c.l.b16 %v345
    %v1055 = vunpack.c.h.b16 %v345
    %v1056 = vunpack.c.l.b16 %v346
    %v1057 = vunpack.c.h.b16 %v346
    %v1058 = vunpack.c.l.b16 %v347
    %v1059 = vunpack.c.h.b16 %v347
    %v1060 = vunpack.c.l.b16 %v348
    %v1061 = vunpack.c.h.b16 %v348
    %v1062 = vunpack.c.l.b16 %v349
    %v1063 = vunpack.c.h.b16 %v349
    %v1064 = vunpack.c.l.b16 %v350
    %v1065 = vunpack.c.h.b16 %v350
    %v1066 = vunpack.c.l.b16 %v351
    %v1067 = vunpack.c.h.b16 %v351
    %v1068 = vunpack.c.l.b16 %v352
    %v1069 = vunpack.c.h.b16 %v352
    %v1070 = vunpack.c.l.b16 %v353
    %v1071 = vunpack.c.h.b16 %v353
    %v1072 = vunpack.c.l.b16 %v354
    %v1073 = vunpack.c.h.b16 %v354
    %v1074 = vunpack.c.l.b16 %v355
    %v1075 = vunpack.c.h.b16 %v355
    %v1076 = vunpack.c.l.b16 %v356
    %v1077 = vunpack.c.h.b16 %v356
    %v1078 = vunpack.c.l.b16 %v357
    %v1079 = vunpack.c.h.b16 %v357
    %v1080 = vunpack.c.l.b16 %v358
    %v1081 = vunpack.c.h.b16 %v358
    %v1082 = vunpack.c.l.b16 %v359
    %v1083 = vunpack.c.h.b16 %v359
    %v1084 = vunpack.c.l.b16 %v360
    %v1085 = vunpack.c.h.b16 %v360
    %v1086 = vunpack.c.l.b16 %v361
    %v1087 = vunpack.c.h.b16 %v361
    %v1088 = vunpack.c.l.b16 %v362
    %v1089 = vunpack.c.h.b16 %v362
    %v1090 = vunpack.c.l.b16 %v363
    %v1091 = vunpack.c.h.b16 %v363
    %v1092 = vunpack.c.l.b16 %v364
    %v1093 = vunpack.c.h.b16 %v364
    %v1094 = vunpack.c.l.b16 %v365
    %v1095 = vunpack.c.h.b16 %v365
    %v1096 = vunpack.c.l.b16 %v366
    %v1097 = vunpack.c.h.b16 %v366
    %v1098 = vunpack.c.l.b16 %v367
    %v1099 = vunpack.c.h.b16 %v367
    %v1100 = vunpack.c.l.b16 %v368
    %v1101 = vunpack.c.h.b16 %v368
    %v1102 = vunpack.c.l.b16 %v369
    %v1103 = vunpack.c.h.b16 %v369
    %v1104 = vunpack.c.l.b16 %v370
    %v1105 = vunpack.c.h.b16 %v370
    %v1106 = vunpack.c.l.b16 %v371
    %v1107 = vunpack.c.h.b16 %v371
    %v1108 = vunpack.c.l.b16 %v372
    %v1109 = vunpack.c.h.b16 %v372
    %v1110 = vunpack.c.l.b16 %v373
    %v1111 = vunpack.c.h.b16 %v373
    %v1112 = vunpack.c.l.b16 %v374
    %v1113 = vunpack.c.h.b16 %v374
    %v1114 = vunpack.c.l.b16 %v375
    %v1115 = vunpack.c.h.b16 %v375
    %v1116 = vunpack.c.l.b16 %v376
    %v1117 = vunpack.c.h.b16 %v376
    %v1118 = vunpack.c.l.b16 %v377
    %v1119 = vunpack.c.h.b16 %v377
    %v1120 = vunpack.c.l.b16 %v378
    %v1121 = vunpack.c.h.b16 %v378
    %v1122 = vunpack.c.l.b16 %v379
    %v1123 = vunpack.c.h.b16 %v379
    %v1124 = vunpack.c.l.b16 %v380
    %v1125 = vunpack.c.h.b16 %v380
    %v1126 = vunpack.c.l.b16 %v381
    %v1127 = vunpack.c.h.b16 %v381
    %v1128 = vunpack.c.l.b16 %v382
    %v1129 = vunpack.c.h.b16 %v382
    %v1130 = vunpack.c.l.b16 %v383
    %v1131 = vunpack.c.h.b16 %v383
    %v1132 = vunpack.c.l.b16 %v384
    %v1133 = vunpack.c.h.b16 %v384
    %v1134 = vunpack.c.l.b16 %v385
    %v1135 = vunpack.c.h.b16 %v385
    %v1136 = vunpack.c.l.b16 %v386
    %v1137 = vunpack.c.h.b16 %v386
    %v1138 = vunpack.c.l.b16 %v387
    %v1139 = vunpack.c.h.b16 %v387
    %v1140 = vunpack.c.l.b16 %v388
    %v1141 = vunpack.c.h.b16 %v388
    %v1142 = vunpack.c.l.b16 %v389
    %v1143 = vunpack.c.h.b16 %v389
    %v1144 = vunpack.c.l.b16 %v390
    %v1145 = vunpack.c.h.b16 %v390
    %v1146 = vunpack.c.l.b16 %v391
    %v1147 = vunpack.c.h.b16 %v391
    %v1148 = vunpack.c.l.b16 %v392
    %v1149 = vunpack.c.h.b16 %v392
    %v1150 = vunpack.c.l.b16 %v393
    %v1151 = vunpack.c.h.b16 %v393
    %v1152 = vunpack.c.l.b16 %v394
    %v1153 = vunpack.c.h.b16 %v394
    %v1154 = vunpack.c.l.b16 %v395
    %v1155 = vunpack.c.h.b16 %v395
    %v1156 = vunpack.c.l.b16 %v396
    %v1157 = vunpack.c.h.b16 %v396
    %v1158 = vunpack.c.l.b16 %v397
    %v1159 = vunpack.c.h.b16 %v397
    %v1160 = vunpack.c.l.b16 %v398
    %v1161 = vunpack.c.h.b16 %v398
    %v1162 = vunpack.c.l.b16 %v399
    %v1163 = vunpack.c.h.b16 %v399
    %v1164 = vunpack.c.l.b16 %v400
    %v1165 = vunpack.c.h.b16 %v400
    %v1166 = vunpack.c.l.b16 %v401
    %v1167 = vunpack.c.h.b16 %v401
    %v1168 = vunpack.c.l.b16 %v402
    %v1169 = vunpack.c.h.b16 %v402
    %v1170 = vunpack.c.l.b16 %v403
    %v1171 = vunpack.c.h.b16 %v403
    %v1172 = vunpack.c.l.b16 %v404
    %v1173 = vunpack.c.h.b16 %v404
    %v1174 = vunpack.c.l.b16 %v405
    %v1175 = vunpack.c.h.b16 %v405
    %v1176 = vunpack.c.l.b16 %v406
    %v1177 = vunpack.c.h.b16 %v406
    %v1178 = vunpack.c.l.b16 %v407
    %v1179 = vunpack.c.h.b16 %v407
    %v1180 = vunpack.c.l.b16 %v408
    %v1181 = vunpack.c.h.b16 %v408
    %v1182 = vunpack.c.l.b16 %v409
    %v1183 = vunpack.c.h.b16 %v409
    %v1184 = vunpack.c.l.b16 %v410
    %v1185 = vunpack.c.h.b16 %v410
    %v1186 = vunpack.c.l.b16 %v411
    %v1187 = vunpack.c.h.b16 %v411
    %v1188 = vunpack.c.l.b16 %v412
    %v1189 = vunpack.c.h.b16 %v412
    %v1190 = vunpack.c.l.b16 %v413
    %v1191 = vunpack.c.h.b16 %v413
    %v1192 = vpack.c.b16 %v684, %v680
    %v1193 = vpack.c.b16 %v685, %v681
    %v1194 = vpack.c.b16 %v686, %v682
    %v1195 = vpack.c.b16 %v687, %v683
    %v1196 = vpack.c.b16 %v692, %v688
    %v1197 = vpack.c.b16 %v693, %v689
    %v1198 = vpack.c.b16 %v694, %v690
    %v1199 = vpack.c.b16 %v695, %v691
    %v1200 = vpack.c.b16 %v700, %v696
    %v1201 = vpack.c.b16 %v701, %v697
    %v1202 = vpack.c.b16 %v702, %v698
    %v1203 = vpack.c.b16 %v703, %v699
    %v1204 = vpack.c.b16 %v708, %v704
    %v1205 = vpack.c.b16 %v709, %v705
    %v1206 = vpack.c.b16 %v710, %v706
    %v1207 = vpack.c.b16 %v711, %v707
    %v1208 = vpack.c.b16 %v716, %v712
    %v1209 = vpack.c.b16 %v717, %v713
    %v1210 = vpack.c.b16 %v718, %v714
    %v1211 = vpack.c.b16 %v719, %v715
    %v1212 = vpack.c.b16 %v724, %v720
    %v1213 = vpack.c.b16 %v725, %v721
    %v1214 = vpack.c.b16 %v726, %v722
    %v1215 = vpack.c.b16 %v727, %v723
    %v1216 = vpack.c.b16 %v732, %v728
    %v1217 = vpack.c.b16 %v733, %v729
    %v1218 = vpack.c.b16 %v734, %v730
    %v1219 = vpack.c.b16 %v735, %v731
    %v1220 = vpack.c.b16 %v740, %v736
    %v1221 = vpack.c.b16 %v741, %v737
    %v1222 = vpack.c.b16 %v742, %v738
    %v1223 = vpack.c.b16 %v743, %v739
    %v1224 = vpack.c.b16 %v748, %v744
    %v1225 = vpack.c.b16 %v749, %v745
    %v1226 = vpack.c.b16 %v750, %v746
    %v1227 = vpack.c.b16 %v751, %v747
    %v1228 = vpack.c.b16 %v756, %v752
    %v1229 = vpack.c.b16 %v757, %v753
    %v1230 = vpack.c.b16 %v758, %v754
    %v1231 = vpack.c.b16 %v759, %v755
    %v1232 = vpack.c.b16 %v764, %v760
    %v1233 = vpack.c.b16 %v765, %v761
    %v1234 = vpack.c.b16 %v766, %v762
    %v1235 = vpack.c.b16 %v767, %v763
    %v1236 = vpack.c.b16 %v772, %v768
    %v1237 = vpack.c.b16 %v773, %v769
    %v1238 = vpack.c.b16 %v774, %v770
    %v1239 = vpack.c.b16 %v775, %v771
    %v1240 = vpack.c.b16 %v780, %v776
    %v1241 = vpack.c.b16 %v781, %v777
    %v1242 = vpack.c.b16 %v782, %v778
    %v1243 = vpack.c.b16 %v783, %v779
    %v1244 = vpack.c.b16 %v788, %v784
    %v1245 = vpack.c.b16 %v789, %v785
    %v1246 = vpack.c.b16 %v790, %v786
    %v1247 = vpack.c.b16 %v791, %v787
    %v1248 = vpack.c.b16 %v796, %v792
    %v1249 = vpack.c.b16 %v797, %v793
    %v1250 = vpack.c.b16 %v798, %v794
    %v1251 = vpack.c.b16 %v799, %v795
    %v1252 = vpack.c.b16 %v804, %v800
    %v1253 = vpack.c.b16 %v805, %v801
    %v1254 = vpack.c.b16 %v806, %v802
    %v1255 = vpack.c.b16 %v807, %v803
    %v1256 = vpack.c.b16 %v812, %v808
    %v1257 = vpack.c.b16 %v813, %v809
    %v1258 = vpack.c.b16 %v814, %v810
    %v1259 = vpack.c.b16 %v815, %v811
    %v1260 = vpack.c.b16 %v820, %v816
    %v1261 = vpack.c.b16 %v821, %v817
    %v1262 = vpack.c.b16 %v822, %v818
    %v1263 = vpack.c.b16 %v823, %v819
    %v1264 = vpack.c.b16 %v828, %v824
    %v1265 = vpack.c.b16 %v829, %v825
    %v1266 = vpack.c.b16 %v830, %v826
    %v1267 = vpack.c.b16 %v831, %v827
    %v1268 = vpack.c.b16 %v836, %v832
    %v1269 = vpack.c.b16 %v837, %v833
    %v1270 = vpack.c.b16 %v838, %v834
    %v1271 = vpack.c.b16 %v839, %v835
    %v1272 = vpack.c.b16 %v844, %v840
    %v1273 = vpack.c.b16 %v845, %v841
    %v1274 = vpack.c.b16 %v846, %v842
    %v1275 = vpack.c.b16 %v847, %v843
    %v1276 = vpack.c.b16 %v852, %v848
    %v1277 = vpack.c.b16 %v853, %v849
    %v1278 = vpack.c.b16 %v854, %v850
    %v1279 = vpack.c.b16 %v855, %v851
    %v1280 = vpack.c.b16 %v860, %v856
    %v1281 = vpack.c.b16 %v861, %v857
    %v1282 = vpack.c.b16 %v862, %v858
    %v1283 = vpack.c.b16 %v863, %v859
    %v1284 = vpack.c.b16 %v868, %v864
    %v1285 = vpack.c.b16 %v869, %v865
    %v1286 = vpack.c.b16 %v870, %v866
    %v1287 = vpack.c.b16 %v871, %v867
    %v1288 = vpack.c.b16 %v876, %v872
    %v1289 = vpack.c.b16 %v877, %v873
    %v1290 = vpack.c.b16 %v878, %v874
    %v1291 = vpack.c.b16 %v879, %v875
    %v1292 = vpack.c.b16 %v884, %v880
    %v1293 = vpack.c.b16 %v885, %v881
    %v1294 = vpack.c.b16 %v886, %v882
    %v1295 = vpack.c.b16 %v887, %v883
    %v1296 = vpack.c.b16 %v892, %v888
    %v1297 = vpack.c.b16 %v893, %v889
    %v1298 = vpack.c.b16 %v894, %v890
    %v1299 = vpack.c.b16 %v895, %v891
    %v1300 = vpack.c.b16 %v900, %v896
    %v1301 = vpack.c.b16 %v901, %v897
    %v1302 = vpack.c.b16 %v902, %v898
    %v1303 = vpack.c.b16 %v903, %v899
    %v1304 = vpack.c.b16 %v908, %v904
    %v1305 = vpack.c.b16 %v909, %v905
    %v1306 = vpack.c.b16 %v910, %v906
    %v1307 = vpack.c.b16 %v911, %v907
    %v1308 = vpack.c.b16 %v916, %v912
    %v1309 = vpack.c.b16 %v917, %v913
    %v1310 = vpack.c.b16 %v918, %v914
    %v1311 = vpack.c.b16 %v919, %v915
    %v1312 = vpack.c.b16 %v924, %v920
    %v1313 = vpack.c.b16 %v925, %v921
    %v1314 = vpack.c.b16 %v926, %v922
    %v1315 = vpack.c.b16 %v927, %v923
    %v1316 = vpack.c.b16 %v932, %v928
    %v1317 = vpack.c.b16 %v933, %v929
    %v1318 = vpack.c.b16 %v934, %v930
    %v1319 = vpack.c.b16 %v935, %v931
    %v1320 = vpack.c.b16 %v940, %v936
    %v1321 = vpack.c.b16 %v941, %v937
    %v1322 = vpack.c.b16 %v942, %v938
    %v1323 = vpack.c.b16 %v943, %v939
    %v1324 = vpack.c.b16 %v948, %v944
    %v1325 = vpack.c.b16 %v949, %v945
    %v1326 = vpack.c.b16 %v950, %v946
    %v1327 = vpack.c.b16 %v951, %v947
    %v1328 = vpack.c.b16 %v956, %v952
    %v1329 = vpack.c.b16 %v957, %v953
    %v1330 = vpack.c.b16 %v958, %v954
    %v1331 = vpack.c.b16 %v959, %v955
    %v1332 = vpack.c.b16 %v964, %v960
    %v1333 = vpack.c.b16 %v965, %v961
    %v1334 = vpack.c.b16 %v966, %v962
    %v1335 = vpack.c.b16 %v967, %v963
    %v1336 = vpack.c.b16 %v972, %v968
    %v1337 = vpack.c.b16 %v973, %v969
    %v1338 = vpack.c.b16 %v974, %v970
    %v1339 = vpack.c.b16 %v975, %v971
    %v1340 = vpack.c.b16 %v980, %v976
    %v1341 = vpack.c.b16 %v981, %v977
    %v1342 = vpack.c.b16 %v982, %v978
    %v1343 = vpack.c.b16 %v983, %v979
    %v1344 = vpack.c.b16 %v988, %v984
    %v1345 = vpack.c.b16 %v989, %v985
    %v1346 = vpack.c.b16 %v990, %v986
    %v1347 = vpack.c.b16 %v991, %v987
    %v1348 = vpack.c.b16 %v996, %v992
    %v1349 = vpack.c.b16 %v997, %v993
    %v1350 = vpack.c.b16 %v998, %v994
    %v1351 = vpack.c.b16 %v999, %v995
    %v1352 = vpack.c.b16 %v1004, %v1000
    %v1353 = vpack.c.b16 %v1005, %v1001
    %v1354 = vpack.c.b16 %v1006, %v1002
    %v1355 = vpack.c.b16 %v1007, %v1003
    %v1356 = vpack.c.b16 %v1012, %v1008
    %v1357 = vpack.c.b16 %v1013, %v1009
    %v1358 = vpack.c.b16 %v1014, %v1010
    %v1359 = vpack.c.b16 %v1015, %v1011
    %v1360 = vpack.c.b16 %v1020, %v1016
    %v1361 = vpack.c.b16 %v1021, %v1017
    %v1362 = vpack.c.b16 %v1022, %v1018
    %v1363 = vpack.c.b16 %v1023, %v1019
    %v1364 = vpack.c.b16 %v1028, %v1024
    %v1365 = vpack.c.b16 %v1029, %v1025
    %v1366 = vpack.c.b16 %v1030, %v1026
    %v1367 = vpack.c.b16 %v1031, %v1027
    %v1368 = vpack.c.b16 %v1036, %v1032
    %v1369 = vpack.c.b16 %v1037, %v1033
    %v1370 = vpack.c.b16 %v1038, %v1034
    %v1371 = vpack.c.b16 %v1039, %v1035
    %v1372 = vpack.c.b16 %v1044, %v1040
    %v1373 = vpack.c.b16 %v1045, %v1041
    %v1374 = vpack.c.b16 %v1046, %v1042
    %v1375 = vpack.c.b16 %v1047, %v1043
    %v1376 = vpack.c.b16 %v1052, %v1048
    %v1377 = vpack.c.b16 %v1053, %v1049
    %v1378 = vpack.c.b16 %v1054, %v1050
    %v1379 = vpack.c.b16 %v1055, %v1051
    %v1380 = vpack.c.b16 %v1060, %v1056
    %v1381 = vpack.c.b16 %v1061, %v1057
    %v1382 = vpack.c.b16 %v1062, %v1058
    %v1383 = vpack.c.b16 %v1063, %v1059
    %v1384 = vpack.c.b16 %v1068, %v1064
    %v1385 = vpack.c.b16 %v1069, %v1065
    %v1386 = vpack.c.b16 %v1070, %v1066
    %v1387 = vpack.c.b16 %v1071, %v1067
    %v1388 = vpack.c.b16 %v1076, %v1072
    %v1389 = vpack.c.b16 %v1077, %v1073
    %v1390 = vpack.c.b16 %v1078, %v1074
    %v1391 = vpack.c.b16 %v1079, %v1075
    %v1392 = vpack.c.b16 %v1084, %v1080
    %v1393 = vpack.c.b16 %v1085, %v1081
    %v1394 = vpack.c.b16 %v1086, %v1082
    %v1395 = vpack.c.b16 %v1087, %v1083
    %v1396 = vpack.c.b16 %v1092, %v1088
    %v1397 = vpack.c.b16 %v1093, %v1089
    %v1398 = vpack.c.b16 %v1094, %v1090
    %v1399 = vpack.c.b16 %v1095, %v1091
    %v1400 = vpack.c.b16 %v1100, %v1096
    %v1401 = vpack.c.b16 %v1101, %v1097
    %v1402 = vpack.c.b16 %v1102, %v1098
    %v1403 = vpack.c.b16 %v1103, %v1099
    %v1404 = vpack.c.b16 %v1108, %v1104
    %v1405 = vpack.c.b16 %v1109, %v1105
    %v1406 = vpack.c.b16 %v1110, %v1106
    %v1407 = vpack.c.b16 %v1111, %v1107
    %v1408 = vpack.c.b16 %v1116, %v1112
    %v1409 = vpack.c.b16 %v1117, %v1113
    %v1410 = vpack.c.b16 %v1118, %v1114
    %v1411 = vpack.c.b16 %v1119, %v1115
    %v1412 = vpack.c.b16 %v1124, %v1120
    %v1413 = vpack.c.b16 %v1125, %v1121
    %v1414 = vpack.c.b16 %v1126, %v1122
    %v1415 = vpack.c.b16 %v1127, %v1123
    %v1416 = vpack.c.b16 %v1132, %v1128
    %v1417 = vpack.c.b16 %v1133, %v1129
    %v1418 = vpack.c.b16 %v1134, %v1130
    %v1419 = vpack.c.b16 %v1135, %v1131
    %v1420 = vpack.c.b16 %v1140, %v1136
    %v1421 = vpack.c.b16 %v1141, %v1137
    %v1422 = vpack.c.b16 %v1142, %v1138
    %v1423 = vpack.c.b16 %v1143, %v1139
    %v1424 = vpack.c.b16 %v1148, %v1144
    %v1425 = vpack.c.b16 %v1149, %v1145
    %v1426 = vpack.c.b16 %v1150, %v1146
    %v1427 = vpack.c.b16 %v1151, %v1147
    %v1428 = vpack.c.b16 %v1156, %v1152
    %v1429 = vpack.c.b16 %v1157, %v1153
    %v1430 = vpack.c.b16 %v1158, %v1154
    %v1431 = vpack.c.b16 %v1159, %v1155
    %v1432 = vpack.c.b16 %v1164, %v1160
    %v1433 = vpack.c.b16 %v1165, %v1161
    %v1434 = vpack.c.b16 %v1166, %v1162
    %v1435 = vpack.c.b16 %v1167, %v1163
    %v1436 = vpack.c.b16 %v1172, %v1168
    %v1437 = vpack.c.b16 %v1173, %v1169
    %v1438 = vpack.c.b16 %v1174, %v1170
    %v1439 = vpack.c.b16 %v1175, %v1171
    %v1440 = vpack.c.b16 %v1180, %v1176
    %v1441 = vpack.c.b16 %v1181, %v1177
    %v1442 = vpack.c.b16 %v1182, %v1178
    %v1443 = vpack.c.b16 %v1183, %v1179
    %v1444 = vpack.c.b16 %v1188, %v1184
    %v1445 = vpack.c.b16 %v1189, %v1185
    %v1446 = vpack.c.b16 %v1190, %v1186
    %v1447 = vpack.c.b16 %v1191, %v1187
    %1704 = vmatpush.bf16.msra.mxu0 %v1220
    %1705 = vmatpush.bf16.msra.mxu0 %v1216
    %1706 = vmatpush.bf16.msra.mxu0 %v1212
    %1707 = vmatpush.bf16.msra.mxu0 %v1208
    %1708 = vmatpush.bf16.msra.mxu0 %v1204
    %1709 = vmatpush.bf16.msra.mxu0 %v1200
    %1710 = vmatpush.bf16.msra.mxu0 %v1196
    %1711 = vmatpush.bf16.msra.mxu0 %v1192
    %1712 = vmatmul.bf16.gmra.mxu0 %v150
    %v1713 = vpop.f32.mrf.mxu0
    %v1714 = vadd.f32 %v416, %v1713
    %v1715 = vpop.f32.mrf.mxu0
    %1716 = vdwg.mxu0
    %1717 = vmatpush.bf16.msra.mxu0 %v1252
    %1718 = vmatpush.bf16.msra.mxu0 %v1248
    %1719 = vmatpush.bf16.msra.mxu0 %v1244
    %1720 = vmatpush.bf16.msra.mxu0 %v1240
    %1721 = vmatpush.bf16.msra.mxu0 %v1236
    %1722 = vmatpush.bf16.msra.mxu0 %v1232
    %1723 = vmatpush.bf16.msra.mxu0 %v1228
    %1724 = vmatpush.bf16.msra.mxu0 %v1224
    %1725 = vmatmul.bf16.gmra.mxu0 %v151
    %v1726 = vpop.f32.mrf.mxu0
    %v1727 = vadd.f32 %v1714, %v1726
    %v1728 = vpop.f32.mrf.mxu0
    %1729 = vdwg.mxu0
    %1730 = vmatpush.bf16.msra.mxu0 %v1284
    %1731 = vmatpush.bf16.msra.mxu0 %v1280
    %1732 = vmatpush.bf16.msra.mxu0 %v1276
    %1733 = vmatpush.bf16.msra.mxu0 %v1272
    %1734 = vmatpush.bf16.msra.mxu0 %v1268
    %1735 = vmatpush.bf16.msra.mxu0 %v1264
    %1736 = vmatpush.bf16.msra.mxu0 %v1260
    %1737 = vmatpush.bf16.msra.mxu0 %v1256
    %1738 = vmatmul.bf16.gmra.mxu0 %v152
    %v1739 = vpop.f32.mrf.mxu0
    %v1740 = vadd.f32 %v1727, %v1739
    %v1741 = vpop.f32.mrf.mxu0
    %1742 = vdwg.mxu0
    %1743 = vmatpush.bf16.msra.mxu0 %v1316
    %1744 = vmatpush.bf16.msra.mxu0 %v1312
    %1745 = vmatpush.bf16.msra.mxu0 %v1308
    %1746 = vmatpush.bf16.msra.mxu0 %v1304
    %1747 = vmatpush.bf16.msra.mxu0 %v1300
    %1748 = vmatpush.bf16.msra.mxu0 %v1296
    %1749 = vmatpush.bf16.msra.mxu0 %v1292
    %1750 = vmatpush.bf16.msra.mxu0 %v1288
    %1751 = vmatmul.bf16.gmra.mxu0 %v153
    %v1752 = vpop.f32.mrf.mxu0
    %v1753 = vadd.f32 %v1740, %v1752
    %v1754 = vpop.f32.mrf.mxu0
    %1755 = vdwg.mxu0
    %1756 = vmatpush.bf16.msra.mxu0 %v1348
    %1757 = vmatpush.bf16.msra.mxu0 %v1344
    %1758 = vmatpush.bf16.msra.mxu0 %v1340
    %1759 = vmatpush.bf16.msra.mxu0 %v1336
    %1760 = vmatpush.bf16.msra.mxu0 %v1332
    %1761 = vmatpush.bf16.msra.mxu0 %v1328
    %1762 = vmatpush.bf16.msra.mxu0 %v1324
    %1763 = vmatpush.bf16.msra.mxu0 %v1320
    %1764 = vmatmul.bf16.gmra.mxu0 %v154
    %v1765 = vpop.f32.mrf.mxu0
    %v1766 = vadd.f32 %v1753, %v1765
    %v1767 = vpop.f32.mrf.mxu0
    %1768 = vdwg.mxu0
    %1769 = vmatpush.bf16.msra.mxu0 %v1380
    %1770 = vmatpush.bf16.msra.mxu0 %v1376
    %1771 = vmatpush.bf16.msra.mxu0 %v1372
    %1772 = vmatpush.bf16.msra.mxu0 %v1368
    %1773 = vmatpush.bf16.msra.mxu0 %v1364
    %1774 = vmatpush.bf16.msra.mxu0 %v1360
    %1775 = vmatpush.bf16.msra.mxu0 %v1356
    %1776 = vmatpush.bf16.msra.mxu0 %v1352
    %1777 = vmatmul.bf16.gmra.mxu0 %v155
    %v1778 = vpop.f32.mrf.mxu0
    %v1779 = vadd.f32 %v1766, %v1778
    %v1780 = vpop.f32.mrf.mxu0
    %1781 = vdwg.mxu0
    %1782 = vmatpush.bf16.msra.mxu0 %v1412
    %1783 = vmatpush.bf16.msra.mxu0 %v1408
    %1784 = vmatpush.bf16.msra.mxu0 %v1404
    %1785 = vmatpush.bf16.msra.mxu0 %v1400
    %1786 = vmatpush.bf16.msra.mxu0 %v1396
    %1787 = vmatpush.bf16.msra.mxu0 %v1392
    %1788 = vmatpush.bf16.msra.mxu0 %v1388
    %1789 = vmatpush.bf16.msra.mxu0 %v1384
    %1790 = vmatmul.bf16.gmra.mxu0 %v156
    %v1791 = vpop.f32.mrf.mxu0
    %v1792 = vadd.f32 %v1779, %v1791
    %v1793 = vpop.f32.mrf.mxu0
    %1794 = vdwg.mxu0
    %1795 = vmatpush.bf16.msra.mxu0 %v1444
    %1796 = vmatpush.bf16.msra.mxu0 %v1440
    %1797 = vmatpush.bf16.msra.mxu0 %v1436
    %1798 = vmatpush.bf16.msra.mxu0 %v1432
    %1799 = vmatpush.bf16.msra.mxu0 %v1428
    %1800 = vmatpush.bf16.msra.mxu0 %v1424
    %1801 = vmatpush.bf16.msra.mxu0 %v1420
    %1802 = vmatpush.bf16.msra.mxu0 %v1416
    %1803 = vmatmul.bf16.gmra.mxu0 %v157
    %v1804 = vpop.f32.mrf.mxu0
    %v1805 = vadd.f32 %v1792, %v1804
    %v1806 = vpop.f32.mrf.mxu0
    %1807 = vdwg.mxu0
    %1808 = vmatpush.bf16.msra.mxu0 %v1221
    %1809 = vmatpush.bf16.msra.mxu0 %v1217
    %1810 = vmatpush.bf16.msra.mxu0 %v1213
    %1811 = vmatpush.bf16.msra.mxu0 %v1209
    %1812 = vmatpush.bf16.msra.mxu0 %v1205
    %1813 = vmatpush.bf16.msra.mxu0 %v1201
    %1814 = vmatpush.bf16.msra.mxu0 %v1197
    %1815 = vmatpush.bf16.msra.mxu0 %v1193
    %1816 = vmatmul.bf16.gmra.mxu0 %v150
    %v1817 = vpop.f32.mrf.mxu0
    %v1818 = vadd.f32 %v417, %v1817
    %v1819 = vpop.f32.mrf.mxu0
    %1820 = vdwg.mxu0
    %1821 = vmatpush.bf16.msra.mxu0 %v1253
    %1822 = vmatpush.bf16.msra.mxu0 %v1249
    %1823 = vmatpush.bf16.msra.mxu0 %v1245
    %1824 = vmatpush.bf16.msra.mxu0 %v1241
    %1825 = vmatpush.bf16.msra.mxu0 %v1237
    %1826 = vmatpush.bf16.msra.mxu0 %v1233
    %1827 = vmatpush.bf16.msra.mxu0 %v1229
    %1828 = vmatpush.bf16.msra.mxu0 %v1225
    %1829 = vmatmul.bf16.gmra.mxu0 %v151
    %v1830 = vpop.f32.mrf.mxu0
    %v1831 = vadd.f32 %v1818, %v1830
    %v1832 = vpop.f32.mrf.mxu0
    %1833 = vdwg.mxu0
    %1834 = vmatpush.bf16.msra.mxu0 %v1285
    %1835 = vmatpush.bf16.msra.mxu0 %v1281
    %1836 = vmatpush.bf16.msra.mxu0 %v1277
    %1837 = vmatpush.bf16.msra.mxu0 %v1273
    %1838 = vmatpush.bf16.msra.mxu0 %v1269
    %1839 = vmatpush.bf16.msra.mxu0 %v1265
    %1840 = vmatpush.bf16.msra.mxu0 %v1261
    %1841 = vmatpush.bf16.msra.mxu0 %v1257
    %1842 = vmatmul.bf16.gmra.mxu0 %v152
    %v1843 = vpop.f32.mrf.mxu0
    %v1844 = vadd.f32 %v1831, %v1843
    %v1845 = vpop.f32.mrf.mxu0
    %1846 = vdwg.mxu0
    %1847 = vmatpush.bf16.msra.mxu0 %v1317
    %1848 = vmatpush.bf16.msra.mxu0 %v1313
    %1849 = vmatpush.bf16.msra.mxu0 %v1309
    %1850 = vmatpush.bf16.msra.mxu0 %v1305
    %1851 = vmatpush.bf16.msra.mxu0 %v1301
    %1852 = vmatpush.bf16.msra.mxu0 %v1297
    %1853 = vmatpush.bf16.msra.mxu0 %v1293
    %1854 = vmatpush.bf16.msra.mxu0 %v1289
    %1855 = vmatmul.bf16.gmra.mxu0 %v153
    %v1856 = vpop.f32.mrf.mxu0
    %v1857 = vadd.f32 %v1844, %v1856
    %v1858 = vpop.f32.mrf.mxu0
    %1859 = vdwg.mxu0
    %1860 = vmatpush.bf16.msra.mxu0 %v1349
    %1861 = vmatpush.bf16.msra.mxu0 %v1345
    %1862 = vmatpush.bf16.msra.mxu0 %v1341
    %1863 = vmatpush.bf16.msra.mxu0 %v1337
    %1864 = vmatpush.bf16.msra.mxu0 %v1333
    %1865 = vmatpush.bf16.msra.mxu0 %v1329
    %1866 = vmatpush.bf16.msra.mxu0 %v1325
    %1867 = vmatpush.bf16.msra.mxu0 %v1321
    %1868 = vmatmul.bf16.gmra.mxu0 %v154
    %v1869 = vpop.f32.mrf.mxu0
    %v1870 = vadd.f32 %v1857, %v1869
    %v1871 = vpop.f32.mrf.mxu0
    %1872 = vdwg.mxu0
    %1873 = vmatpush.bf16.msra.mxu0 %v1381
    %1874 = vmatpush.bf16.msra.mxu0 %v1377
    %1875 = vmatpush.bf16.msra.mxu0 %v1373
    %1876 = vmatpush.bf16.msra.mxu0 %v1369
    %1877 = vmatpush.bf16.msra.mxu0 %v1365
    %1878 = vmatpush.bf16.msra.mxu0 %v1361
    %1879 = vmatpush.bf16.msra.mxu0 %v1357
    %1880 = vmatpush.bf16.msra.mxu0 %v1353
    %1881 = vmatmul.bf16.gmra.mxu0 %v155
    %v1882 = vpop.f32.mrf.mxu0
    %v1883 = vadd.f32 %v1870, %v1882
    %v1884 = vpop.f32.mrf.mxu0
    %1885 = vdwg.mxu0
    %1886 = vmatpush.bf16.msra.mxu0 %v1413
    %1887 = vmatpush.bf16.msra.mxu0 %v1409
    %1888 = vmatpush.bf16.msra.mxu0 %v1405
    %1889 = vmatpush.bf16.msra.mxu0 %v1401
    %1890 = vmatpush.bf16.msra.mxu0 %v1397
    %1891 = vmatpush.bf16.msra.mxu0 %v1393
    %1892 = vmatpush.bf16.msra.mxu0 %v1389
    %1893 = vmatpush.bf16.msra.mxu0 %v1385
    %1894 = vmatmul.bf16.gmra.mxu0 %v156
    %v1895 = vpop.f32.mrf.mxu0
    %v1896 = vadd.f32 %v1883, %v1895
    %v1897 = vpop.f32.mrf.mxu0
    %1898 = vdwg.mxu0
    %1899 = vmatpush.bf16.msra.mxu0 %v1445
    %1900 = vmatpush.bf16.msra.mxu0 %v1441
    %1901 = vmatpush.bf16.msra.mxu0 %v1437
    %1902 = vmatpush.bf16.msra.mxu0 %v1433
    %1903 = vmatpush.bf16.msra.mxu0 %v1429
    %1904 = vmatpush.bf16.msra.mxu0 %v1425
    %1905 = vmatpush.bf16.msra.mxu0 %v1421
    %1906 = vmatpush.bf16.msra.mxu0 %v1417
    %1907 = vmatmul.bf16.gmra.mxu0 %v157
    %v1908 = vpop.f32.mrf.mxu0
    %v1909 = vadd.f32 %v1896, %v1908
    %v1910 = vpop.f32.mrf.mxu0
    %1911 = vdwg.mxu0
    %1912 = vmatpush.bf16.msra.mxu0 %v1222
    %1913 = vmatpush.bf16.msra.mxu0 %v1218
    %1914 = vmatpush.bf16.msra.mxu0 %v1214
    %1915 = vmatpush.bf16.msra.mxu0 %v1210
    %1916 = vmatpush.bf16.msra.mxu0 %v1206
    %1917 = vmatpush.bf16.msra.mxu0 %v1202
    %1918 = vmatpush.bf16.msra.mxu0 %v1198
    %1919 = vmatpush.bf16.msra.mxu0 %v1194
    %1920 = vmatmul.bf16.gmra.mxu0 %v150
    %v1921 = vpop.f32.mrf.mxu0
    %v1922 = vadd.f32 %v418, %v1921
    %v1923 = vpop.f32.mrf.mxu0
    %1924 = vdwg.mxu0
    %1925 = vmatpush.bf16.msra.mxu0 %v1254
    %1926 = vmatpush.bf16.msra.mxu0 %v1250
    %1927 = vmatpush.bf16.msra.mxu0 %v1246
    %1928 = vmatpush.bf16.msra.mxu0 %v1242
    %1929 = vmatpush.bf16.msra.mxu0 %v1238
    %1930 = vmatpush.bf16.msra.mxu0 %v1234
    %1931 = vmatpush.bf16.msra.mxu0 %v1230
    %1932 = vmatpush.bf16.msra.mxu0 %v1226
    %1933 = vmatmul.bf16.gmra.mxu0 %v151
    %v1934 = vpop.f32.mrf.mxu0
    %v1935 = vadd.f32 %v1922, %v1934
    %v1936 = vpop.f32.mrf.mxu0
    %1937 = vdwg.mxu0
    %1938 = vmatpush.bf16.msra.mxu0 %v1286
    %1939 = vmatpush.bf16.msra.mxu0 %v1282
    %1940 = vmatpush.bf16.msra.mxu0 %v1278
    %1941 = vmatpush.bf16.msra.mxu0 %v1274
    %1942 = vmatpush.bf16.msra.mxu0 %v1270
    %1943 = vmatpush.bf16.msra.mxu0 %v1266
    %1944 = vmatpush.bf16.msra.mxu0 %v1262
    %1945 = vmatpush.bf16.msra.mxu0 %v1258
    %1946 = vmatmul.bf16.gmra.mxu0 %v152
    %v1947 = vpop.f32.mrf.mxu0
    %v1948 = vadd.f32 %v1935, %v1947
    %v1949 = vpop.f32.mrf.mxu0
    %1950 = vdwg.mxu0
    %1951 = vmatpush.bf16.msra.mxu0 %v1318
    %1952 = vmatpush.bf16.msra.mxu0 %v1314
    %1953 = vmatpush.bf16.msra.mxu0 %v1310
    %1954 = vmatpush.bf16.msra.mxu0 %v1306
    %1955 = vmatpush.bf16.msra.mxu0 %v1302
    %1956 = vmatpush.bf16.msra.mxu0 %v1298
    %1957 = vmatpush.bf16.msra.mxu0 %v1294
    %1958 = vmatpush.bf16.msra.mxu0 %v1290
    %1959 = vmatmul.bf16.gmra.mxu0 %v153
    %v1960 = vpop.f32.mrf.mxu0
    %v1961 = vadd.f32 %v1948, %v1960
    %v1962 = vpop.f32.mrf.mxu0
    %1963 = vdwg.mxu0
    %1964 = vmatpush.bf16.msra.mxu0 %v1350
    %1965 = vmatpush.bf16.msra.mxu0 %v1346
    %1966 = vmatpush.bf16.msra.mxu0 %v1342
    %1967 = vmatpush.bf16.msra.mxu0 %v1338
    %1968 = vmatpush.bf16.msra.mxu0 %v1334
    %1969 = vmatpush.bf16.msra.mxu0 %v1330
    %1970 = vmatpush.bf16.msra.mxu0 %v1326
    %1971 = vmatpush.bf16.msra.mxu0 %v1322
    %1972 = vmatmul.bf16.gmra.mxu0 %v154
    %v1973 = vpop.f32.mrf.mxu0
    %v1974 = vadd.f32 %v1961, %v1973
    %v1975 = vpop.f32.mrf.mxu0
    %1976 = vdwg.mxu0
    %1977 = vmatpush.bf16.msra.mxu0 %v1382
    %1978 = vmatpush.bf16.msra.mxu0 %v1378
    %1979 = vmatpush.bf16.msra.mxu0 %v1374
    %1980 = vmatpush.bf16.msra.mxu0 %v1370
    %1981 = vmatpush.bf16.msra.mxu0 %v1366
    %1982 = vmatpush.bf16.msra.mxu0 %v1362
    %1983 = vmatpush.bf16.msra.mxu0 %v1358
    %1984 = vmatpush.bf16.msra.mxu0 %v1354
    %1985 = vmatmul.bf16.gmra.mxu0 %v155
    %v1986 = vpop.f32.mrf.mxu0
    %v1987 = vadd.f32 %v1974, %v1986
    %v1988 = vpop.f32.mrf.mxu0
    %1989 = vdwg.mxu0
    %1990 = vmatpush.bf16.msra.mxu0 %v1414
    %1991 = vmatpush.bf16.msra.mxu0 %v1410
    %1992 = vmatpush.bf16.msra.mxu0 %v1406
    %1993 = vmatpush.bf16.msra.mxu0 %v1402
    %1994 = vmatpush.bf16.msra.mxu0 %v1398
    %1995 = vmatpush.bf16.msra.mxu0 %v1394
    %1996 = vmatpush.bf16.msra.mxu0 %v1390
    %1997 = vmatpush.bf16.msra.mxu0 %v1386
    %1998 = vmatmul.bf16.gmra.mxu0 %v156
    %v1999 = vpop.f32.mrf.mxu0
    %v2000 = vadd.f32 %v1987, %v1999
    %v2001 = vpop.f32.mrf.mxu0
    %2002 = vdwg.mxu0
    %2003 = vmatpush.bf16.msra.mxu0 %v1446
    %2004 = vmatpush.bf16.msra.mxu0 %v1442
    %2005 = vmatpush.bf16.msra.mxu0 %v1438
    %2006 = vmatpush.bf16.msra.mxu0 %v1434
    %2007 = vmatpush.bf16.msra.mxu0 %v1430
    %2008 = vmatpush.bf16.msra.mxu0 %v1426
    %2009 = vmatpush.bf16.msra.mxu0 %v1422
    %2010 = vmatpush.bf16.msra.mxu0 %v1418
    %2011 = vmatmul.bf16.gmra.mxu0 %v157
    %v2012 = vpop.f32.mrf.mxu0
    %v2013 = vadd.f32 %v2000, %v2012
    %v2014 = vpop.f32.mrf.mxu0
    %2015 = vdwg.mxu0
    %2016 = vmatpush.bf16.msra.mxu0 %v1223
    %2017 = vmatpush.bf16.msra.mxu0 %v1219
    %2018 = vmatpush.bf16.msra.mxu0 %v1215
    %2019 = vmatpush.bf16.msra.mxu0 %v1211
    %2020 = vmatpush.bf16.msra.mxu0 %v1207
    %2021 = vmatpush.bf16.msra.mxu0 %v1203
    %2022 = vmatpush.bf16.msra.mxu0 %v1199
    %2023 = vmatpush.bf16.msra.mxu0 %v1195
    %2024 = vmatmul.bf16.gmra.mxu0 %v150
    %v2025 = vpop.f32.mrf.mxu0
    %v2026 = vadd.f32 %v419, %v2025
    %v2027 = vpop.f32.mrf.mxu0
    %2028 = vdwg.mxu0
    %2029 = vmatpush.bf16.msra.mxu0 %v1255
    %2030 = vmatpush.bf16.msra.mxu0 %v1251
    %2031 = vmatpush.bf16.msra.mxu0 %v1247
    %2032 = vmatpush.bf16.msra.mxu0 %v1243
    %2033 = vmatpush.bf16.msra.mxu0 %v1239
    %2034 = vmatpush.bf16.msra.mxu0 %v1235
    %2035 = vmatpush.bf16.msra.mxu0 %v1231
    %2036 = vmatpush.bf16.msra.mxu0 %v1227
    %2037 = vmatmul.bf16.gmra.mxu0 %v151
    %v2038 = vpop.f32.mrf.mxu0
    %v2039 = vadd.f32 %v2026, %v2038
    %v2040 = vpop.f32.mrf.mxu0
    %2041 = vdwg.mxu0
    %2042 = vmatpush.bf16.msra.mxu0 %v1287
    %2043 = vmatpush.bf16.msra.mxu0 %v1283
    %2044 = vmatpush.bf16.msra.mxu0 %v1279
    %2045 = vmatpush.bf16.msra.mxu0 %v1275
    %2046 = vmatpush.bf16.msra.mxu0 %v1271
    %2047 = vmatpush.bf16.msra.mxu0 %v1267
    %2048 = vmatpush.bf16.msra.mxu0 %v1263
    %2049 = vmatpush.bf16.msra.mxu0 %v1259
    %2050 = vmatmul.bf16.gmra.mxu0 %v152
    %v2051 = vpop.f32.mrf.mxu0
    %v2052 = vadd.f32 %v2039, %v2051
    %v2053 = vpop.f32.mrf.mxu0
    %2054 = vdwg.mxu0
    %2055 = vmatpush.bf16.msra.mxu0 %v1319
    %2056 = vmatpush.bf16.msra.mxu0 %v1315
    %2057 = vmatpush.bf16.msra.mxu0 %v1311
    %2058 = vmatpush.bf16.msra.mxu0 %v1307
    %2059 = vmatpush.bf16.msra.mxu0 %v1303
    %2060 = vmatpush.bf16.msra.mxu0 %v1299
    %2061 = vmatpush.bf16.msra.mxu0 %v1295
    %2062 = vmatpush.bf16.msra.mxu0 %v1291
    %2063 = vmatmul.bf16.gmra.mxu0 %v153
    %v2064 = vpop.f32.mrf.mxu0
    %v2065 = vadd.f32 %v2052, %v2064
    %v2066 = vpop.f32.mrf.mxu0
    %2067 = vdwg.mxu0
    %2068 = vmatpush.bf16.msra.mxu0 %v1351
    %2069 = vmatpush.bf16.msra.mxu0 %v1347
    %2070 = vmatpush.bf16.msra.mxu0 %v1343
    %2071 = vmatpush.bf16.msra.mxu0 %v1339
    %2072 = vmatpush.bf16.msra.mxu0 %v1335
    %2073 = vmatpush.bf16.msra.mxu0 %v1331
    %2074 = vmatpush.bf16.msra.mxu0 %v1327
    %2075 = vmatpush.bf16.msra.mxu0 %v1323
    %2076 = vmatmul.bf16.gmra.mxu0 %v154
    %v2077 = vpop.f32.mrf.mxu0
    %v2078 = vadd.f32 %v2065, %v2077
    %v2079 = vpop.f32.mrf.mxu0
    %2080 = vdwg.mxu0
    %2081 = vmatpush.bf16.msra.mxu0 %v1383
    %2082 = vmatpush.bf16.msra.mxu0 %v1379
    %2083 = vmatpush.bf16.msra.mxu0 %v1375
    %2084 = vmatpush.bf16.msra.mxu0 %v1371
    %2085 = vmatpush.bf16.msra.mxu0 %v1367
    %2086 = vmatpush.bf16.msra.mxu0 %v1363
    %2087 = vmatpush.bf16.msra.mxu0 %v1359
    %2088 = vmatpush.bf16.msra.mxu0 %v1355
    %2089 = vmatmul.bf16.gmra.mxu0 %v155
    %v2090 = vpop.f32.mrf.mxu0
    %v2091 = vadd.f32 %v2078, %v2090
    %v2092 = vpop.f32.mrf.mxu0
    %2093 = vdwg.mxu0
    %2094 = vmatpush.bf16.msra.mxu0 %v1415
    %2095 = vmatpush.bf16.msra.mxu0 %v1411
    %2096 = vmatpush.bf16.msra.mxu0 %v1407
    %2097 = vmatpush.bf16.msra.mxu0 %v1403
    %2098 = vmatpush.bf16.msra.mxu0 %v1399
    %2099 = vmatpush.bf16.msra.mxu0 %v1395
    %2100 = vmatpush.bf16.msra.mxu0 %v1391
    %2101 = vmatpush.bf16.msra.mxu0 %v1387
    %2102 = vmatmul.bf16.gmra.mxu0 %v156
    %v2103 = vpop.f32.mrf.mxu0
    %v2104 = vadd.f32 %v2091, %v2103
    %v2105 = vpop.f32.mrf.mxu0
    %2106 = vdwg.mxu0
    %2107 = vmatpush.bf16.msra.mxu0 %v1447
    %2108 = vmatpush.bf16.msra.mxu0 %v1443
    %2109 = vmatpush.bf16.msra.mxu0 %v1439
    %2110 = vmatpush.bf16.msra.mxu0 %v1435
    %2111 = vmatpush.bf16.msra.mxu0 %v1431
    %2112 = vmatpush.bf16.msra.mxu0 %v1427
    %2113 = vmatpush.bf16.msra.mxu0 %v1423
    %2114 = vmatpush.bf16.msra.mxu0 %v1419
    %2115 = vmatmul.bf16.gmra.mxu0 %v157
    %v2116 = vpop.f32.mrf.mxu0
    %v2117 = vadd.f32 %v2104, %v2116
    %v2118 = vpop.f32.mrf.mxu0
    %2119 = vdwg.mxu0
    %vm2120 = vcmp.gt.f32.partialorder %v1805, 0.0
    %vm2121 = vcmp.gt.f32.partialorder %v1909, 0.0
    %vm2122 = vcmp.gt.f32.partialorder %v2013, 0.0
    %vm2123 = vcmp.gt.f32.partialorder %v2117, 0.0
    %v2124 = vmul.f32 %v1805, 0.2
    %v2125 = vmul.f32 %v1909, 0.2
    %v2126 = vmul.f32 %v2013, 0.2
    %v2127 = vmul.f32 %v2117, 0.2
    %v2128 = vsel %vm2120, %v1805, %v2124
    %v2129 = vsel %vm2121, %v1909, %v2125
    %v2130 = vsel %vm2122, %v2013, %v2126
    %v2131 = vsel %vm2123, %v2117, %v2127
    %v2132 = vpack.c.bf16 %v2128, %v2128
    %v2133 = vpack.c.bf16 %v2129, %v2129
    %v2134 = vpack.c.bf16 %v2130, %v2130
    %v2135 = vpack.c.bf16 %v2131, %v2131
    %v2136 = vld [vmem:[#allocation9] sm:$0xff]
    %v2137 = vld [vmem:[#allocation9 + $0x8] sm:$0xff]
    %v2138 = vld [vmem:[#allocation9 + $0x10] sm:$0xff]
    %v2139 = vld [vmem:[#allocation9 + $0x18] sm:$0xff]
    %v2140 = vld [vmem:[#allocation9 + $0x20] sm:$0xff]
    %v2141 = vld [vmem:[#allocation9 + $0x28] sm:$0xff]
    %v2142 = vld [vmem:[#allocation9 + $0x30] sm:$0xff]
    %v2143 = vld [vmem:[#allocation9 + $0x38] sm:$0xff]
    %v2144 = vld [vmem:[#allocation9 + $0x40] sm:$0xff]
    %v2145 = vld [vmem:[#allocation9 + $0x48] sm:$0xff]
    %v2146 = vld [vmem:[#allocation9 + $0x50] sm:$0xff]
    %v2147 = vld [vmem:[#allocation9 + $0x58] sm:$0xff]
    %v2148 = vld [vmem:[#allocation9 + $0x60] sm:$0xff]
    %v2149 = vld [vmem:[#allocation9 + $0x68] sm:$0xff]
    %v2150 = vld [vmem:[#allocation9 + $0x70] sm:$0xff]
    %v2151 = vld [vmem:[#allocation9 + $0x78] sm:$0xff]
    %v2152 = vld [vmem:[#allocation9 + $0x80] sm:$0xff]
    %v2153 = vld [vmem:[#allocation9 + $0x88] sm:$0xff]
    %v2154 = vld [vmem:[#allocation9 + $0x90] sm:$0xff]
    %v2155 = vld [vmem:[#allocation9 + $0x98] sm:$0xff]
    %v2156 = vld [vmem:[#allocation9 + $0xa0] sm:$0xff]
    %v2157 = vld [vmem:[#allocation9 + $0xa8] sm:$0xff]
    %v2158 = vld [vmem:[#allocation9 + $0xb0] sm:$0xff]
    %v2159 = vld [vmem:[#allocation9 + $0xb8] sm:$0xff]
    %v2160 = vld [vmem:[#allocation9 + $0xc0] sm:$0xff]
    %v2161 = vld [vmem:[#allocation9 + $0xc8] sm:$0xff]
    %v2162 = vld [vmem:[#allocation9 + $0xd0] sm:$0xff]
    %v2163 = vld [vmem:[#allocation9 + $0xd8] sm:$0xff]
    %v2164 = vld [vmem:[#allocation9 + $0xe0] sm:$0xff]
    %v2165 = vld [vmem:[#allocation9 + $0xe8] sm:$0xff]
    %v2166 = vld [vmem:[#allocation9 + $0xf0] sm:$0xff]
    %v2167 = vld [vmem:[#allocation9 + $0xf8] sm:$0xff]
    %v2168 = vld [vmem:[#allocation9 + $0x100] sm:$0xff]
    %v2169 = vld [vmem:[#allocation9 + $0x108] sm:$0xff]
    %v2170 = vld [vmem:[#allocation9 + $0x110] sm:$0xff]
    %v2171 = vld [vmem:[#allocation9 + $0x118] sm:$0xff]
    %v2172 = vld [vmem:[#allocation9 + $0x120] sm:$0xff]
    %v2173 = vld [vmem:[#allocation9 + $0x128] sm:$0xff]
    %v2174 = vld [vmem:[#allocation9 + $0x130] sm:$0xff]
    %v2175 = vld [vmem:[#allocation9 + $0x138] sm:$0xff]
    %v2176 = vld [vmem:[#allocation9 + $0x140] sm:$0xff]
    %v2177 = vld [vmem:[#allocation9 + $0x148] sm:$0xff]
    %v2178 = vld [vmem:[#allocation9 + $0x150] sm:$0xff]
    %v2179 = vld [vmem:[#allocation9 + $0x158] sm:$0xff]
    %v2180 = vld [vmem:[#allocation9 + $0x160] sm:$0xff]
    %v2181 = vld [vmem:[#allocation9 + $0x168] sm:$0xff]
    %v2182 = vld [vmem:[#allocation9 + $0x170] sm:$0xff]
    %v2183 = vld [vmem:[#allocation9 + $0x178] sm:$0xff]
    %v2184 = vld [vmem:[#allocation9 + $0x180] sm:$0xff]
    %v2185 = vld [vmem:[#allocation9 + $0x188] sm:$0xff]
    %v2186 = vld [vmem:[#allocation9 + $0x190] sm:$0xff]
    %v2187 = vld [vmem:[#allocation9 + $0x198] sm:$0xff]
    %v2188 = vld [vmem:[#allocation9 + $0x1a0] sm:$0xff]
    %v2189 = vld [vmem:[#allocation9 + $0x1a8] sm:$0xff]
    %v2190 = vld [vmem:[#allocation9 + $0x1b0] sm:$0xff]
    %v2191 = vld [vmem:[#allocation9 + $0x1b8] sm:$0xff]
    %v2192 = vld [vmem:[#allocation9 + $0x1c0] sm:$0xff]
    %v2193 = vld [vmem:[#allocation9 + $0x1c8] sm:$0xff]
    %v2194 = vld [vmem:[#allocation9 + $0x1d0] sm:$0xff]
    %v2195 = vld [vmem:[#allocation9 + $0x1d8] sm:$0xff]
    %v2196 = vld [vmem:[#allocation9 + $0x1e0] sm:$0xff]
    %v2197 = vld [vmem:[#allocation9 + $0x1e8] sm:$0xff]
    %v2198 = vld [vmem:[#allocation9 + $0x1f0] sm:$0xff]
    %v2199 = vld [vmem:[#allocation9 + $0x1f8] sm:$0xff]
    %v2200 = vld [vmem:[%s4] sm:$0x3]
    %v2202 = vperm.slane %v2200, 0
    %v2203 = vperm.slane %v2200, 1
    %v2270 = vunpack.c.l.b16 %v2136
    %v2271 = vunpack.c.h.b16 %v2136
    %v2272 = vunpack.c.l.b16 %v2137
    %v2273 = vunpack.c.h.b16 %v2137
    %v2274 = vunpack.c.l.b16 %v2138
    %v2275 = vunpack.c.h.b16 %v2138
    %v2276 = vunpack.c.l.b16 %v2139
    %v2277 = vunpack.c.h.b16 %v2139
    %v2278 = vunpack.c.l.b16 %v2140
    %v2279 = vunpack.c.h.b16 %v2140
    %v2280 = vunpack.c.l.b16 %v2141
    %v2281 = vunpack.c.h.b16 %v2141
    %v2282 = vunpack.c.l.b16 %v2142
    %v2283 = vunpack.c.h.b16 %v2142
    %v2284 = vunpack.c.l.b16 %v2143
    %v2285 = vunpack.c.h.b16 %v2143
    %v2286 = vunpack.c.l.b16 %v2144
    %v2287 = vunpack.c.h.b16 %v2144
    %v2288 = vunpack.c.l.b16 %v2145
    %v2289 = vunpack.c.h.b16 %v2145
    %v2290 = vunpack.c.l.b16 %v2146
    %v2291 = vunpack.c.h.b16 %v2146
    %v2292 = vunpack.c.l.b16 %v2147
    %v2293 = vunpack.c.h.b16 %v2147
    %v2294 = vunpack.c.l.b16 %v2148
    %v2295 = vunpack.c.h.b16 %v2148
    %v2296 = vunpack.c.l.b16 %v2149
    %v2297 = vunpack.c.h.b16 %v2149
    %v2298 = vunpack.c.l.b16 %v2150
    %v2299 = vunpack.c.h.b16 %v2150
    %v2300 = vunpack.c.l.b16 %v2151
    %v2301 = vunpack.c.h.b16 %v2151
    %v2302 = vunpack.c.l.b16 %v2152
    %v2303 = vunpack.c.h.b16 %v2152
    %v2304 = vunpack.c.l.b16 %v2153
    %v2305 = vunpack.c.h.b16 %v2153
    %v2306 = vunpack.c.l.b16 %v2154
    %v2307 = vunpack.c.h.b16 %v2154
    %v2308 = vunpack.c.l.b16 %v2155
    %v2309 = vunpack.c.h.b16 %v2155
    %v2310 = vunpack.c.l.b16 %v2156
    %v2311 = vunpack.c.h.b16 %v2156
    %v2312 = vunpack.c.l.b16 %v2157
    %v2313 = vunpack.c.h.b16 %v2157
    %v2314 = vunpack.c.l.b16 %v2158
    %v2315 = vunpack.c.h.b16 %v2158
    %v2316 = vunpack.c.l.b16 %v2159
    %v2317 = vunpack.c.h.b16 %v2159
    %v2318 = vunpack.c.l.b16 %v2160
    %v2319 = vunpack.c.h.b16 %v2160
    %v2320 = vunpack.c.l.b16 %v2161
    %v2321 = vunpack.c.h.b16 %v2161
    %v2322 = vunpack.c.l.b16 %v2162
    %v2323 = vunpack.c.h.b16 %v2162
    %v2324 = vunpack.c.l.b16 %v2163
    %v2325 = vunpack.c.h.b16 %v2163
    %v2326 = vunpack.c.l.b16 %v2164
    %v2327 = vunpack.c.h.b16 %v2164
    %v2328 = vunpack.c.l.b16 %v2165
    %v2329 = vunpack.c.h.b16 %v2165
    %v2330 = vunpack.c.l.b16 %v2166
    %v2331 = vunpack.c.h.b16 %v2166
    %v2332 = vunpack.c.l.b16 %v2167
    %v2333 = vunpack.c.h.b16 %v2167
    %v2334 = vunpack.c.l.b16 %v2168
    %v2335 = vunpack.c.h.b16 %v2168
    %v2336 = vunpack.c.l.b16 %v2169
    %v2337 = vunpack.c.h.b16 %v2169
    %v2338 = vunpack.c.l.b16 %v2170
    %v2339 = vunpack.c.h.b16 %v2170
    %v2340 = vunpack.c.l.b16 %v2171
    %v2341 = vunpack.c.h.b16 %v2171
    %v2342 = vunpack.c.l.b16 %v2172
    %v2343 = vunpack.c.h.b16 %v2172
    %v2344 = vunpack.c.l.b16 %v2173
    %v2345 = vunpack.c.h.b16 %v2173
    %v2346 = vunpack.c.l.b16 %v2174
    %v2347 = vunpack.c.h.b16 %v2174
    %v2348 = vunpack.c.l.b16 %v2175
    %v2349 = vunpack.c.h.b16 %v2175
    %v2350 = vunpack.c.l.b16 %v2176
    %v2351 = vunpack.c.h.b16 %v2176
    %v2352 = vunpack.c.l.b16 %v2177
    %v2353 = vunpack.c.h.b16 %v2177
    %v2354 = vunpack.c.l.b16 %v2178
    %v2355 = vunpack.c.h.b16 %v2178
    %v2356 = vunpack.c.l.b16 %v2179
    %v2357 = vunpack.c.h.b16 %v2179
    %v2358 = vunpack.c.l.b16 %v2180
    %v2359 = vunpack.c.h.b16 %v2180
    %v2360 = vunpack.c.l.b16 %v2181
    %v2361 = vunpack.c.h.b16 %v2181
    %v2362 = vunpack.c.l.b16 %v2182
    %v2363 = vunpack.c.h.b16 %v2182
    %v2364 = vunpack.c.l.b16 %v2183
    %v2365 = vunpack.c.h.b16 %v2183
    %v2366 = vunpack.c.l.b16 %v2184
    %v2367 = vunpack.c.h.b16 %v2184
    %v2368 = vunpack.c.l.b16 %v2185
    %v2369 = vunpack.c.h.b16 %v2185
    %v2370 = vunpack.c.l.b16 %v2186
    %v2371 = vunpack.c.h.b16 %v2186
    %v2372 = vunpack.c.l.b16 %v2187
    %v2373 = vunpack.c.h.b16 %v2187
    %v2374 = vunpack.c.l.b16 %v2188
    %v2375 = vunpack.c.h.b16 %v2188
    %v2376 = vunpack.c.l.b16 %v2189
    %v2377 = vunpack.c.h.b16 %v2189
    %v2378 = vunpack.c.l.b16 %v2190
    %v2379 = vunpack.c.h.b16 %v2190
    %v2380 = vunpack.c.l.b16 %v2191
    %v2381 = vunpack.c.h.b16 %v2191
    %v2382 = vunpack.c.l.b16 %v2192
    %v2383 = vunpack.c.h.b16 %v2192
    %v2384 = vunpack.c.l.b16 %v2193
    %v2385 = vunpack.c.h.b16 %v2193
    %v2386 = vunpack.c.l.b16 %v2194
    %v2387 = vunpack.c.h.b16 %v2194
    %v2388 = vunpack.c.l.b16 %v2195
    %v2389 = vunpack.c.h.b16 %v2195
    %v2390 = vunpack.c.l.b16 %v2196
    %v2391 = vunpack.c.h.b16 %v2196
    %v2392 = vunpack.c.l.b16 %v2197
    %v2393 = vunpack.c.h.b16 %v2197
    %v2394 = vunpack.c.l.b16 %v2198
    %v2395 = vunpack.c.h.b16 %v2198
    %v2396 = vunpack.c.l.b16 %v2199
    %v2397 = vunpack.c.h.b16 %v2199
    %v2398 = vpack.c.b16 %v2272, %v2270
    %v2399 = vpack.c.b16 %v2273, %v2271
    %v2400 = vpack.c.b16 %v2276, %v2274
    %v2401 = vpack.c.b16 %v2277, %v2275
    %v2402 = vpack.c.b16 %v2280, %v2278
    %v2403 = vpack.c.b16 %v2281, %v2279
    %v2404 = vpack.c.b16 %v2284, %v2282
    %v2405 = vpack.c.b16 %v2285, %v2283
    %v2406 = vpack.c.b16 %v2288, %v2286
    %v2407 = vpack.c.b16 %v2289, %v2287
    %v2408 = vpack.c.b16 %v2292, %v2290
    %v2409 = vpack.c.b16 %v2293, %v2291
    %v2410 = vpack.c.b16 %v2296, %v2294
    %v2411 = vpack.c.b16 %v2297, %v2295
    %v2412 = vpack.c.b16 %v2300, %v2298
    %v2413 = vpack.c.b16 %v2301, %v2299
    %v2414 = vpack.c.b16 %v2304, %v2302
    %v2415 = vpack.c.b16 %v2305, %v2303
    %v2416 = vpack.c.b16 %v2308, %v2306
    %v2417 = vpack.c.b16 %v2309, %v2307
    %v2418 = vpack.c.b16 %v2312, %v2310
    %v2419 = vpack.c.b16 %v2313, %v2311
    %v2420 = vpack.c.b16 %v2316, %v2314
    %v2421 = vpack.c.b16 %v2317, %v2315
    %v2422 = vpack.c.b16 %v2320, %v2318
    %v2423 = vpack.c.b16 %v2321, %v2319
    %v2424 = vpack.c.b16 %v2324, %v2322
    %v2425 = vpack.c.b16 %v2325, %v2323
    %v2426 = vpack.c.b16 %v2328, %v2326
    %v2427 = vpack.c.b16 %v2329, %v2327
    %v2428 = vpack.c.b16 %v2332, %v2330
    %v2429 = vpack.c.b16 %v2333, %v2331
    %v2430 = vpack.c.b16 %v2336, %v2334
    %v2431 = vpack.c.b16 %v2337, %v2335
    %v2432 = vpack.c.b16 %v2340, %v2338
    %v2433 = vpack.c.b16 %v2341, %v2339
    %v2434 = vpack.c.b16 %v2344, %v2342
    %v2435 = vpack.c.b16 %v2345, %v2343
    %v2436 = vpack.c.b16 %v2348, %v2346
    %v2437 = vpack.c.b16 %v2349, %v2347
    %v2438 = vpack.c.b16 %v2352, %v2350
    %v2439 = vpack.c.b16 %v2353, %v2351
    %v2440 = vpack.c.b16 %v2356, %v2354
    %v2441 = vpack.c.b16 %v2357, %v2355
    %v2442 = vpack.c.b16 %v2360, %v2358
    %v2443 = vpack.c.b16 %v2361, %v2359
    %v2444 = vpack.c.b16 %v2364, %v2362
    %v2445 = vpack.c.b16 %v2365, %v2363
    %v2446 = vpack.c.b16 %v2368, %v2366
    %v2447 = vpack.c.b16 %v2369, %v2367
    %v2448 = vpack.c.b16 %v2372, %v2370
    %v2449 = vpack.c.b16 %v2373, %v2371
    %v2450 = vpack.c.b16 %v2376, %v2374
    %v2451 = vpack.c.b16 %v2377, %v2375
    %v2452 = vpack.c.b16 %v2380, %v2378
    %v2453 = vpack.c.b16 %v2381, %v2379
    %v2454 = vpack.c.b16 %v2384, %v2382
    %v2455 = vpack.c.b16 %v2385, %v2383
    %v2456 = vpack.c.b16 %v2388, %v2386
    %v2457 = vpack.c.b16 %v2389, %v2387
    %v2458 = vpack.c.b16 %v2392, %v2390
    %v2459 = vpack.c.b16 %v2393, %v2391
    %v2460 = vpack.c.b16 %v2396, %v2394
    %v2461 = vpack.c.b16 %v2397, %v2395
    %2526 = vmatpush.bf16.msra.mxu0 %v2412
    %2527 = vmatpush.bf16.msra.mxu0 %v2410
    %2528 = vmatpush.bf16.msra.mxu0 %v2408
    %2529 = vmatpush.bf16.msra.mxu0 %v2406
    %2530 = vmatpush.bf16.msra.mxu0 %v2404
    %2531 = vmatpush.bf16.msra.mxu0 %v2402
    %2532 = vmatpush.bf16.msra.mxu0 %v2400
    %2533 = vmatpush.bf16.msra.mxu0 %v2398
    %2534 = vmatmul.bf16.gmra.mxu0 %v2132
    %v2535 = vpop.f32.mrf.mxu0
    %v2536 = vadd.f32 %v2202, %v2535
    %v2537 = vpop.f32.mrf.mxu0
    %2538 = vdwg.mxu0
    %2539 = vmatpush.bf16.msra.mxu0 %v2428
    %2540 = vmatpush.bf16.msra.mxu0 %v2426
    %2541 = vmatpush.bf16.msra.mxu0 %v2424
    %2542 = vmatpush.bf16.msra.mxu0 %v2422
    %2543 = vmatpush.bf16.msra.mxu0 %v2420
    %2544 = vmatpush.bf16.msra.mxu0 %v2418
    %2545 = vmatpush.bf16.msra.mxu0 %v2416
    %2546 = vmatpush.bf16.msra.mxu0 %v2414
    %2547 = vmatmul.bf16.gmra.mxu0 %v2133
    %v2548 = vpop.f32.mrf.mxu0
    %v2549 = vadd.f32 %v2536, %v2548
    %v2550 = vpop.f32.mrf.mxu0
    %2551 = vdwg.mxu0
    %2552 = vmatpush.bf16.msra.mxu0 %v2444
    %2553 = vmatpush.bf16.msra.mxu0 %v2442
    %2554 = vmatpush.bf16.msra.mxu0 %v2440
    %2555 = vmatpush.bf16.msra.mxu0 %v2438
    %2556 = vmatpush.bf16.msra.mxu0 %v2436
    %2557 = vmatpush.bf16.msra.mxu0 %v2434
    %2558 = vmatpush.bf16.msra.mxu0 %v2432
    %2559 = vmatpush.bf16.msra.mxu0 %v2430
    %2560 = vmatmul.bf16.gmra.mxu0 %v2134
    %v2561 = vpop.f32.mrf.mxu0
    %v2562 = vadd.f32 %v2549, %v2561
    %v2563 = vpop.f32.mrf.mxu0
    %2564 = vdwg.mxu0
    %2565 = vmatpush.bf16.msra.mxu0 %v2460
    %2566 = vmatpush.bf16.msra.mxu0 %v2458
    %2567 = vmatpush.bf16.msra.mxu0 %v2456
    %2568 = vmatpush.bf16.msra.mxu0 %v2454
    %2569 = vmatpush.bf16.msra.mxu0 %v2452
    %2570 = vmatpush.bf16.msra.mxu0 %v2450
    %2571 = vmatpush.bf16.msra.mxu0 %v2448
    %2572 = vmatpush.bf16.msra.mxu0 %v2446
    %2573 = vmatmul.bf16.gmra.mxu0 %v2135
    %v2574 = vpop.f32.mrf.mxu0
    %v2575 = vadd.f32 %v2562, %v2574
    %v2576 = vpop.f32.mrf.mxu0
    %2577 = vdwg.mxu0
    %2578 = vmatpush.bf16.msra.mxu0 %v2413
    %2579 = vmatpush.bf16.msra.mxu0 %v2411
    %2580 = vmatpush.bf16.msra.mxu0 %v2409
    %2581 = vmatpush.bf16.msra.mxu0 %v2407
    %2582 = vmatpush.bf16.msra.mxu0 %v2405
    %2583 = vmatpush.bf16.msra.mxu0 %v2403
    %2584 = vmatpush.bf16.msra.mxu0 %v2401
    %2585 = vmatpush.bf16.msra.mxu0 %v2399
    %2586 = vmatmul.bf16.gmra.mxu0 %v2132
    %v2587 = vpop.f32.mrf.mxu0
    %v2588 = vadd.f32 %v2203, %v2587
    %v2589 = vpop.f32.mrf.mxu0
    %2590 = vdwg.mxu0
    %2591 = vmatpush.bf16.msra.mxu0 %v2429
    %2592 = vmatpush.bf16.msra.mxu0 %v2427
    %2593 = vmatpush.bf16.msra.mxu0 %v2425
    %2594 = vmatpush.bf16.msra.mxu0 %v2423
    %2595 = vmatpush.bf16.msra.mxu0 %v2421
    %2596 = vmatpush.bf16.msra.mxu0 %v2419
    %2597 = vmatpush.bf16.msra.mxu0 %v2417
    %2598 = vmatpush.bf16.msra.mxu0 %v2415
    %2599 = vmatmul.bf16.gmra.mxu0 %v2133
    %v2600 = vpop.f32.mrf.mxu0
    %v2601 = vadd.f32 %v2588, %v2600
    %v2602 = vpop.f32.mrf.mxu0
    %2603 = vdwg.mxu0
    %2604 = vmatpush.bf16.msra.mxu0 %v2445
    %2605 = vmatpush.bf16.msra.mxu0 %v2443
    %2606 = vmatpush.bf16.msra.mxu0 %v2441
    %2607 = vmatpush.bf16.msra.mxu0 %v2439
    %2608 = vmatpush.bf16.msra.mxu0 %v2437
    %2609 = vmatpush.bf16.msra.mxu0 %v2435
    %2610 = vmatpush.bf16.msra.mxu0 %v2433
    %2611 = vmatpush.bf16.msra.mxu0 %v2431
    %2612 = vmatmul.bf16.gmra.mxu0 %v2134
    %v2613 = vpop.f32.mrf.mxu0
    %v2614 = vadd.f32 %v2601, %v2613
    %v2615 = vpop.f32.mrf.mxu0
    %2616 = vdwg.mxu0
    %2617 = vmatpush.bf16.msra.mxu0 %v2461
    %2618 = vmatpush.bf16.msra.mxu0 %v2459
    %2619 = vmatpush.bf16.msra.mxu0 %v2457
    %2620 = vmatpush.bf16.msra.mxu0 %v2455
    %2621 = vmatpush.bf16.msra.mxu0 %v2453
    %2622 = vmatpush.bf16.msra.mxu0 %v2451
    %2623 = vmatpush.bf16.msra.mxu0 %v2449
    %2624 = vmatpush.bf16.msra.mxu0 %v2447
    %2625 = vmatmul.bf16.gmra.mxu0 %v2135
    %v2626 = vpop.f32.mrf.mxu0
    %v2627 = vadd.f32 %v2614, %v2626
    %v2628 = vpop.f32.mrf.mxu0
    %2629 = vdwg.mxu0
    %vm2630 = vcmp.gt.f32.partialorder %v2575, 0.0
    %vm2631 = vcmp.gt.f32.partialorder %v2627, 0.0
    %v2632 = vmul.f32 %v2575, 0.2
    %v2633 = vmul.f32 %v2627, 0.2
    %v2634 = vsel %vm2630, %v2575, %v2632
    %v2635 = vsel %vm2631, %v2627, %v2633
    %v2636 = vld [vmem:[#allocation11] sm:$0xff]
    %v2637 = vpack.c.bf16 %v2634, %v2634
    %v2638 = vpack.c.bf16 %v2635, %v2635
    %s2639 = sld [smem:[#allocation2]]
    %v2640 = vstv %s2639
    %v2642 = vunpack.c.l.b16 %v2636
    %v2643 = vunpack.c.h.b16 %v2636
    %v2644 = vpack.c.b16 %v2642, %v2642
    %v2645 = vpack.c.b16 %v2643, %v2643
    %2648 = vmatpush.bf16.xpose.msra.mxu0 0
    %2649 = vmatpush.bf16.xpose.msra.mxu0 0
    %2650 = vmatpush.bf16.xpose.msra.mxu0 0
    %2651 = vmatpush.bf16.xpose.msra.mxu0 0
    %2652 = vmatpush.bf16.xpose.msra.mxu0 0
    %2653 = vmatpush.bf16.xpose.msra.mxu0 0
    %2654 = vmatpush.bf16.xpose.msra.mxu0 0
    %2655 = vmatpush.bf16.xpose.msra.mxu0 %v2637
    %2656 = vmatmul.bf16.gmra.mxu0 %v2644
    %v2657 = vpop.f32.mrf.mxu0
    %v2658 = vadd.f32 %v2640, %v2657
    %v2659 = vpop.f32.mrf.mxu0
    %2660 = vdwg.mxu0
    %2661 = vmatpush.bf16.xpose.msra.mxu0 0
    %2662 = vmatpush.bf16.xpose.msra.mxu0 0
    %2663 = vmatpush.bf16.xpose.msra.mxu0 0
    %2664 = vmatpush.bf16.xpose.msra.mxu0 0
    %2665 = vmatpush.bf16.xpose.msra.mxu0 0
    %2666 = vmatpush.bf16.xpose.msra.mxu0 0
    %2667 = vmatpush.bf16.xpose.msra.mxu0 0
    %2668 = vmatpush.bf16.xpose.msra.mxu0 %v2638
    %2669 = vmatmul.bf16.gmra.mxu0 %v2645
    %v2670 = vpop.f32.mrf.mxu0
    %v2671 = vadd.f32 %v2658, %v2670
    %v2672 = vpop.f32.mrf.mxu0
    %2673 = vdwg.mxu0
    %v2674 = vsub.f32 0.0, %v2671
    %v2675 = vmul.f32 %v2674, 1.442695
    %v2676 = vpow.pop %v2675
    %v2677 = vadd.f32 %v2676, 1.0
    %v2678 = vrcp.pop %v2677
    %vm2679 = vcmask 64512
    %2680 = vst.msk [vmem:[#allocation12] sm:$0xff] %vm2679, %v2678
    // Predicated region
    $region50: #{tpu_custom_call.1} parent=1 // pred_check
      _
    $region51: #{tpu_custom_call.1} parent=1 // pred_check_branch
      %2682 = sbr.rel (0) target = $region53
    $region52: #{tpu_custom_call.1} parent=1 // pred_region
      %2684 = vsyncadd [#allocation5], 0
      %s2686 = sshll.u32 [#allocation12], 4
      %s2687 = int_to_ptr.vmem [resolvable:$true] %s2686
      %s2688 = sshll.u32 %s7, 4
      %s2689 = int_to_ptr.hbm [resolvable:$true] %s2688
      %2691 = dma.vmem_to_hbm [thread:$0]  %s2687, 128, %s2689, [#allocation5]
    $region53: #{tpu_custom_call.1} parent=1 // pred_fallthru
      _
    // Predicated region
    $region54: #{tpu_custom_call.1} parent=1 // pred_check
      _
    $region55: #{tpu_custom_call.1} parent=1 // pred_check_branch
      %2693 = sbr.rel (0) target = $region57
    $region56: #{tpu_custom_call.1} parent=1 // pred_region
      %2695 = dma.done [#allocation5], 128
    $region57: #{tpu_custom_call.1} parent=1 // pred_fallthru
      _
    %2696 = vsyncpa [#allocation4], 1
    %2697 = vsyncpa [#allocation7], 1
    %2698 = vsyncpa [#allocation10], 1
    %2699 = vsyncpa [#allocation5], 1

// kernel: tpu_custom_call.1
$region0: #{tpu_custom_call.1}
  #allocation0 [shape = 'u32[]', space=smem, size = 0x4, offset = 0x4, fixed_abs, tag = 'smem constant byte address 0x4 - core index']
  #allocation1 [shape = 'u32[72,128]{1,0:T(1,128)}', space=vmem, size = 0x9000, scoped, tag = 'internal scratch']
  #allocation2 [shape = 'f32[1]{0:T(128)S(6)}', space=smem, size = 0x200, scoped, tag = 'scoped memory for tpu_custom_call.1']
  %s0 = inlined_call_operand.hbm [shape: f32[2,1024], index: 0, kind: input, shape index: {}]
  %s1 = inlined_call_operand.hbm [shape: bf16[1024,512], index: 1, kind: input, shape index: {}]
  %s2 = inlined_call_operand.hbm [shape: f32[1,512], index: 2, kind: input, shape index: {}]
  %s3 = inlined_call_operand.hbm [shape: bf16[512,256], index: 3, kind: input, shape index: {}]
  %s4 = inlined_call_operand.vmem [shape: f32[1,256], index: 4, kind: input, shape index: {}]
  %s5 = inlined_call_operand.hbm [shape: bf16[8,256], index: 5, kind: input, shape index: {}]
  %s6 = inlined_call_operand.<no memory space> [shape: f32[1], index: 6, kind: input, shape index: {}]
  %s7 = inlined_call_operand.hbm [shape: f32[8,8], index: 7, kind: output, shape index: {}]
  %s8 = sld [smem:[#allocation0]]
  $region58: #{tpu_custom_call.1} parent=0
    _
  %s10 = ssub.s32 1, %s8
  %s11 = scalar_select 0, %s10, %s8
  %12 = sst [smem:[#allocation2]] %s6
  $region1: #{tpu_custom_call.1} parent=0
    #allocation3 [shape = 'u8[32768]{0}', space=vmem, size = 0x8000, scoped, tag = 'input window, operand 0, single buffered']
    #allocation4 [shape = 's32[1]{0}', space=sflag, size = 0x4, scoped, tag = 'scoped memory for tpu_custom_call.1']
    #allocation5 [shape = 's32[1]{0}', space=sflag, size = 0x4, scoped, tag = 'scoped memory for tpu_custom_call.1']
    #allocation6 [shape = 'u8[1048576]{0}', space=vmem, size = 0x100000, scoped, tag = 'input window, operand 1, single buffered']
    #allocation7 [shape = 's32[1]{0}', space=sflag, size = 0x4, scoped, tag = 'scoped memory for tpu_custom_call.1']
    #allocation8 [shape = 'u8[2048]{0}', space=vmem, size = 0x800, scoped, tag = 'input window, operand 2, single buffered']
    #allocation9 [shape = 'u8[262144]{0}', space=vmem, size = 0x40000, scoped, tag = 'input window, operand 3, single buffered']
    #allocation10 [shape = 's32[1]{0}', space=sflag, size = 0x4, scoped, tag = 'scoped memory for tpu_custom_call.1']
    #allocation11 [shape = 'u8[4096]{0}', space=vmem, size = 0x1000, scoped, tag = 'input window, operand 5, single buffered']
    #allocation12 [shape = 'u8[4096]{0}', space=vmem, size = 0x1000, scoped, tag = 'output window, operand 0, single buffered']
    %13 = vsyncpa [#allocation4], 0
    %14 = vsyncpa [#allocation7], 0
    %15 = vsyncpa [#allocation10], 0
    %16 = vsyncpa [#allocation5], 0
    // Predicated region
    $region2: #{tpu_custom_call.1} parent=1 // pred_check
      _
    $region3: #{tpu_custom_call.1} parent=1 // pred_check_branch
      %18 = sbr.rel (0) target = $region5
    $region4: #{tpu_custom_call.1} parent=1 // pred_region
      %20 = vsyncadd [#allocation4], 768
      %s21 = sshll.u32 %s0, 4
      %s22 = int_to_ptr.hbm [resolvable:$true] %s21
      %s23 = sshll.u32 [#allocation3], 4
      %s24 = int_to_ptr.vmem [resolvable:$true] %s23
      %29 = dma.hbm_to_vmem [thread:$0]  %s22, 256, %s24, [#allocation4], 256, 256, 16
    $region5: #{tpu_custom_call.1} parent=1 // pred_fallthru
      _
    // Predicated region
    $region6: #{tpu_custom_call.1} parent=1 // pred_check
      _
    $region7: #{tpu_custom_call.1} parent=1 // pred_check_branch
      %31 = sbr.rel (0) target = $region9
    $region8: #{tpu_custom_call.1} parent=1 // pred_region
      %33 = vsyncadd [#allocation7], 0
      %s34 = sshll.u32 %s1, 4
      %s35 = int_to_ptr.hbm [resolvable:$true] %s34
      %s36 = sshll.u32 [#allocation6], 4
      %s37 = int_to_ptr.vmem [resolvable:$true] %s36
      %42 = dma.hbm_to_vmem [thread:$0]  %s35, 32768, %s37, [#allocation7], 256, 256, 16
    $region9: #{tpu_custom_call.1} parent=1 // pred_fallthru
      _
    // Predicated region
    $region10: #{tpu_custom_call.1} parent=1 // pred_check
      _
    $region11: #{tpu_custom_call.1} parent=1 // pred_check_branch
      %44 = sbr.rel (0) target = $region13
    $region12: #{tpu_custom_call.1} parent=1 // pred_region
      %46 = vsyncadd [#allocation7], 0
      %s48 = sshll.u32 %s2, 4
      %s49 = int_to_ptr.hbm [resolvable:$true] %s48
      %s50 = sshll.u32 [#allocation8], 4
      %s51 = int_to_ptr.vmem [resolvable:$true] %s50
      %53 = dma.hbm_to_vmem [thread:$0]  %s49, 64, %s51, [#allocation7]
    $region13: #{tpu_custom_call.1} parent=1 // pred_fallthru
      _
    // Predicated region
    $region14: #{tpu_custom_call.1} parent=1 // pred_check
      _
    $region15: #{tpu_custom_call.1} parent=1 // pred_check_branch
      %55 = sbr.rel (0) target = $region17
    $region16: #{tpu_custom_call.1} parent=1 // pred_region
      %57 = vsyncadd [#allocation10], 0
      %s58 = sshll.u32 %s3, 4
      %s59 = int_to_ptr.hbm [resolvable:$true] %s58
      %s60 = sshll.u32 [#allocation9], 4
      %s61 = int_to_ptr.vmem [resolvable:$true] %s60
      %66 = dma.hbm_to_vmem [thread:$0]  %s59, 8192, %s61, [#allocation10], 128, 128, 8
    $region17: #{tpu_custom_call.1} parent=1 // pred_fallthru
      _
    // Predicated region
    $region18: #{tpu_custom_call.1} parent=1 // pred_check
      _
    $region19: #{tpu_custom_call.1} parent=1 // pred_check_branch
      %68 = sbr.rel (0) target = $region21
    $region20: #{tpu_custom_call.1} parent=1 // pred_region
      _
    $region21: #{tpu_custom_call.1} parent=1 // pred_fallthru
      _
    // Predicated region
    $region22: #{tpu_custom_call.1} parent=1 // pred_check
      _
    $region23: #{tpu_custom_call.1} parent=1 // pred_check_branch
      %70 = sbr.rel (0) target = $region25
    $region24: #{tpu_custom_call.1} parent=1 // pred_region
      %72 = vsyncadd [#allocation10], 0
      %s74 = sshll.u32 %s5, 4
      %s75 = int_to_ptr.hbm [resolvable:$true] %s74
      %s76 = sshll.u32 [#allocation11], 4
      %s77 = int_to_ptr.vmem [resolvable:$true] %s76
      %79 = dma.hbm_to_vmem [thread:$0]  %s75, 128, %s77, [#allocation10]
    $region25: #{tpu_custom_call.1} parent=1 // pred_fallthru
      _
    // Predicated region
    $region26: #{tpu_custom_call.1} parent=1 // pred_check
      _
    $region27: #{tpu_custom_call.1} parent=1 // pred_check_branch
      %81 = sbr.rel (0) target = $region29
    $region28: #{tpu_custom_call.1} parent=1 // pred_region
      _
    $region29: #{tpu_custom_call.1} parent=1 // pred_fallthru
      _
    // Predicated region
    $region30: #{tpu_custom_call.1} parent=1 // pred_check
      _
    $region31: #{tpu_custom_call.1} parent=1 // pred_check_branch
      %83 = sbr.rel (0) target = $region33
    $region32: #{tpu_custom_call.1} parent=1 // pred_region
      %85 = dma.done [#allocation4], 1024
    $region33: #{tpu_custom_call.1} parent=1 // pred_fallthru
      _
    // Predicated region
    $region34: #{tpu_custom_call.1} parent=1 // pred_check
      _
    $region35: #{tpu_custom_call.1} parent=1 // pred_check_branch
      %87 = sbr.rel (0) target = $region37
    $region36: #{tpu_custom_call.1} parent=1 // pred_region
      %89 = dma.done [#allocation7], 32768
    $region37: #{tpu_custom_call.1} parent=1 // pred_fallthru
      _
    // Predicated region
    $region38: #{tpu_custom_call.1} parent=1 // pred_check
      _
    $region39: #{tpu_custom_call.1} parent=1 // pred_check_branch
      %91 = sbr.rel (0) target = $region41
    $region40: #{tpu_custom_call.1} parent=1 // pred_region
      %93 = dma.done [#allocation7], 64
    $region41: #{tpu_custom_call.1} parent=1 // pred_fallthru
      _
    // Predicated region
    $region42: #{tpu_custom_call.1} parent=1 // pred_check
      _
    $region43: #{tpu_custom_call.1} parent=1 // pred_check_branch
      %95 = sbr.rel (0) target = $region45
    $region44: #{tpu_custom_call.1} parent=1 // pred_region
      %97 = dma.done [#allocation10], 8192
    $region45: #{tpu_custom_call.1} parent=1 // pred_fallthru
      _
    // Predicated region
    $region46: #{tpu_custom_call.1} parent=1 // pred_check
      _
    $region47: #{tpu_custom_call.1} parent=1 // pred_check_branch
      %99 = sbr.rel (0) target = $region49
    $region48: #{tpu_custom_call.1} parent=1 // pred_region
      %101 = dma.done [#allocation10], 128
    $region49: #{tpu_custom_call.1} parent=1 // pred_fallthru
      _
    %v103 = vld [vmem:[#allocation3] sm:$0xff]
    %v104 = vld [vmem:[#allocation3 + $0x8] sm:$0xff]
    %v105 = vld [vmem:[#allocation3 + $0x10] sm:$0xff]
    %v106 = vld [vmem:[#allocation3 + $0x18] sm:$0xff]
    %v107 = vld [vmem:[#allocation3 + $0x20] sm:$0xff]
    %v108 = vld [vmem:[#allocation3 + $0x28] sm:$0xff]
    %v109 = vld [vmem:[#allocation3 + $0x30] sm:$0xff]
    %v110 = vld [vmem:[#allocation3 + $0x38] sm:$0xff]
    %119 = vst [vmem:[#allocation1] ss:$4 sm:$0xff] %v103
    %s120 = scalar_lea.vmem [#allocation1], 1
    %121 = vst [vmem:[%s120] ss:$4 sm:$0xff] %v105
    %s122 = scalar_lea.vmem [#allocation1], 2
    %123 = vst [vmem:[%s122] ss:$4 sm:$0xff] %v107
    %s124 = scalar_lea.vmem [#allocation1], 3
    %125 = vst [vmem:[%s124] ss:$4 sm:$0xff] %v109
    %s126 = scalar_lea.vmem [#allocation1], 32
    %127 = vst [vmem:[%s126] ss:$4 sm:$0xff] %v104
    %s128 = scalar_lea.vmem [#allocation1], 33
    %129 = vst [vmem:[%s128] ss:$4 sm:$0xff] %v106
    %s130 = scalar_lea.vmem [#allocation1], 34
    %131 = vst [vmem:[%s130] ss:$4 sm:$0xff] %v108
    %s132 = scalar_lea.vmem [#allocation1], 35
    %133 = vst [vmem:[%s132] ss:$4 sm:$0xff] %v110
    %v134 = vld.sshfl [vmem:[#allocation1] sm:$0xff pattern:$0x73625140]
    %v135 = vld.sshfl [vmem:[#allocation1 + $0x8] sm:$0xff pattern:$0x73625140]
    %v136 = vld.sshfl [vmem:[#allocation1 + $0x10] sm:$0xff pattern:$0x73625140]
    %v137 = vld.sshfl [vmem:[#allocation1 + $0x18] sm:$0xff pattern:$0x73625140]
    %v138 = vld.sshfl [vmem:[#allocation1 + $0x20] sm:$0xff pattern:$0x73625140]
    %v139 = vld.sshfl [vmem:[#allocation1 + $0x28] sm:$0xff pattern:$0x73625140]
    %v140 = vld.sshfl [vmem:[#allocation1 + $0x30] sm:$0xff pattern:$0x73625140]
    %v141 = vld.sshfl [vmem:[#allocation1 + $0x38] sm:$0xff pattern:$0x73625140]
    %v150 = vpack.c.bf16 %v134, %v134
    %v151 = vpack.c.bf16 %v135, %v135
    %v152 = vpack.c.bf16 %v136, %v136
    %v153 = vpack.c.bf16 %v137, %v137
    %v154 = vpack.c.bf16 %v138, %v138
    %v155 = vpack.c.bf16 %v139, %v139
    %v156 = vpack.c.bf16 %v140, %v140
    %v157 = vpack.c.bf16 %v141, %v141
    %v158 = vld [vmem:[#allocation6] sm:$0xff]
    %v159 = vld [vmem:[#allocation6 + $0x8] sm:$0xff]
    %v160 = vld [vmem:[#allocation6 + $0x10] sm:$0xff]
    %v161 = vld [vmem:[#allocation6 + $0x18] sm:$0xff]
    %v162 = vld [vmem:[#allocation6 + $0x20] sm:$0xff]
    %v163 = vld [vmem:[#allocation6 + $0x28] sm:$0xff]
    %v164 = vld [vmem:[#allocation6 + $0x30] sm:$0xff]
    %v165 = vld [vmem:[#allocation6 + $0x38] sm:$0xff]
    %v166 = vld [vmem:[#allocation6 + $0x40] sm:$0xff]
    %v167 = vld [vmem:[#allocation6 + $0x48] sm:$0xff]
    %v168 = vld [vmem:[#allocation6 + $0x50] sm:$0xff]
    %v169 = vld [vmem:[#allocation6 + $0x58] sm:$0xff]
    %v170 = vld [vmem:[#allocation6 + $0x60] sm:$0xff]
    %v171 = vld [vmem:[#allocation6 + $0x68] sm:$0xff]
    %v172 = vld [vmem:[#allocation6 + $0x70] sm:$0xff]
    %v173 = vld [vmem:[#allocation6 + $0x78] sm:$0xff]
    %v174 = vld [vmem:[#allocation6 + $0x80] sm:$0xff]
    %v175 = vld [vmem:[#allocation6 + $0x88] sm:$0xff]
    %v176 = vld [vmem:[#allocation6 + $0x90] sm:$0xff]
    %v177 = vld [vmem:[#allocation6 + $0x98] sm:$0xff]
    %v178 = vld [vmem:[#allocation6 + $0xa0] sm:$0xff]
    %v179 = vld [vmem:[#allocation6 + $0xa8] sm:$0xff]
    %v180 = vld [vmem:[#allocation6 + $0xb0] sm:$0xff]
    %v181 = vld [vmem:[#allocation6 + $0xb8] sm:$0xff]
    %v182 = vld [vmem:[#allocation6 + $0xc0] sm:$0xff]
    %v183 = vld [vmem:[#allocation6 + $0xc8] sm:$0xff]
    %v184 = vld [vmem:[#allocation6 + $0xd0] sm:$0xff]
    %v185 = vld [vmem:[#allocation6 + $0xd8] sm:$0xff]
    %v186 = vld [vmem:[#allocation6 + $0xe0] sm:$0xff]
    %v187 = vld [vmem:[#allocation6 + $0xe8] sm:$0xff]
    %v188 = vld [vmem:[#allocation6 + $0xf0] sm:$0xff]
    %v189 = vld [vmem:[#allocation6 + $0xf8] sm:$0xff]
    %v190 = vld [vmem:[#allocation6 + $0x100] sm:$0xff]
    %v191 = vld [vmem:[#allocation6 + $0x108] sm:$0xff]
    %v192 = vld [vmem:[#allocation6 + $0x110] sm:$0xff]
    %v193 = vld [vmem:[#allocation6 + $0x118] sm:$0xff]
    %v194 = vld [vmem:[#allocation6 + $0x120] sm:$0xff]
    %v195 = vld [vmem:[#allocation6 + $0x128] sm:$0xff]
    %v196 = vld [vmem:[#allocation6 + $0x130] sm:$0xff]
    %v197 = vld [vmem:[#allocation6 + $0x138] sm:$0xff]
    %v198 = vld [vmem:[#allocation6 + $0x140] sm:$0xff]
    %v199 = vld [vmem:[#allocation6 + $0x148] sm:$0xff]
    %v200 = vld [vmem:[#allocation6 + $0x150] sm:$0xff]
    %v201 = vld [vmem:[#allocation6 + $0x158] sm:$0xff]
    %v202 = vld [vmem:[#allocation6 + $0x160] sm:$0xff]
    %v203 = vld [vmem:[#allocation6 + $0x168] sm:$0xff]
    %v204 = vld [vmem:[#allocation6 + $0x170] sm:$0xff]
    %v205 = vld [vmem:[#allocation6 + $0x178] sm:$0xff]
    %v206 = vld [vmem:[#allocation6 + $0x180] sm:$0xff]
    %v207 = vld [vmem:[#allocation6 + $0x188] sm:$0xff]
    %v208 = vld [vmem:[#allocation6 + $0x190] sm:$0xff]
    %v209 = vld [vmem:[#allocation6 + $0x198] sm:$0xff]
    %v210 = vld [vmem:[#allocation6 + $0x1a0] sm:$0xff]
    %v211 = vld [vmem:[#allocation6 + $0x1a8] sm:$0xff]
    %v212 = vld [vmem:[#allocation6 + $0x1b0] sm:$0xff]
    %v213 = vld [vmem:[#allocation6 + $0x1b8] sm:$0xff]
    %v214 = vld [vmem:[#allocation6 + $0x1c0] sm:$0xff]
    %v215 = vld [vmem:[#allocation6 + $0x1c8] sm:$0xff]
    %v216 = vld [vmem:[#allocation6 + $0x1d0] sm:$0xff]
    %v217 = vld [vmem:[#allocation6 + $0x1d8] sm:$0xff]
    %v218 = vld [vmem:[#allocation6 + $0x1e0] sm:$0xff]
    %v219 = vld [vmem:[#allocation6 + $0x1e8] sm:$0xff]
    %v220 = vld [vmem:[#allocation6 + $0x1f0] sm:$0xff]
    %v221 = vld [vmem:[#allocation6 + $0x1f8] sm:$0xff]
    %v222 = vld [vmem:[#allocation6 + $0x200] sm:$0xff]
    %v223 = vld [vmem:[#allocation6 + $0x208] sm:$0xff]
    %v224 = vld [vmem:[#allocation6 + $0x210] sm:$0xff]
    %v225 = vld [vmem:[#allocation6 + $0x218] sm:$0xff]
    %v226 = vld [vmem:[#allocation6 + $0x220] sm:$0xff]
    %v227 = vld [vmem:[#allocation6 + $0x228] sm:$0xff]
    %v228 = vld [vmem:[#allocation6 + $0x230] sm:$0xff]
    %v229 = vld [vmem:[#allocation6 + $0x238] sm:$0xff]
    %v230 = vld [vmem:[#allocation6 + $0x240] sm:$0xff]
    %v231 = vld [vmem:[#allocation6 + $0x248] sm:$0xff]
    %v232 = vld [vmem:[#allocation6 + $0x250] sm:$0xff]
    %v233 = vld [vmem:[#allocation6 + $0x258] sm:$0xff]
    %v234 = vld [vmem:[#allocation6 + $0x260] sm:$0xff]
    %v235 = vld [vmem:[#allocation6 + $0x268] sm:$0xff]
    %v236 = vld [vmem:[#allocation6 + $0x270] sm:$0xff]
    %v237 = vld [vmem:[#allocation6 + $0x278] sm:$0xff]
    %v238 = vld [vmem:[#allocation6 + $0x280] sm:$0xff]
    %v239 = vld [vmem:[#allocation6 + $0x288] sm:$0xff]
    %v240 = vld [vmem:[#allocation6 + $0x290] sm:$0xff]
    %v241 = vld [vmem:[#allocation6 + $0x298] sm:$0xff]
    %v242 = vld [vmem:[#allocation6 + $0x2a0] sm:$0xff]
    %v243 = vld [vmem:[#allocation6 + $0x2a8] sm:$0xff]
    %v244 = vld [vmem:[#allocation6 + $0x2b0] sm:$0xff]
    %v245 = vld [vmem:[#allocation6 + $0x2b8] sm:$0xff]
    %v246 = vld [vmem:[#allocation6 + $0x2c0] sm:$0xff]
    %v247 = vld [vmem:[#allocation6 + $0x2c8] sm:$0xff]
    %v248 = vld [vmem:[#allocation6 + $0x2d0] sm:$0xff]
    %v249 = vld [vmem:[#allocation6 + $0x2d8] sm:$0xff]
    %v250 = vld [vmem:[#allocation6 + $0x2e0] sm:$0xff]
    %v251 = vld [vmem:[#allocation6 + $0x2e8] sm:$0xff]
    %v252 = vld [vmem:[#allocation6 + $0x2f0] sm:$0xff]
    %v253 = vld [vmem:[#allocation6 + $0x2f8] sm:$0xff]
    %v254 = vld [vmem:[#allocation6 + $0x300] sm:$0xff]
    %v255 = vld [vmem:[#allocation6 + $0x308] sm:$0xff]
    %v256 = vld [vmem:[#allocation6 + $0x310] sm:$0xff]
    %v257 = vld [vmem:[#allocation6 + $0x318] sm:$0xff]
    %v258 = vld [vmem:[#allocation6 + $0x320] sm:$0xff]
    %v259 = vld [vmem:[#allocation6 + $0x328] sm:$0xff]
    %v260 = vld [vmem:[#allocation6 + $0x330] sm:$0xff]
    %v261 = vld [vmem:[#allocation6 + $0x338] sm:$0xff]
    %v262 = vld [vmem:[#allocation6 + $0x340] sm:$0xff]
    %v263 = vld [vmem:[#allocation6 + $0x348] sm:$0xff]
    %v264 = vld [vmem:[#allocation6 + $0x350] sm:$0xff]
    %v265 = vld [vmem:[#allocation6 + $0x358] sm:$0xff]
    %v266 = vld [vmem:[#allocation6 + $0x360] sm:$0xff]
    %v267 = vld [vmem:[#allocation6 + $0x368] sm:$0xff]
    %v268 = vld [vmem:[#allocation6 + $0x370] sm:$0xff]
    %v269 = vld [vmem:[#allocation6 + $0x378] sm:$0xff]
    %v270 = vld [vmem:[#allocation6 + $0x380] sm:$0xff]
    %v271 = vld [vmem:[#allocation6 + $0x388] sm:$0xff]
    %v272 = vld [vmem:[#allocation6 + $0x390] sm:$0xff]
    %v273 = vld [vmem:[#allocation6 + $0x398] sm:$0xff]
    %v274 = vld [vmem:[#allocation6 + $0x3a0] sm:$0xff]
    %v275 = vld [vmem:[#allocation6 + $0x3a8] sm:$0xff]
    %v276 = vld [vmem:[#allocation6 + $0x3b0] sm:$0xff]
    %v277 = vld [vmem:[#allocation6 + $0x3b8] sm:$0xff]
    %v278 = vld [vmem:[#allocation6 + $0x3c0] sm:$0xff]
    %v279 = vld [vmem:[#allocation6 + $0x3c8] sm:$0xff]
    %v280 = vld [vmem:[#allocation6 + $0x3d0] sm:$0xff]
    %v281 = vld [vmem:[#allocation6 + $0x3d8] sm:$0xff]
    %v282 = vld [vmem:[#allocation6 + $0x3e0] sm:$0xff]
    %v283 = vld [vmem:[#allocation6 + $0x3e8] sm:$0xff]
    %v284 = vld [vmem:[#allocation6 + $0x3f0] sm:$0xff]
    %v285 = vld [vmem:[#allocation6 + $0x3f8] sm:$0xff]
    %v286 = vld [vmem:[#allocation6 + $0x400] sm:$0xff]
    %v287 = vld [vmem:[#allocation6 + $0x408] sm:$0xff]
    %v288 = vld [vmem:[#allocation6 + $0x410] sm:$0xff]
    %v289 = vld [vmem:[#allocation6 + $0x418] sm:$0xff]
    %v290 = vld [vmem:[#allocation6 + $0x420] sm:$0xff]
    %v291 = vld [vmem:[#allocation6 + $0x428] sm:$0xff]
    %v292 = vld [vmem:[#allocation6 + $0x430] sm:$0xff]
    %v293 = vld [vmem:[#allocation6 + $0x438] sm:$0xff]
    %v294 = vld [vmem:[#allocation6 + $0x440] sm:$0xff]
    %v295 = vld [vmem:[#allocation6 + $0x448] sm:$0xff]
    %v296 = vld [vmem:[#allocation6 + $0x450] sm:$0xff]
    %v297 = vld [vmem:[#allocation6 + $0x458] sm:$0xff]
    %v298 = vld [vmem:[#allocation6 + $0x460] sm:$0xff]
    %v299 = vld [vmem:[#allocation6 + $0x468] sm:$0xff]
    %v300 = vld [vmem:[#allocation6 + $0x470] sm:$0xff]
    %v301 = vld [vmem:[#allocation6 + $0x478] sm:$0xff]
    %v302 = vld [vmem:[#allocation6 + $0x480] sm:$0xff]
    %v303 = vld [vmem:[#allocation6 + $0x488] sm:$0xff]
    %v304 = vld [vmem:[#allocation6 + $0x490] sm:$0xff]
    %v305 = vld [vmem:[#allocation6 + $0x498] sm:$0xff]
    %v306 = vld [vmem:[#allocation6 + $0x4a0] sm:$0xff]
    %v307 = vld [vmem:[#allocation6 + $0x4a8] sm:$0xff]
    %v308 = vld [vmem:[#allocation6 + $0x4b0] sm:$0xff]
    %v309 = vld [vmem:[#allocation6 + $0x4b8] sm:$0xff]
    %v310 = vld [vmem:[#allocation6 + $0x4c0] sm:$0xff]
    %v311 = vld [vmem:[#allocation6 + $0x4c8] sm:$0xff]
    %v312 = vld [vmem:[#allocation6 + $0x4d0] sm:$0xff]
    %v313 = vld [vmem:[#allocation6 + $0x4d8] sm:$0xff]
    %v314 = vld [vmem:[#allocation6 + $0x4e0] sm:$0xff]
    %v315 = vld [vmem:[#allocation6 + $0x4e8] sm:$0xff]
    %v316 = vld [vmem:[#allocation6 + $0x4f0] sm:$0xff]
    %v317 = vld [vmem:[#allocation6 + $0x4f8] sm:$0xff]
    %v318 = vld [vmem:[#allocation6 + $0x500] sm:$0xff]
    %v319 = vld [vmem:[#allocation6 + $0x508] sm:$0xff]
    %v320 = vld [vmem:[#allocation6 + $0x510] sm:$0xff]
    %v321 = vld [vmem:[#allocation6 + $0x518] sm:$0xff]
    %v322 = vld [vmem:[#allocation6 + $0x520] sm:$0xff]
    %v323 = vld [vmem:[#allocation6 + $0x528] sm:$0xff]
    %v324 = vld [vmem:[#allocation6 + $0x530] sm:$0xff]
    %v325 = vld [vmem:[#allocation6 + $0x538] sm:$0xff]
    %v326 = vld [vmem:[#allocation6 + $0x540] sm:$0xff]
    %v327 = vld [vmem:[#allocation6 + $0x548] sm:$0xff]
    %v328 = vld [vmem:[#allocation6 + $0x550] sm:$0xff]
    %v329 = vld [vmem:[#allocation6 + $0x558] sm:$0xff]
    %v330 = vld [vmem:[#allocation6 + $0x560] sm:$0xff]
    %v331 = vld [vmem:[#allocation6 + $0x568] sm:$0xff]
    %v332 = vld [vmem:[#allocation6 + $0x570] sm:$0xff]
    %v333 = vld [vmem:[#allocation6 + $0x578] sm:$0xff]
    %v334 = vld [vmem:[#allocation6 + $0x580] sm:$0xff]
    %v335 = vld [vmem:[#allocation6 + $0x588] sm:$0xff]
    %v336 = vld [vmem:[#allocation6 + $0x590] sm:$0xff]
    %v337 = vld [vmem:[#allocation6 + $0x598] sm:$0xff]
    %v338 = vld [vmem:[#allocation6 + $0x5a0] sm:$0xff]
    %v339 = vld [vmem:[#allocation6 + $0x5a8] sm:$0xff]
    %v340 = vld [vmem:[#allocation6 + $0x5b0] sm:$0xff]
    %v341 = vld [vmem:[#allocation6 + $0x5b8] sm:$0xff]
    %v342 = vld [vmem:[#allocation6 + $0x5c0] sm:$0xff]
    %v343 = vld [vmem:[#allocation6 + $0x5c8] sm:$0xff]
    %v344 = vld [vmem:[#allocation6 + $0x5d0] sm:$0xff]
    %v345 = vld [vmem:[#allocation6 + $0x5d8] sm:$0xff]
    %v346 = vld [vmem:[#allocation6 + $0x5e0] sm:$0xff]
    %v347 = vld [vmem:[#allocation6 + $0x5e8] sm:$0xff]
    %v348 = vld [vmem:[#allocation6 + $0x5f0] sm:$0xff]
    %v349 = vld [vmem:[#allocation6 + $0x5f8] sm:$0xff]
    %v350 = vld [vmem:[#allocation6 + $0x600] sm:$0xff]
    %v351 = vld [vmem:[#allocation6 + $0x608] sm:$0xff]
    %v352 = vld [vmem:[#allocation6 + $0x610] sm:$0xff]
    %v353 = vld [vmem:[#allocation6 + $0x618] sm:$0xff]
    %v354 = vld [vmem:[#allocation6 + $0x620] sm:$0xff]
    %v355 = vld [vmem:[#allocation6 + $0x628] sm:$0xff]
    %v356 = vld [vmem:[#allocation6 + $0x630] sm:$0xff]
    %v357 = vld [vmem:[#allocation6 + $0x638] sm:$0xff]
    %v358 = vld [vmem:[#allocation6 + $0x640] sm:$0xff]
    %v359 = vld [vmem:[#allocation6 + $0x648] sm:$0xff]
    %v360 = vld [vmem:[#allocation6 + $0x650] sm:$0xff]
    %v361 = vld [vmem:[#allocation6 + $0x658] sm:$0xff]
    %v362 = vld [vmem:[#allocation6 + $0x660] sm:$0xff]
    %v363 = vld [vmem:[#allocation6 + $0x668] sm:$0xff]
    %v364 = vld [vmem:[#allocation6 + $0x670] sm:$0xff]
    %v365 = vld [vmem:[#allocation6 + $0x678] sm:$0xff]
    %v366 = vld [vmem:[#allocation6 + $0x680] sm:$0xff]
    %v367 = vld [vmem:[#allocation6 + $0x688] sm:$0xff]
    %v368 = vld [vmem:[#allocation6 + $0x690] sm:$0xff]
    %v369 = vld [vmem:[#allocation6 + $0x698] sm:$0xff]
    %v370 = vld [vmem:[#allocation6 + $0x6a0] sm:$0xff]
    %v371 = vld [vmem:[#allocation6 + $0x6a8] sm:$0xff]
    %v372 = vld [vmem:[#allocation6 + $0x6b0] sm:$0xff]
    %v373 = vld [vmem:[#allocation6 + $0x6b8] sm:$0xff]
    %v374 = vld [vmem:[#allocation6 + $0x6c0] sm:$0xff]
    %v375 = vld [vmem:[#allocation6 + $0x6c8] sm:$0xff]
    %v376 = vld [vmem:[#allocation6 + $0x6d0] sm:$0xff]
    %v377 = vld [vmem:[#allocation6 + $0x6d8] sm:$0xff]
    %v378 = vld [vmem:[#allocation6 + $0x6e0] sm:$0xff]
    %v379 = vld [vmem:[#allocation6 + $0x6e8] sm:$0xff]
    %v380 = vld [vmem:[#allocation6 + $0x6f0] sm:$0xff]
    %v381 = vld [vmem:[#allocation6 + $0x6f8] sm:$0xff]
    %v382 = vld [vmem:[#allocation6 + $0x700] sm:$0xff]
    %v383 = vld [vmem:[#allocation6 + $0x708] sm:$0xff]
    %v384 = vld [vmem:[#allocation6 + $0x710] sm:$0xff]
    %v385 = vld [vmem:[#allocation6 + $0x718] sm:$0xff]
    %v386 = vld [vmem:[#allocation6 + $0x720] sm:$0xff]
    %v387 = vld [vmem:[#allocation6 + $0x728] sm:$0xff]
    %v388 = vld [vmem:[#allocation6 + $0x730] sm:$0xff]
    %v389 = vld [vmem:[#allocation6 + $0x738] sm:$0xff]
    %v390 = vld [vmem:[#allocation6 + $0x740] sm:$0xff]
    %v391 = vld [vmem:[#allocation6 + $0x748] sm:$0xff]
    %v392 = vld [vmem:[#allocation6 + $0x750] sm:$0xff]
    %v393 = vld [vmem:[#allocation6 + $0x758] sm:$0xff]
    %v394 = vld [vmem:[#allocation6 + $0x760] sm:$0xff]
    %v395 = vld [vmem:[#allocation6 + $0x768] sm:$0xff]
    %v396 = vld [vmem:[#allocation6 + $0x770] sm:$0xff]
    %v397 = vld [vmem:[#allocation6 + $0x778] sm:$0xff]
    %v398 = vld [vmem:[#allocation6 + $0x780] sm:$0xff]
    %v399 = vld [vmem:[#allocation6 + $0x788] sm:$0xff]
    %v400 = vld [vmem:[#allocation6 + $0x790] sm:$0xff]
    %v401 = vld [vmem:[#allocation6 + $0x798] sm:$0xff]
    %v402 = vld [vmem:[#allocation6 + $0x7a0] sm:$0xff]
    %v403 = vld [vmem:[#allocation6 + $0x7a8] sm:$0xff]
    %v404 = vld [vmem:[#allocation6 + $0x7b0] sm:$0xff]
    %v405 = vld [vmem:[#allocation6 + $0x7b8] sm:$0xff]
    %v406 = vld [vmem:[#allocation6 + $0x7c0] sm:$0xff]
    %v407 = vld [vmem:[#allocation6 + $0x7c8] sm:$0xff]
    %v408 = vld [vmem:[#allocation6 + $0x7d0] sm:$0xff]
    %v409 = vld [vmem:[#allocation6 + $0x7d8] sm:$0xff]
    %v410 = vld [vmem:[#allocation6 + $0x7e0] sm:$0xff]
    %v411 = vld [vmem:[#allocation6 + $0x7e8] sm:$0xff]
    %v412 = vld [vmem:[#allocation6 + $0x7f0] sm:$0xff]
    %v413 = vld [vmem:[#allocation6 + $0x7f8] sm:$0xff]
    %v414 = vld [vmem:[#allocation8] sm:$0xf]
    %v416 = vperm.slane %v414, 0
    %v417 = vperm.slane %v414, 1
    %v418 = vperm.slane %v414, 2
    %v419 = vperm.slane %v414, 3
    %v680 = vunpack.c.l.b16 %v158
    %v681 = vunpack.c.h.b16 %v158
    %v682 = vunpack.c.l.b16 %v159
    %v683 = vunpack.c.h.b16 %v159
    %v684 = vunpack.c.l.b16 %v160
    %v685 = vunpack.c.h.b16 %v160
    %v686 = vunpack.c.l.b16 %v161
    %v687 = vunpack.c.h.b16 %v161
    %v688 = vunpack.c.l.b16 %v162
    %v689 = vunpack.c.h.b16 %v162
    %v690 = vunpack.c.l.b16 %v163
    %v691 = vunpack.c.h.b16 %v163
    %v692 = vunpack.c.l.b16 %v164
    %v693 = vunpack.c.h.b16 %v164
    %v694 = vunpack.c.l.b16 %v165
    %v695 = vunpack.c.h.b16 %v165
    %v696 = vunpack.c.l.b16 %v166
    %v697 = vunpack.c.h.b16 %v166
    %v698 = vunpack.c.l.b16 %v167
    %v699 = vunpack.c.h.b16 %v167
    %v700 = vunpack.c.l.b16 %v168
    %v701 = vunpack.c.h.b16 %v168
    %v702 = vunpack.c.l.b16 %v169
    %v703 = vunpack.c.h.b16 %v169
    %v704 = vunpack.c.l.b16 %v170
    %v705 = vunpack.c.h.b16 %v170
    %v706 = vunpack.c.l.b16 %v171
    %v707 = vunpack.c.h.b16 %v171
    %v708 = vunpack.c.l.b16 %v172
    %v709 = vunpack.c.h.b16 %v172
    %v710 = vunpack.c.l.b16 %v173
    %v711 = vunpack.c.h.b16 %v173
    %v712 = vunpack.c.l.b16 %v174
    %v713 = vunpack.c.h.b16 %v174
    %v714 = vunpack.c.l.b16 %v175
    %v715 = vunpack.c.h.b16 %v175
    %v716 = vunpack.c.l.b16 %v176
    %v717 = vunpack.c.h.b16 %v176
    %v718 = vunpack.c.l.b16 %v177
    %v719 = vunpack.c.h.b16 %v177
    %v720 = vunpack.c.l.b16 %v178
    %v721 = vunpack.c.h.b16 %v178
    %v722 = vunpack.c.l.b16 %v179
    %v723 = vunpack.c.h.b16 %v179
    %v724 = vunpack.c.l.b16 %v180
    %v725 = vunpack.c.h.b16 %v180
    %v726 = vunpack.c.l.b16 %v181
    %v727 = vunpack.c.h.b16 %v181
    %v728 = vunpack.c.l.b16 %v182
    %v729 = vunpack.c.h.b16 %v182
    %v730 = vunpack.c.l.b16 %v183
    %v731 = vunpack.c.h.b16 %v183
    %v732 = vunpack.c.l.b16 %v184
    %v733 = vunpack.c.h.b16 %v184
    %v734 = vunpack.c.l.b16 %v185
    %v735 = vunpack.c.h.b16 %v185
    %v736 = vunpack.c.l.b16 %v186
    %v737 = vunpack.c.h.b16 %v186
    %v738 = vunpack.c.l.b16 %v187
    %v739 = vunpack.c.h.b16 %v187
    %v740 = vunpack.c.l.b16 %v188
    %v741 = vunpack.c.h.b16 %v188
    %v742 = vunpack.c.l.b16 %v189
    %v743 = vunpack.c.h.b16 %v189
    %v744 = vunpack.c.l.b16 %v190
    %v745 = vunpack.c.h.b16 %v190
    %v746 = vunpack.c.l.b16 %v191
    %v747 = vunpack.c.h.b16 %v191
    %v748 = vunpack.c.l.b16 %v192
    %v749 = vunpack.c.h.b16 %v192
    %v750 = vunpack.c.l.b16 %v193
    %v751 = vunpack.c.h.b16 %v193
    %v752 = vunpack.c.l.b16 %v194
    %v753 = vunpack.c.h.b16 %v194
    %v754 = vunpack.c.l.b16 %v195
    %v755 = vunpack.c.h.b16 %v195
    %v756 = vunpack.c.l.b16 %v196
    %v757 = vunpack.c.h.b16 %v196
    %v758 = vunpack.c.l.b16 %v197
    %v759 = vunpack.c.h.b16 %v197
    %v760 = vunpack.c.l.b16 %v198
    %v761 = vunpack.c.h.b16 %v198
    %v762 = vunpack.c.l.b16 %v199
    %v763 = vunpack.c.h.b16 %v199
    %v764 = vunpack.c.l.b16 %v200
    %v765 = vunpack.c.h.b16 %v200
    %v766 = vunpack.c.l.b16 %v201
    %v767 = vunpack.c.h.b16 %v201
    %v768 = vunpack.c.l.b16 %v202
    %v769 = vunpack.c.h.b16 %v202
    %v770 = vunpack.c.l.b16 %v203
    %v771 = vunpack.c.h.b16 %v203
    %v772 = vunpack.c.l.b16 %v204
    %v773 = vunpack.c.h.b16 %v204
    %v774 = vunpack.c.l.b16 %v205
    %v775 = vunpack.c.h.b16 %v205
    %v776 = vunpack.c.l.b16 %v206
    %v777 = vunpack.c.h.b16 %v206
    %v778 = vunpack.c.l.b16 %v207
    %v779 = vunpack.c.h.b16 %v207
    %v780 = vunpack.c.l.b16 %v208
    %v781 = vunpack.c.h.b16 %v208
    %v782 = vunpack.c.l.b16 %v209
    %v783 = vunpack.c.h.b16 %v209
    %v784 = vunpack.c.l.b16 %v210
    %v785 = vunpack.c.h.b16 %v210
    %v786 = vunpack.c.l.b16 %v211
    %v787 = vunpack.c.h.b16 %v211
    %v788 = vunpack.c.l.b16 %v212
    %v789 = vunpack.c.h.b16 %v212
    %v790 = vunpack.c.l.b16 %v213
    %v791 = vunpack.c.h.b16 %v213
    %v792 = vunpack.c.l.b16 %v214
    %v793 = vunpack.c.h.b16 %v214
    %v794 = vunpack.c.l.b16 %v215
    %v795 = vunpack.c.h.b16 %v215
    %v796 = vunpack.c.l.b16 %v216
    %v797 = vunpack.c.h.b16 %v216
    %v798 = vunpack.c.l.b16 %v217
    %v799 = vunpack.c.h.b16 %v217
    %v800 = vunpack.c.l.b16 %v218
    %v801 = vunpack.c.h.b16 %v218
    %v802 = vunpack.c.l.b16 %v219
    %v803 = vunpack.c.h.b16 %v219
    %v804 = vunpack.c.l.b16 %v220
    %v805 = vunpack.c.h.b16 %v220
    %v806 = vunpack.c.l.b16 %v221
    %v807 = vunpack.c.h.b16 %v221
    %v808 = vunpack.c.l.b16 %v222
    %v809 = vunpack.c.h.b16 %v222
    %v810 = vunpack.c.l.b16 %v223
    %v811 = vunpack.c.h.b16 %v223
    %v812 = vunpack.c.l.b16 %v224
    %v813 = vunpack.c.h.b16 %v224
    %v814 = vunpack.c.l.b16 %v225
    %v815 = vunpack.c.h.b16 %v225
    %v816 = vunpack.c.l.b16 %v226
    %v817 = vunpack.c.h.b16 %v226
    %v818 = vunpack.c.l.b16 %v227
    %v819 = vunpack.c.h.b16 %v227
    %v820 = vunpack.c.l.b16 %v228
    %v821 = vunpack.c.h.b16 %v228
    %v822 = vunpack.c.l.b16 %v229
    %v823 = vunpack.c.h.b16 %v229
    %v824 = vunpack.c.l.b16 %v230
    %v825 = vunpack.c.h.b16 %v230
    %v826 = vunpack.c.l.b16 %v231
    %v827 = vunpack.c.h.b16 %v231
    %v828 = vunpack.c.l.b16 %v232
    %v829 = vunpack.c.h.b16 %v232
    %v830 = vunpack.c.l.b16 %v233
    %v831 = vunpack.c.h.b16 %v233
    %v832 = vunpack.c.l.b16 %v234
    %v833 = vunpack.c.h.b16 %v234
    %v834 = vunpack.c.l.b16 %v235
    %v835 = vunpack.c.h.b16 %v235
    %v836 = vunpack.c.l.b16 %v236
    %v837 = vunpack.c.h.b16 %v236
    %v838 = vunpack.c.l.b16 %v237
    %v839 = vunpack.c.h.b16 %v237
    %v840 = vunpack.c.l.b16 %v238
    %v841 = vunpack.c.h.b16 %v238
    %v842 = vunpack.c.l.b16 %v239
    %v843 = vunpack.c.h.b16 %v239
    %v844 = vunpack.c.l.b16 %v240
    %v845 = vunpack.c.h.b16 %v240
    %v846 = vunpack.c.l.b16 %v241
    %v847 = vunpack.c.h.b16 %v241
    %v848 = vunpack.c.l.b16 %v242
    %v849 = vunpack.c.h.b16 %v242
    %v850 = vunpack.c.l.b16 %v243
    %v851 = vunpack.c.h.b16 %v243
    %v852 = vunpack.c.l.b16 %v244
    %v853 = vunpack.c.h.b16 %v244
    %v854 = vunpack.c.l.b16 %v245
    %v855 = vunpack.c.h.b16 %v245
    %v856 = vunpack.c.l.b16 %v246
    %v857 = vunpack.c.h.b16 %v246
    %v858 = vunpack.c.l.b16 %v247
    %v859 = vunpack.c.h.b16 %v247
    %v860 = vunpack.c.l.b16 %v248
    %v861 = vunpack.c.h.b16 %v248
    %v862 = vunpack.c.l.b16 %v249
    %v863 = vunpack.c.h.b16 %v249
    %v864 = vunpack.c.l.b16 %v250
    %v865 = vunpack.c.h.b16 %v250
    %v866 = vunpack.c.l.b16 %v251
    %v867 = vunpack.c.h.b16 %v251
    %v868 = vunpack.c.l.b16 %v252
    %v869 = vunpack.c.h.b16 %v252
    %v870 = vunpack.c.l.b16 %v253
    %v871 = vunpack.c.h.b16 %v253
    %v872 = vunpack.c.l.b16 %v254
    %v873 = vunpack.c.h.b16 %v254
    %v874 = vunpack.c.l.b16 %v255
    %v875 = vunpack.c.h.b16 %v255
    %v876 = vunpack.c.l.b16 %v256
    %v877 = vunpack.c.h.b16 %v256
    %v878 = vunpack.c.l.b16 %v257
    %v879 = vunpack.c.h.b16 %v257
    %v880 = vunpack.c.l.b16 %v258
    %v881 = vunpack.c.h.b16 %v258
    %v882 = vunpack.c.l.b16 %v259
    %v883 = vunpack.c.h.b16 %v259
    %v884 = vunpack.c.l.b16 %v260
    %v885 = vunpack.c.h.b16 %v260
    %v886 = vunpack.c.l.b16 %v261
    %v887 = vunpack.c.h.b16 %v261
    %v888 = vunpack.c.l.b16 %v262
    %v889 = vunpack.c.h.b16 %v262
    %v890 = vunpack.c.l.b16 %v263
    %v891 = vunpack.c.h.b16 %v263
    %v892 = vunpack.c.l.b16 %v264
    %v893 = vunpack.c.h.b16 %v264
    %v894 = vunpack.c.l.b16 %v265
    %v895 = vunpack.c.h.b16 %v265
    %v896 = vunpack.c.l.b16 %v266
    %v897 = vunpack.c.h.b16 %v266
    %v898 = vunpack.c.l.b16 %v267
    %v899 = vunpack.c.h.b16 %v267
    %v900 = vunpack.c.l.b16 %v268
    %v901 = vunpack.c.h.b16 %v268
    %v902 = vunpack.c.l.b16 %v269
    %v903 = vunpack.c.h.b16 %v269
    %v904 = vunpack.c.l.b16 %v270
    %v905 = vunpack.c.h.b16 %v270
    %v906 = vunpack.c.l.b16 %v271
    %v907 = vunpack.c.h.b16 %v271
    %v908 = vunpack.c.l.b16 %v272
    %v909 = vunpack.c.h.b16 %v272
    %v910 = vunpack.c.l.b16 %v273
    %v911 = vunpack.c.h.b16 %v273
    %v912 = vunpack.c.l.b16 %v274
    %v913 = vunpack.c.h.b16 %v274
    %v914 = vunpack.c.l.b16 %v275
    %v915 = vunpack.c.h.b16 %v275
    %v916 = vunpack.c.l.b16 %v276
    %v917 = vunpack.c.h.b16 %v276
    %v918 = vunpack.c.l.b16 %v277
    %v919 = vunpack.c.h.b16 %v277
    %v920 = vunpack.c.l.b16 %v278
    %v921 = vunpack.c.h.b16 %v278
    %v922 = vunpack.c.l.b16 %v279
    %v923 = vunpack.c.h.b16 %v279
    %v924 = vunpack.c.l.b16 %v280
    %v925 = vunpack.c.h.b16 %v280
    %v926 = vunpack.c.l.b16 %v281
    %v927 = vunpack.c.h.b16 %v281
    %v928 = vunpack.c.l.b16 %v282
    %v929 = vunpack.c.h.b16 %v282
    %v930 = vunpack.c.l.b16 %v283
    %v931 = vunpack.c.h.b16 %v283
    %v932 = vunpack.c.l.b16 %v284
    %v933 = vunpack.c.h.b16 %v284
    %v934 = vunpack.c.l.b16 %v285
    %v935 = vunpack.c.h.b16 %v285
    %v936 = vunpack.c.l.b16 %v286
    %v937 = vunpack.c.h.b16 %v286
    %v938 = vunpack.c.l.b16 %v287
    %v939 = vunpack.c.h.b16 %v287
    %v940 = vunpack.c.l.b16 %v288
    %v941 = vunpack.c.h.b16 %v288
    %v942 = vunpack.c.l.b16 %v289
    %v943 = vunpack.c.h.b16 %v289
    %v944 = vunpack.c.l.b16 %v290
    %v945 = vunpack.c.h.b16 %v290
    %v946 = vunpack.c.l.b16 %v291
    %v947 = vunpack.c.h.b16 %v291
    %v948 = vunpack.c.l.b16 %v292
    %v949 = vunpack.c.h.b16 %v292
    %v950 = vunpack.c.l.b16 %v293
    %v951 = vunpack.c.h.b16 %v293
    %v952 = vunpack.c.l.b16 %v294
    %v953 = vunpack.c.h.b16 %v294
    %v954 = vunpack.c.l.b16 %v295
    %v955 = vunpack.c.h.b16 %v295
    %v956 = vunpack.c.l.b16 %v296
    %v957 = vunpack.c.h.b16 %v296
    %v958 = vunpack.c.l.b16 %v297
    %v959 = vunpack.c.h.b16 %v297
    %v960 = vunpack.c.l.b16 %v298
    %v961 = vunpack.c.h.b16 %v298
    %v962 = vunpack.c.l.b16 %v299
    %v963 = vunpack.c.h.b16 %v299
    %v964 = vunpack.c.l.b16 %v300
    %v965 = vunpack.c.h.b16 %v300
    %v966 = vunpack.c.l.b16 %v301
    %v967 = vunpack.c.h.b16 %v301
    %v968 = vunpack.c.l.b16 %v302
    %v969 = vunpack.c.h.b16 %v302
    %v970 = vunpack.c.l.b16 %v303
    %v971 = vunpack.c.h.b16 %v303
    %v972 = vunpack.c.l.b16 %v304
    %v973 = vunpack.c.h.b16 %v304
    %v974 = vunpack.c.l.b16 %v305
    %v975 = vunpack.c.h.b16 %v305
    %v976 = vunpack.c.l.b16 %v306
    %v977 = vunpack.c.h.b16 %v306
    %v978 = vunpack.c.l.b16 %v307
    %v979 = vunpack.c.h.b16 %v307
    %v980 = vunpack.c.l.b16 %v308
    %v981 = vunpack.c.h.b16 %v308
    %v982 = vunpack.c.l.b16 %v309
    %v983 = vunpack.c.h.b16 %v309
    %v984 = vunpack.c.l.b16 %v310
    %v985 = vunpack.c.h.b16 %v310
    %v986 = vunpack.c.l.b16 %v311
    %v987 = vunpack.c.h.b16 %v311
    %v988 = vunpack.c.l.b16 %v312
    %v989 = vunpack.c.h.b16 %v312
    %v990 = vunpack.c.l.b16 %v313
    %v991 = vunpack.c.h.b16 %v313
    %v992 = vunpack.c.l.b16 %v314
    %v993 = vunpack.c.h.b16 %v314
    %v994 = vunpack.c.l.b16 %v315
    %v995 = vunpack.c.h.b16 %v315
    %v996 = vunpack.c.l.b16 %v316
    %v997 = vunpack.c.h.b16 %v316
    %v998 = vunpack.c.l.b16 %v317
    %v999 = vunpack.c.h.b16 %v317
    %v1000 = vunpack.c.l.b16 %v318
    %v1001 = vunpack.c.h.b16 %v318
    %v1002 = vunpack.c.l.b16 %v319
    %v1003 = vunpack.c.h.b16 %v319
    %v1004 = vunpack.c.l.b16 %v320
    %v1005 = vunpack.c.h.b16 %v320
    %v1006 = vunpack.c.l.b16 %v321
    %v1007 = vunpack.c.h.b16 %v321
    %v1008 = vunpack.c.l.b16 %v322
    %v1009 = vunpack.c.h.b16 %v322
    %v1010 = vunpack.c.l.b16 %v323
    %v1011 = vunpack.c.h.b16 %v323
    %v1012 = vunpack.c.l.b16 %v324
    %v1013 = vunpack.c.h.b16 %v324
    %v1014 = vunpack.c.l.b16 %v325
    %v1015 = vunpack.c.h.b16 %v325
    %v1016 = vunpack.c.l.b16 %v326
    %v1017 = vunpack.c.h.b16 %v326
    %v1018 = vunpack.c.l.b16 %v327
    %v1019 = vunpack.c.h.b16 %v327
    %v1020 = vunpack.c.l.b16 %v328
    %v1021 = vunpack.c.h.b16 %v328
    %v1022 = vunpack.c.l.b16 %v329
    %v1023 = vunpack.c.h.b16 %v329
    %v1024 = vunpack.c.l.b16 %v330
    %v1025 = vunpack.c.h.b16 %v330
    %v1026 = vunpack.c.l.b16 %v331
    %v1027 = vunpack.c.h.b16 %v331
    %v1028 = vunpack.c.l.b16 %v332
    %v1029 = vunpack.c.h.b16 %v332
    %v1030 = vunpack.c.l.b16 %v333
    %v1031 = vunpack.c.h.b16 %v333
    %v1032 = vunpack.c.l.b16 %v334
    %v1033 = vunpack.c.h.b16 %v334
    %v1034 = vunpack.c.l.b16 %v335
    %v1035 = vunpack.c.h.b16 %v335
    %v1036 = vunpack.c.l.b16 %v336
    %v1037 = vunpack.c.h.b16 %v336
    %v1038 = vunpack.c.l.b16 %v337
    %v1039 = vunpack.c.h.b16 %v337
    %v1040 = vunpack.c.l.b16 %v338
    %v1041 = vunpack.c.h.b16 %v338
    %v1042 = vunpack.c.l.b16 %v339
    %v1043 = vunpack.c.h.b16 %v339
    %v1044 = vunpack.c.l.b16 %v340
    %v1045 = vunpack.c.h.b16 %v340
    %v1046 = vunpack.c.l.b16 %v341
    %v1047 = vunpack.c.h.b16 %v341
    %v1048 = vunpack.c.l.b16 %v342
    %v1049 = vunpack.c.h.b16 %v342
    %v1050 = vunpack.c.l.b16 %v343
    %v1051 = vunpack.c.h.b16 %v343
    %v1052 = vunpack.c.l.b16 %v344
    %v1053 = vunpack.c.h.b16 %v344
    %v1054 = vunpack.c.l.b16 %v345
    %v1055 = vunpack.c.h.b16 %v345
    %v1056 = vunpack.c.l.b16 %v346
    %v1057 = vunpack.c.h.b16 %v346
    %v1058 = vunpack.c.l.b16 %v347
    %v1059 = vunpack.c.h.b16 %v347
    %v1060 = vunpack.c.l.b16 %v348
    %v1061 = vunpack.c.h.b16 %v348
    %v1062 = vunpack.c.l.b16 %v349
    %v1063 = vunpack.c.h.b16 %v349
    %v1064 = vunpack.c.l.b16 %v350
    %v1065 = vunpack.c.h.b16 %v350
    %v1066 = vunpack.c.l.b16 %v351
    %v1067 = vunpack.c.h.b16 %v351
    %v1068 = vunpack.c.l.b16 %v352
    %v1069 = vunpack.c.h.b16 %v352
    %v1070 = vunpack.c.l.b16 %v353
    %v1071 = vunpack.c.h.b16 %v353
    %v1072 = vunpack.c.l.b16 %v354
    %v1073 = vunpack.c.h.b16 %v354
    %v1074 = vunpack.c.l.b16 %v355
    %v1075 = vunpack.c.h.b16 %v355
    %v1076 = vunpack.c.l.b16 %v356
    %v1077 = vunpack.c.h.b16 %v356
    %v1078 = vunpack.c.l.b16 %v357
    %v1079 = vunpack.c.h.b16 %v357
    %v1080 = vunpack.c.l.b16 %v358
    %v1081 = vunpack.c.h.b16 %v358
    %v1082 = vunpack.c.l.b16 %v359
    %v1083 = vunpack.c.h.b16 %v359
    %v1084 = vunpack.c.l.b16 %v360
    %v1085 = vunpack.c.h.b16 %v360
    %v1086 = vunpack.c.l.b16 %v361
    %v1087 = vunpack.c.h.b16 %v361
    %v1088 = vunpack.c.l.b16 %v362
    %v1089 = vunpack.c.h.b16 %v362
    %v1090 = vunpack.c.l.b16 %v363
    %v1091 = vunpack.c.h.b16 %v363
    %v1092 = vunpack.c.l.b16 %v364
    %v1093 = vunpack.c.h.b16 %v364
    %v1094 = vunpack.c.l.b16 %v365
    %v1095 = vunpack.c.h.b16 %v365
    %v1096 = vunpack.c.l.b16 %v366
    %v1097 = vunpack.c.h.b16 %v366
    %v1098 = vunpack.c.l.b16 %v367
    %v1099 = vunpack.c.h.b16 %v367
    %v1100 = vunpack.c.l.b16 %v368
    %v1101 = vunpack.c.h.b16 %v368
    %v1102 = vunpack.c.l.b16 %v369
    %v1103 = vunpack.c.h.b16 %v369
    %v1104 = vunpack.c.l.b16 %v370
    %v1105 = vunpack.c.h.b16 %v370
    %v1106 = vunpack.c.l.b16 %v371
    %v1107 = vunpack.c.h.b16 %v371
    %v1108 = vunpack.c.l.b16 %v372
    %v1109 = vunpack.c.h.b16 %v372
    %v1110 = vunpack.c.l.b16 %v373
    %v1111 = vunpack.c.h.b16 %v373
    %v1112 = vunpack.c.l.b16 %v374
    %v1113 = vunpack.c.h.b16 %v374
    %v1114 = vunpack.c.l.b16 %v375
    %v1115 = vunpack.c.h.b16 %v375
    %v1116 = vunpack.c.l.b16 %v376
    %v1117 = vunpack.c.h.b16 %v376
    %v1118 = vunpack.c.l.b16 %v377
    %v1119 = vunpack.c.h.b16 %v377
    %v1120 = vunpack.c.l.b16 %v378
    %v1121 = vunpack.c.h.b16 %v378
    %v1122 = vunpack.c.l.b16 %v379
    %v1123 = vunpack.c.h.b16 %v379
    %v1124 = vunpack.c.l.b16 %v380
    %v1125 = vunpack.c.h.b16 %v380
    %v1126 = vunpack.c.l.b16 %v381
    %v1127 = vunpack.c.h.b16 %v381
    %v1128 = vunpack.c.l.b16 %v382
    %v1129 = vunpack.c.h.b16 %v382
    %v1130 = vunpack.c.l.b16 %v383
    %v1131 = vunpack.c.h.b16 %v383
    %v1132 = vunpack.c.l.b16 %v384
    %v1133 = vunpack.c.h.b16 %v384
    %v1134 = vunpack.c.l.b16 %v385
    %v1135 = vunpack.c.h.b16 %v385
    %v1136 = vunpack.c.l.b16 %v386
    %v1137 = vunpack.c.h.b16 %v386
    %v1138 = vunpack.c.l.b16 %v387
    %v1139 = vunpack.c.h.b16 %v387
    %v1140 = vunpack.c.l.b16 %v388
    %v1141 = vunpack.c.h.b16 %v388
    %v1142 = vunpack.c.l.b16 %v389
    %v1143 = vunpack.c.h.b16 %v389
    %v1144 = vunpack.c.l.b16 %v390
    %v1145 = vunpack.c.h.b16 %v390
    %v1146 = vunpack.c.l.b16 %v391
    %v1147 = vunpack.c.h.b16 %v391
    %v1148 = vunpack.c.l.b16 %v392
    %v1149 = vunpack.c.h.b16 %v392
    %v1150 = vunpack.c.l.b16 %v393
    %v1151 = vunpack.c.h.b16 %v393
    %v1152 = vunpack.c.l.b16 %v394
    %v1153 = vunpack.c.h.b16 %v394
    %v1154 = vunpack.c.l.b16 %v395
    %v1155 = vunpack.c.h.b16 %v395
    %v1156 = vunpack.c.l.b16 %v396
    %v1157 = vunpack.c.h.b16 %v396
    %v1158 = vunpack.c.l.b16 %v397
    %v1159 = vunpack.c.h.b16 %v397
    %v1160 = vunpack.c.l.b16 %v398
    %v1161 = vunpack.c.h.b16 %v398
    %v1162 = vunpack.c.l.b16 %v399
    %v1163 = vunpack.c.h.b16 %v399
    %v1164 = vunpack.c.l.b16 %v400
    %v1165 = vunpack.c.h.b16 %v400
    %v1166 = vunpack.c.l.b16 %v401
    %v1167 = vunpack.c.h.b16 %v401
    %v1168 = vunpack.c.l.b16 %v402
    %v1169 = vunpack.c.h.b16 %v402
    %v1170 = vunpack.c.l.b16 %v403
    %v1171 = vunpack.c.h.b16 %v403
    %v1172 = vunpack.c.l.b16 %v404
    %v1173 = vunpack.c.h.b16 %v404
    %v1174 = vunpack.c.l.b16 %v405
    %v1175 = vunpack.c.h.b16 %v405
    %v1176 = vunpack.c.l.b16 %v406
    %v1177 = vunpack.c.h.b16 %v406
    %v1178 = vunpack.c.l.b16 %v407
    %v1179 = vunpack.c.h.b16 %v407
    %v1180 = vunpack.c.l.b16 %v408
    %v1181 = vunpack.c.h.b16 %v408
    %v1182 = vunpack.c.l.b16 %v409
    %v1183 = vunpack.c.h.b16 %v409
    %v1184 = vunpack.c.l.b16 %v410
    %v1185 = vunpack.c.h.b16 %v410
    %v1186 = vunpack.c.l.b16 %v411
    %v1187 = vunpack.c.h.b16 %v411
    %v1188 = vunpack.c.l.b16 %v412
    %v1189 = vunpack.c.h.b16 %v412
    %v1190 = vunpack.c.l.b16 %v413
    %v1191 = vunpack.c.h.b16 %v413
    %v1192 = vpack.c.b16 %v684, %v680
    %v1193 = vpack.c.b16 %v685, %v681
    %v1194 = vpack.c.b16 %v686, %v682
    %v1195 = vpack.c.b16 %v687, %v683
    %v1196 = vpack.c.b16 %v692, %v688
    %v1197 = vpack.c.b16 %v693, %v689
    %v1198 = vpack.c.b16 %v694, %v690
    %v1199 = vpack.c.b16 %v695, %v691
    %v1200 = vpack.c.b16 %v700, %v696
    %v1201 = vpack.c.b16 %v701, %v697
    %v1202 = vpack.c.b16 %v702, %v698
    %v1203 = vpack.c.b16 %v703, %v699
    %v1204 = vpack.c.b16 %v708, %v704
    %v1205 = vpack.c.b16 %v709, %v705
    %v1206 = vpack.c.b16 %v710, %v706
    %v1207 = vpack.c.b16 %v711, %v707
    %v1208 = vpack.c.b16 %v716, %v712
    %v1209 = vpack.c.b16 %v717, %v713
    %v1210 = vpack.c.b16 %v718, %v714
    %v1211 = vpack.c.b16 %v719, %v715
    %v1212 = vpack.c.b16 %v724, %v720
    %v1213 = vpack.c.b16 %v725, %v721
    %v1214 = vpack.c.b16 %v726, %v722
    %v1215 = vpack.c.b16 %v727, %v723
    %v1216 = vpack.c.b16 %v732, %v728
    %v1217 = vpack.c.b16 %v733, %v729
    %v1218 = vpack.c.b16 %v734, %v730
    %v1219 = vpack.c.b16 %v735, %v731
    %v1220 = vpack.c.b16 %v740, %v736
    %v1221 = vpack.c.b16 %v741, %v737
    %v1222 = vpack.c.b16 %v742, %v738
    %v1223 = vpack.c.b16 %v743, %v739
    %v1224 = vpack.c.b16 %v748, %v744
    %v1225 = vpack.c.b16 %v749, %v745
    %v1226 = vpack.c.b16 %v750, %v746
    %v1227 = vpack.c.b16 %v751, %v747
    %v1228 = vpack.c.b16 %v756, %v752
    %v1229 = vpack.c.b16 %v757, %v753
    %v1230 = vpack.c.b16 %v758, %v754
    %v1231 = vpack.c.b16 %v759, %v755
    %v1232 = vpack.c.b16 %v764, %v760
    %v1233 = vpack.c.b16 %v765, %v761
    %v1234 = vpack.c.b16 %v766, %v762
    %v1235 = vpack.c.b16 %v767, %v763
    %v1236 = vpack.c.b16 %v772, %v768
    %v1237 = vpack.c.b16 %v773, %v769
    %v1238 = vpack.c.b16 %v774, %v770
    %v1239 = vpack.c.b16 %v775, %v771
    %v1240 = vpack.c.b16 %v780, %v776
    %v1241 = vpack.c.b16 %v781, %v777
    %v1242 = vpack.c.b16 %v782, %v778
    %v1243 = vpack.c.b16 %v783, %v779
    %v1244 = vpack.c.b16 %v788, %v784
    %v1245 = vpack.c.b16 %v789, %v785
    %v1246 = vpack.c.b16 %v790, %v786
    %v1247 = vpack.c.b16 %v791, %v787
    %v1248 = vpack.c.b16 %v796, %v792
    %v1249 = vpack.c.b16 %v797, %v793
    %v1250 = vpack.c.b16 %v798, %v794
    %v1251 = vpack.c.b16 %v799, %v795
    %v1252 = vpack.c.b16 %v804, %v800
    %v1253 = vpack.c.b16 %v805, %v801
    %v1254 = vpack.c.b16 %v806, %v802
    %v1255 = vpack.c.b16 %v807, %v803
    %v1256 = vpack.c.b16 %v812, %v808
    %v1257 = vpack.c.b16 %v813, %v809
    %v1258 = vpack.c.b16 %v814, %v810
    %v1259 = vpack.c.b16 %v815, %v811
    %v1260 = vpack.c.b16 %v820, %v816
    %v1261 = vpack.c.b16 %v821, %v817
    %v1262 = vpack.c.b16 %v822, %v818
    %v1263 = vpack.c.b16 %v823, %v819
    %v1264 = vpack.c.b16 %v828, %v824
    %v1265 = vpack.c.b16 %v829, %v825
    %v1266 = vpack.c.b16 %v830, %v826
    %v1267 = vpack.c.b16 %v831, %v827
    %v1268 = vpack.c.b16 %v836, %v832
    %v1269 = vpack.c.b16 %v837, %v833
    %v1270 = vpack.c.b16 %v838, %v834
    %v1271 = vpack.c.b16 %v839, %v835
    %v1272 = vpack.c.b16 %v844, %v840
    %v1273 = vpack.c.b16 %v845, %v841
    %v1274 = vpack.c.b16 %v846, %v842
    %v1275 = vpack.c.b16 %v847, %v843
    %v1276 = vpack.c.b16 %v852, %v848
    %v1277 = vpack.c.b16 %v853, %v849
    %v1278 = vpack.c.b16 %v854, %v850
    %v1279 = vpack.c.b16 %v855, %v851
    %v1280 = vpack.c.b16 %v860, %v856
    %v1281 = vpack.c.b16 %v861, %v857
    %v1282 = vpack.c.b16 %v862, %v858
    %v1283 = vpack.c.b16 %v863, %v859
    %v1284 = vpack.c.b16 %v868, %v864
    %v1285 = vpack.c.b16 %v869, %v865
    %v1286 = vpack.c.b16 %v870, %v866
    %v1287 = vpack.c.b16 %v871, %v867
    %v1288 = vpack.c.b16 %v876, %v872
    %v1289 = vpack.c.b16 %v877, %v873
    %v1290 = vpack.c.b16 %v878, %v874
    %v1291 = vpack.c.b16 %v879, %v875
    %v1292 = vpack.c.b16 %v884, %v880
    %v1293 = vpack.c.b16 %v885, %v881
    %v1294 = vpack.c.b16 %v886, %v882
    %v1295 = vpack.c.b16 %v887, %v883
    %v1296 = vpack.c.b16 %v892, %v888
    %v1297 = vpack.c.b16 %v893, %v889
    %v1298 = vpack.c.b16 %v894, %v890
    %v1299 = vpack.c.b16 %v895, %v891
    %v1300 = vpack.c.b16 %v900, %v896
    %v1301 = vpack.c.b16 %v901, %v897
    %v1302 = vpack.c.b16 %v902, %v898
    %v1303 = vpack.c.b16 %v903, %v899
    %v1304 = vpack.c.b16 %v908, %v904
    %v1305 = vpack.c.b16 %v909, %v905
    %v1306 = vpack.c.b16 %v910, %v906
    %v1307 = vpack.c.b16 %v911, %v907
    %v1308 = vpack.c.b16 %v916, %v912
    %v1309 = vpack.c.b16 %v917, %v913
    %v1310 = vpack.c.b16 %v918, %v914
    %v1311 = vpack.c.b16 %v919, %v915
    %v1312 = vpack.c.b16 %v924, %v920
    %v1313 = vpack.c.b16 %v925, %v921
    %v1314 = vpack.c.b16 %v926, %v922
    %v1315 = vpack.c.b16 %v927, %v923
    %v1316 = vpack.c.b16 %v932, %v928
    %v1317 = vpack.c.b16 %v933, %v929
    %v1318 = vpack.c.b16 %v934, %v930
    %v1319 = vpack.c.b16 %v935, %v931
    %v1320 = vpack.c.b16 %v940, %v936
    %v1321 = vpack.c.b16 %v941, %v937
    %v1322 = vpack.c.b16 %v942, %v938
    %v1323 = vpack.c.b16 %v943, %v939
    %v1324 = vpack.c.b16 %v948, %v944
    %v1325 = vpack.c.b16 %v949, %v945
    %v1326 = vpack.c.b16 %v950, %v946
    %v1327 = vpack.c.b16 %v951, %v947
    %v1328 = vpack.c.b16 %v956, %v952
    %v1329 = vpack.c.b16 %v957, %v953
    %v1330 = vpack.c.b16 %v958, %v954
    %v1331 = vpack.c.b16 %v959, %v955
    %v1332 = vpack.c.b16 %v964, %v960
    %v1333 = vpack.c.b16 %v965, %v961
    %v1334 = vpack.c.b16 %v966, %v962
    %v1335 = vpack.c.b16 %v967, %v963
    %v1336 = vpack.c.b16 %v972, %v968
    %v1337 = vpack.c.b16 %v973, %v969
    %v1338 = vpack.c.b16 %v974, %v970
    %v1339 = vpack.c.b16 %v975, %v971
    %v1340 = vpack.c.b16 %v980, %v976
    %v1341 = vpack.c.b16 %v981, %v977
    %v1342 = vpack.c.b16 %v982, %v978
    %v1343 = vpack.c.b16 %v983, %v979
    %v1344 = vpack.c.b16 %v988, %v984
    %v1345 = vpack.c.b16 %v989, %v985
    %v1346 = vpack.c.b16 %v990, %v986
    %v1347 = vpack.c.b16 %v991, %v987
    %v1348 = vpack.c.b16 %v996, %v992
    %v1349 = vpack.c.b16 %v997, %v993
    %v1350 = vpack.c.b16 %v998, %v994
    %v1351 = vpack.c.b16 %v999, %v995
    %v1352 = vpack.c.b16 %v1004, %v1000
    %v1353 = vpack.c.b16 %v1005, %v1001
    %v1354 = vpack.c.b16 %v1006, %v1002
    %v1355 = vpack.c.b16 %v1007, %v1003
    %v1356 = vpack.c.b16 %v1012, %v1008
    %v1357 = vpack.c.b16 %v1013, %v1009
    %v1358 = vpack.c.b16 %v1014, %v1010
    %v1359 = vpack.c.b16 %v1015, %v1011
    %v1360 = vpack.c.b16 %v1020, %v1016
    %v1361 = vpack.c.b16 %v1021, %v1017
    %v1362 = vpack.c.b16 %v1022, %v1018
    %v1363 = vpack.c.b16 %v1023, %v1019
    %v1364 = vpack.c.b16 %v1028, %v1024
    %v1365 = vpack.c.b16 %v1029, %v1025
    %v1366 = vpack.c.b16 %v1030, %v1026
    %v1367 = vpack.c.b16 %v1031, %v1027
    %v1368 = vpack.c.b16 %v1036, %v1032
    %v1369 = vpack.c.b16 %v1037, %v1033
    %v1370 = vpack.c.b16 %v1038, %v1034
    %v1371 = vpack.c.b16 %v1039, %v1035
    %v1372 = vpack.c.b16 %v1044, %v1040
    %v1373 = vpack.c.b16 %v1045, %v1041
    %v1374 = vpack.c.b16 %v1046, %v1042
    %v1375 = vpack.c.b16 %v1047, %v1043
    %v1376 = vpack.c.b16 %v1052, %v1048
    %v1377 = vpack.c.b16 %v1053, %v1049
    %v1378 = vpack.c.b16 %v1054, %v1050
    %v1379 = vpack.c.b16 %v1055, %v1051
    %v1380 = vpack.c.b16 %v1060, %v1056
    %v1381 = vpack.c.b16 %v1061, %v1057
    %v1382 = vpack.c.b16 %v1062, %v1058
    %v1383 = vpack.c.b16 %v1063, %v1059
    %v1384 = vpack.c.b16 %v1068, %v1064
    %v1385 = vpack.c.b16 %v1069, %v1065
    %v1386 = vpack.c.b16 %v1070, %v1066
    %v1387 = vpack.c.b16 %v1071, %v1067
    %v1388 = vpack.c.b16 %v1076, %v1072
    %v1389 = vpack.c.b16 %v1077, %v1073
    %v1390 = vpack.c.b16 %v1078, %v1074
    %v1391 = vpack.c.b16 %v1079, %v1075
    %v1392 = vpack.c.b16 %v1084, %v1080
    %v1393 = vpack.c.b16 %v1085, %v1081
    %v1394 = vpack.c.b16 %v1086, %v1082
    %v1395 = vpack.c.b16 %v1087, %v1083
    %v1396 = vpack.c.b16 %v1092, %v1088
    %v1397 = vpack.c.b16 %v1093, %v1089
    %v1398 = vpack.c.b16 %v1094, %v1090
    %v1399 = vpack.c.b16 %v1095, %v1091
    %v1400 = vpack.c.b16 %v1100, %v1096
    %v1401 = vpack.c.b16 %v1101, %v1097
    %v1402 = vpack.c.b16 %v1102, %v1098
    %v1403 = vpack.c.b16 %v1103, %v1099
    %v1404 = vpack.c.b16 %v1108, %v1104
    %v1405 = vpack.c.b16 %v1109, %v1105
    %v1406 = vpack.c.b16 %v1110, %v1106
    %v1407 = vpack.c.b16 %v1111, %v1107
    %v1408 = vpack.c.b16 %v1116, %v1112
    %v1409 = vpack.c.b16 %v1117, %v1113
    %v1410 = vpack.c.b16 %v1118, %v1114
    %v1411 = vpack.c.b16 %v1119, %v1115
    %v1412 = vpack.c.b16 %v1124, %v1120
    %v1413 = vpack.c.b16 %v1125, %v1121
    %v1414 = vpack.c.b16 %v1126, %v1122
    %v1415 = vpack.c.b16 %v1127, %v1123
    %v1416 = vpack.c.b16 %v1132, %v1128
    %v1417 = vpack.c.b16 %v1133, %v1129
    %v1418 = vpack.c.b16 %v1134, %v1130
    %v1419 = vpack.c.b16 %v1135, %v1131
    %v1420 = vpack.c.b16 %v1140, %v1136
    %v1421 = vpack.c.b16 %v1141, %v1137
    %v1422 = vpack.c.b16 %v1142, %v1138
    %v1423 = vpack.c.b16 %v1143, %v1139
    %v1424 = vpack.c.b16 %v1148, %v1144
    %v1425 = vpack.c.b16 %v1149, %v1145
    %v1426 = vpack.c.b16 %v1150, %v1146
    %v1427 = vpack.c.b16 %v1151, %v1147
    %v1428 = vpack.c.b16 %v1156, %v1152
    %v1429 = vpack.c.b16 %v1157, %v1153
    %v1430 = vpack.c.b16 %v1158, %v1154
    %v1431 = vpack.c.b16 %v1159, %v1155
    %v1432 = vpack.c.b16 %v1164, %v1160
    %v1433 = vpack.c.b16 %v1165, %v1161
    %v1434 = vpack.c.b16 %v1166, %v1162
    %v1435 = vpack.c.b16 %v1167, %v1163
    %v1436 = vpack.c.b16 %v1172, %v1168
    %v1437 = vpack.c.b16 %v1173, %v1169
    %v1438 = vpack.c.b16 %v1174, %v1170
    %v1439 = vpack.c.b16 %v1175, %v1171
    %v1440 = vpack.c.b16 %v1180, %v1176
    %v1441 = vpack.c.b16 %v1181, %v1177
    %v1442 = vpack.c.b16 %v1182, %v1178
    %v1443 = vpack.c.b16 %v1183, %v1179
    %v1444 = vpack.c.b16 %v1188, %v1184
    %v1445 = vpack.c.b16 %v1189, %v1185
    %v1446 = vpack.c.b16 %v1190, %v1186
    %v1447 = vpack.c.b16 %v1191, %v1187
    %1704 = vmatpush.bf16.msra.mxu0 %v1220
    %1705 = vmatpush.bf16.msra.mxu0 %v1216
    %1706 = vmatpush.bf16.msra.mxu0 %v1212
    %1707 = vmatpush.bf16.msra.mxu0 %v1208
    %1708 = vmatpush.bf16.msra.mxu0 %v1204
    %1709 = vmatpush.bf16.msra.mxu0 %v1200
    %1710 = vmatpush.bf16.msra.mxu0 %v1196
    %1711 = vmatpush.bf16.msra.mxu0 %v1192
    %1712 = vmatmul.bf16.gmra.mxu0 %v150
    %v1713 = vpop.f32.mrf.mxu0
    %v1714 = vadd.f32 %v416, %v1713
    %v1715 = vpop.f32.mrf.mxu0
    %1716 = vdwg.mxu0
    %1717 = vmatpush.bf16.msra.mxu0 %v1252
    %1718 = vmatpush.bf16.msra.mxu0 %v1248
    %1719 = vmatpush.bf16.msra.mxu0 %v1244
    %1720 = vmatpush.bf16.msra.mxu0 %v1240
    %1721 = vmatpush.bf16.msra.mxu0 %v1236
    %1722 = vmatpush.bf16.msra.mxu0 %v1232
    %1723 = vmatpush.bf16.msra.mxu0 %v1228
    %1724 = vmatpush.bf16.msra.mxu0 %v1224
    %1725 = vmatmul.bf16.gmra.mxu0 %v151
    %v1726 = vpop.f32.mrf.mxu0
    %v1727 = vadd.f32 %v1714, %v1726
    %v1728 = vpop.f32.mrf.mxu0
    %1729 = vdwg.mxu0
    %1730 = vmatpush.bf16.msra.mxu0 %v1284
    %1731 = vmatpush.bf16.msra.mxu0 %v1280
    %1732 = vmatpush.bf16.msra.mxu0 %v1276
    %1733 = vmatpush.bf16.msra.mxu0 %v1272
    %1734 = vmatpush.bf16.msra.mxu0 %v1268
    %1735 = vmatpush.bf16.msra.mxu0 %v1264
    %1736 = vmatpush.bf16.msra.mxu0 %v1260
    %1737 = vmatpush.bf16.msra.mxu0 %v1256
    %1738 = vmatmul.bf16.gmra.mxu0 %v152
    %v1739 = vpop.f32.mrf.mxu0
    %v1740 = vadd.f32 %v1727, %v1739
    %v1741 = vpop.f32.mrf.mxu0
    %1742 = vdwg.mxu0
    %1743 = vmatpush.bf16.msra.mxu0 %v1316
    %1744 = vmatpush.bf16.msra.mxu0 %v1312
    %1745 = vmatpush.bf16.msra.mxu0 %v1308
    %1746 = vmatpush.bf16.msra.mxu0 %v1304
    %1747 = vmatpush.bf16.msra.mxu0 %v1300
    %1748 = vmatpush.bf16.msra.mxu0 %v1296
    %1749 = vmatpush.bf16.msra.mxu0 %v1292
    %1750 = vmatpush.bf16.msra.mxu0 %v1288
    %1751 = vmatmul.bf16.gmra.mxu0 %v153
    %v1752 = vpop.f32.mrf.mxu0
    %v1753 = vadd.f32 %v1740, %v1752
    %v1754 = vpop.f32.mrf.mxu0
    %1755 = vdwg.mxu0
    %1756 = vmatpush.bf16.msra.mxu0 %v1348
    %1757 = vmatpush.bf16.msra.mxu0 %v1344
    %1758 = vmatpush.bf16.msra.mxu0 %v1340
    %1759 = vmatpush.bf16.msra.mxu0 %v1336
    %1760 = vmatpush.bf16.msra.mxu0 %v1332
    %1761 = vmatpush.bf16.msra.mxu0 %v1328
    %1762 = vmatpush.bf16.msra.mxu0 %v1324
    %1763 = vmatpush.bf16.msra.mxu0 %v1320
    %1764 = vmatmul.bf16.gmra.mxu0 %v154
    %v1765 = vpop.f32.mrf.mxu0
    %v1766 = vadd.f32 %v1753, %v1765
    %v1767 = vpop.f32.mrf.mxu0
    %1768 = vdwg.mxu0
    %1769 = vmatpush.bf16.msra.mxu0 %v1380
    %1770 = vmatpush.bf16.msra.mxu0 %v1376
    %1771 = vmatpush.bf16.msra.mxu0 %v1372
    %1772 = vmatpush.bf16.msra.mxu0 %v1368
    %1773 = vmatpush.bf16.msra.mxu0 %v1364
    %1774 = vmatpush.bf16.msra.mxu0 %v1360
    %1775 = vmatpush.bf16.msra.mxu0 %v1356
    %1776 = vmatpush.bf16.msra.mxu0 %v1352
    %1777 = vmatmul.bf16.gmra.mxu0 %v155
    %v1778 = vpop.f32.mrf.mxu0
    %v1779 = vadd.f32 %v1766, %v1778
    %v1780 = vpop.f32.mrf.mxu0
    %1781 = vdwg.mxu0
    %1782 = vmatpush.bf16.msra.mxu0 %v1412
    %1783 = vmatpush.bf16.msra.mxu0 %v1408
    %1784 = vmatpush.bf16.msra.mxu0 %v1404
    %1785 = vmatpush.bf16.msra.mxu0 %v1400
    %1786 = vmatpush.bf16.msra.mxu0 %v1396
    %1787 = vmatpush.bf16.msra.mxu0 %v1392
    %1788 = vmatpush.bf16.msra.mxu0 %v1388
    %1789 = vmatpush.bf16.msra.mxu0 %v1384
    %1790 = vmatmul.bf16.gmra.mxu0 %v156
    %v1791 = vpop.f32.mrf.mxu0
    %v1792 = vadd.f32 %v1779, %v1791
    %v1793 = vpop.f32.mrf.mxu0
    %1794 = vdwg.mxu0
    %1795 = vmatpush.bf16.msra.mxu0 %v1444
    %1796 = vmatpush.bf16.msra.mxu0 %v1440
    %1797 = vmatpush.bf16.msra.mxu0 %v1436
    %1798 = vmatpush.bf16.msra.mxu0 %v1432
    %1799 = vmatpush.bf16.msra.mxu0 %v1428
    %1800 = vmatpush.bf16.msra.mxu0 %v1424
    %1801 = vmatpush.bf16.msra.mxu0 %v1420
    %1802 = vmatpush.bf16.msra.mxu0 %v1416
    %1803 = vmatmul.bf16.gmra.mxu0 %v157
    %v1804 = vpop.f32.mrf.mxu0
    %v1805 = vadd.f32 %v1792, %v1804
    %v1806 = vpop.f32.mrf.mxu0
    %1807 = vdwg.mxu0
    %1808 = vmatpush.bf16.msra.mxu0 %v1221
    %1809 = vmatpush.bf16.msra.mxu0 %v1217
    %1810 = vmatpush.bf16.msra.mxu0 %v1213
    %1811 = vmatpush.bf16.msra.mxu0 %v1209
    %1812 = vmatpush.bf16.msra.mxu0 %v1205
    %1813 = vmatpush.bf16.msra.mxu0 %v1201
    %1814 = vmatpush.bf16.msra.mxu0 %v1197
    %1815 = vmatpush.bf16.msra.mxu0 %v1193
    %1816 = vmatmul.bf16.gmra.mxu0 %v150
    %v1817 = vpop.f32.mrf.mxu0
    %v1818 = vadd.f32 %v417, %v1817
    %v1819 = vpop.f32.mrf.mxu0
    %1820 = vdwg.mxu0
    %1821 = vmatpush.bf16.msra.mxu0 %v1253
    %1822 = vmatpush.bf16.msra.mxu0 %v1249
    %1823 = vmatpush.bf16.msra.mxu0 %v1245
    %1824 = vmatpush.bf16.msra.mxu0 %v1241
    %1825 = vmatpush.bf16.msra.mxu0 %v1237
    %1826 = vmatpush.bf16.msra.mxu0 %v1233
    %1827 = vmatpush.bf16.msra.mxu0 %v1229
    %1828 = vmatpush.bf16.msra.mxu0 %v1225
    %1829 = vmatmul.bf16.gmra.mxu0 %v151
    %v1830 = vpop.f32.mrf.mxu0
    %v1831 = vadd.f32 %v1818, %v1830
    %v1832 = vpop.f32.mrf.mxu0
    %1833 = vdwg.mxu0
    %1834 = vmatpush.bf16.msra.mxu0 %v1285
    %1835 = vmatpush.bf16.msra.mxu0 %v1281
    %1836 = vmatpush.bf16.msra.mxu0 %v1277
    %1837 = vmatpush.bf16.msra.mxu0 %v1273
    %1838 = vmatpush.bf16.msra.mxu0 %v1269
    %1839 = vmatpush.bf16.msra.mxu0 %v1265
    %1840 = vmatpush.bf16.msra.mxu0 %v1261
    %1841 = vmatpush.bf16.msra.mxu0 %v1257
    %1842 = vmatmul.bf16.gmra.mxu0 %v152
    %v1843 = vpop.f32.mrf.mxu0
    %v1844 = vadd.f32 %v1831, %v1843
    %v1845 = vpop.f32.mrf.mxu0
    %1846 = vdwg.mxu0
    %1847 = vmatpush.bf16.msra.mxu0 %v1317
    %1848 = vmatpush.bf16.msra.mxu0 %v1313
    %1849 = vmatpush.bf16.msra.mxu0 %v1309
    %1850 = vmatpush.bf16.msra.mxu0 %v1305
    %1851 = vmatpush.bf16.msra.mxu0 %v1301
    %1852 = vmatpush.bf16.msra.mxu0 %v1297
    %1853 = vmatpush.bf16.msra.mxu0 %v1293
    %1854 = vmatpush.bf16.msra.mxu0 %v1289
    %1855 = vmatmul.bf16.gmra.mxu0 %v153
    %v1856 = vpop.f32.mrf.mxu0
    %v1857 = vadd.f32 %v1844, %v1856
    %v1858 = vpop.f32.mrf.mxu0
    %1859 = vdwg.mxu0
    %1860 = vmatpush.bf16.msra.mxu0 %v1349
    %1861 = vmatpush.bf16.msra.mxu0 %v1345
    %1862 = vmatpush.bf16.msra.mxu0 %v1341
    %1863 = vmatpush.bf16.msra.mxu0 %v1337
    %1864 = vmatpush.bf16.msra.mxu0 %v1333
    %1865 = vmatpush.bf16.msra.mxu0 %v1329
    %1866 = vmatpush.bf16.msra.mxu0 %v1325
    %1867 = vmatpush.bf16.msra.mxu0 %v1321
    %1868 = vmatmul.bf16.gmra.mxu0 %v154
    %v1869 = vpop.f32.mrf.mxu0
    %v1870 = vadd.f32 %v1857, %v1869
    %v1871 = vpop.f32.mrf.mxu0
    %1872 = vdwg.mxu0
    %1873 = vmatpush.bf16.msra.mxu0 %v1381
    %1874 = vmatpush.bf16.msra.mxu0 %v1377
    %1875 = vmatpush.bf16.msra.mxu0 %v1373
    %1876 = vmatpush.bf16.msra.mxu0 %v1369
    %1877 = vmatpush.bf16.msra.mxu0 %v1365
    %1878 = vmatpush.bf16.msra.mxu0 %v1361
    %1879 = vmatpush.bf16.msra.mxu0 %v1357
    %1880 = vmatpush.bf16.msra.mxu0 %v1353
    %1881 = vmatmul.bf16.gmra.mxu0 %v155
    %v1882 = vpop.f32.mrf.mxu0
    %v1883 = vadd.f32 %v1870, %v1882
    %v1884 = vpop.f32.mrf.mxu0
    %1885 = vdwg.mxu0
    %1886 = vmatpush.bf16.msra.mxu0 %v1413
    %1887 = vmatpush.bf16.msra.mxu0 %v1409
    %1888 = vmatpush.bf16.msra.mxu0 %v1405
    %1889 = vmatpush.bf16.msra.mxu0 %v1401
    %1890 = vmatpush.bf16.msra.mxu0 %v1397
    %1891 = vmatpush.bf16.msra.mxu0 %v1393
    %1892 = vmatpush.bf16.msra.mxu0 %v1389
    %1893 = vmatpush.bf16.msra.mxu0 %v1385
    %1894 = vmatmul.bf16.gmra.mxu0 %v156
    %v1895 = vpop.f32.mrf.mxu0
    %v1896 = vadd.f32 %v1883, %v1895
    %v1897 = vpop.f32.mrf.mxu0
    %1898 = vdwg.mxu0
    %1899 = vmatpush.bf16.msra.mxu0 %v1445
    %1900 = vmatpush.bf16.msra.mxu0 %v1441
    %1901 = vmatpush.bf16.msra.mxu0 %v1437
    %1902 = vmatpush.bf16.msra.mxu0 %v1433
    %1903 = vmatpush.bf16.msra.mxu0 %v1429
    %1904 = vmatpush.bf16.msra.mxu0 %v1425
    %1905 = vmatpush.bf16.msra.mxu0 %v1421
    %1906 = vmatpush.bf16.msra.mxu0 %v1417
    %1907 = vmatmul.bf16.gmra.mxu0 %v157
    %v1908 = vpop.f32.mrf.mxu0
    %v1909 = vadd.f32 %v1896, %v1908
    %v1910 = vpop.f32.mrf.mxu0
    %1911 = vdwg.mxu0
    %1912 = vmatpush.bf16.msra.mxu0 %v1222
    %1913 = vmatpush.bf16.msra.mxu0 %v1218
    %1914 = vmatpush.bf16.msra.mxu0 %v1214
    %1915 = vmatpush.bf16.msra.mxu0 %v1210
    %1916 = vmatpush.bf16.msra.mxu0 %v1206
    %1917 = vmatpush.bf16.msra.mxu0 %v1202
    %1918 = vmatpush.bf16.msra.mxu0 %v1198
    %1919 = vmatpush.bf16.msra.mxu0 %v1194
    %1920 = vmatmul.bf16.gmra.mxu0 %v150
    %v1921 = vpop.f32.mrf.mxu0
    %v1922 = vadd.f32 %v418, %v1921
    %v1923 = vpop.f32.mrf.mxu0
    %1924 = vdwg.mxu0
    %1925 = vmatpush.bf16.msra.mxu0 %v1254
    %1926 = vmatpush.bf16.msra.mxu0 %v1250
    %1927 = vmatpush.bf16.msra.mxu0 %v1246
    %1928 = vmatpush.bf16.msra.mxu0 %v1242
    %1929 = vmatpush.bf16.msra.mxu0 %v1238
    %1930 = vmatpush.bf16.msra.mxu0 %v1234
    %1931 = vmatpush.bf16.msra.mxu0 %v1230
    %1932 = vmatpush.bf16.msra.mxu0 %v1226
    %1933 = vmatmul.bf16.gmra.mxu0 %v151
    %v1934 = vpop.f32.mrf.mxu0
    %v1935 = vadd.f32 %v1922, %v1934
    %v1936 = vpop.f32.mrf.mxu0
    %1937 = vdwg.mxu0
    %1938 = vmatpush.bf16.msra.mxu0 %v1286
    %1939 = vmatpush.bf16.msra.mxu0 %v1282
    %1940 = vmatpush.bf16.msra.mxu0 %v1278
    %1941 = vmatpush.bf16.msra.mxu0 %v1274
    %1942 = vmatpush.bf16.msra.mxu0 %v1270
    %1943 = vmatpush.bf16.msra.mxu0 %v1266
    %1944 = vmatpush.bf16.msra.mxu0 %v1262
    %1945 = vmatpush.bf16.msra.mxu0 %v1258
    %1946 = vmatmul.bf16.gmra.mxu0 %v152
    %v1947 = vpop.f32.mrf.mxu0
    %v1948 = vadd.f32 %v1935, %v1947
    %v1949 = vpop.f32.mrf.mxu0
    %1950 = vdwg.mxu0
    %1951 = vmatpush.bf16.msra.mxu0 %v1318
    %1952 = vmatpush.bf16.msra.mxu0 %v1314
    %1953 = vmatpush.bf16.msra.mxu0 %v1310
    %1954 = vmatpush.bf16.msra.mxu0 %v1306
    %1955 = vmatpush.bf16.msra.mxu0 %v1302
    %1956 = vmatpush.bf16.msra.mxu0 %v1298
    %1957 = vmatpush.bf16.msra.mxu0 %v1294
    %1958 = vmatpush.bf16.msra.mxu0 %v1290
    %1959 = vmatmul.bf16.gmra.mxu0 %v153
    %v1960 = vpop.f32.mrf.mxu0
    %v1961 = vadd.f32 %v1948, %v1960
    %v1962 = vpop.f32.mrf.mxu0
    %1963 = vdwg.mxu0
    %1964 = vmatpush.bf16.msra.mxu0 %v1350
    %1965 = vmatpush.bf16.msra.mxu0 %v1346
    %1966 = vmatpush.bf16.msra.mxu0 %v1342
    %1967 = vmatpush.bf16.msra.mxu0 %v1338
    %1968 = vmatpush.bf16.msra.mxu0 %v1334
    %1969 = vmatpush.bf16.msra.mxu0 %v1330
    %1970 = vmatpush.bf16.msra.mxu0 %v1326
    %1971 = vmatpush.bf16.msra.mxu0 %v1322
    %1972 = vmatmul.bf16.gmra.mxu0 %v154
    %v1973 = vpop.f32.mrf.mxu0
    %v1974 = vadd.f32 %v1961, %v1973
    %v1975 = vpop.f32.mrf.mxu0
    %1976 = vdwg.mxu0
    %1977 = vmatpush.bf16.msra.mxu0 %v1382
    %1978 = vmatpush.bf16.msra.mxu0 %v1378
    %1979 = vmatpush.bf16.msra.mxu0 %v1374
    %1980 = vmatpush.bf16.msra.mxu0 %v1370
    %1981 = vmatpush.bf16.msra.mxu0 %v1366
    %1982 = vmatpush.bf16.msra.mxu0 %v1362
    %1983 = vmatpush.bf16.msra.mxu0 %v1358
    %1984 = vmatpush.bf16.msra.mxu0 %v1354
    %1985 = vmatmul.bf16.gmra.mxu0 %v155
    %v1986 = vpop.f32.mrf.mxu0
    %v1987 = vadd.f32 %v1974, %v1986
    %v1988 = vpop.f32.mrf.mxu0
    %1989 = vdwg.mxu0
    %1990 = vmatpush.bf16.msra.mxu0 %v1414
    %1991 = vmatpush.bf16.msra.mxu0 %v1410
    %1992 = vmatpush.bf16.msra.mxu0 %v1406
    %1993 = vmatpush.bf16.msra.mxu0 %v1402
    %1994 = vmatpush.bf16.msra.mxu0 %v1398
    %1995 = vmatpush.bf16.msra.mxu0 %v1394
    %1996 = vmatpush.bf16.msra.mxu0 %v1390
    %1997 = vmatpush.bf16.msra.mxu0 %v1386
    %1998 = vmatmul.bf16.gmra.mxu0 %v156
    %v1999 = vpop.f32.mrf.mxu0
    %v2000 = vadd.f32 %v1987, %v1999
    %v2001 = vpop.f32.mrf.mxu0
    %2002 = vdwg.mxu0
    %2003 = vmatpush.bf16.msra.mxu0 %v1446
    %2004 = vmatpush.bf16.msra.mxu0 %v1442
    %2005 = vmatpush.bf16.msra.mxu0 %v1438
    %2006 = vmatpush.bf16.msra.mxu0 %v1434
    %2007 = vmatpush.bf16.msra.mxu0 %v1430
    %2008 = vmatpush.bf16.msra.mxu0 %v1426
    %2009 = vmatpush.bf16.msra.mxu0 %v1422
    %2010 = vmatpush.bf16.msra.mxu0 %v1418
    %2011 = vmatmul.bf16.gmra.mxu0 %v157
    %v2012 = vpop.f32.mrf.mxu0
    %v2013 = vadd.f32 %v2000, %v2012
    %v2014 = vpop.f32.mrf.mxu0
    %2015 = vdwg.mxu0
    %2016 = vmatpush.bf16.msra.mxu0 %v1223
    %2017 = vmatpush.bf16.msra.mxu0 %v1219
    %2018 = vmatpush.bf16.msra.mxu0 %v1215
    %2019 = vmatpush.bf16.msra.mxu0 %v1211
    %2020 = vmatpush.bf16.msra.mxu0 %v1207
    %2021 = vmatpush.bf16.msra.mxu0 %v1203
    %2022 = vmatpush.bf16.msra.mxu0 %v1199
    %2023 = vmatpush.bf16.msra.mxu0 %v1195
    %2024 = vmatmul.bf16.gmra.mxu0 %v150
    %v2025 = vpop.f32.mrf.mxu0
    %v2026 = vadd.f32 %v419, %v2025
    %v2027 = vpop.f32.mrf.mxu0
    %2028 = vdwg.mxu0
    %2029 = vmatpush.bf16.msra.mxu0 %v1255
    %2030 = vmatpush.bf16.msra.mxu0 %v1251
    %2031 = vmatpush.bf16.msra.mxu0 %v1247
    %2032 = vmatpush.bf16.msra.mxu0 %v1243
    %2033 = vmatpush.bf16.msra.mxu0 %v1239
    %2034 = vmatpush.bf16.msra.mxu0 %v1235
    %2035 = vmatpush.bf16.msra.mxu0 %v1231
    %2036 = vmatpush.bf16.msra.mxu0 %v1227
    %2037 = vmatmul.bf16.gmra.mxu0 %v151
    %v2038 = vpop.f32.mrf.mxu0
    %v2039 = vadd.f32 %v2026, %v2038
    %v2040 = vpop.f32.mrf.mxu0
    %2041 = vdwg.mxu0
    %2042 = vmatpush.bf16.msra.mxu0 %v1287
    %2043 = vmatpush.bf16.msra.mxu0 %v1283
    %2044 = vmatpush.bf16.msra.mxu0 %v1279
    %2045 = vmatpush.bf16.msra.mxu0 %v1275
    %2046 = vmatpush.bf16.msra.mxu0 %v1271
    %2047 = vmatpush.bf16.msra.mxu0 %v1267
    %2048 = vmatpush.bf16.msra.mxu0 %v1263
    %2049 = vmatpush.bf16.msra.mxu0 %v1259
    %2050 = vmatmul.bf16.gmra.mxu0 %v152
    %v2051 = vpop.f32.mrf.mxu0
    %v2052 = vadd.f32 %v2039, %v2051
    %v2053 = vpop.f32.mrf.mxu0
    %2054 = vdwg.mxu0
    %2055 = vmatpush.bf16.msra.mxu0 %v1319
    %2056 = vmatpush.bf16.msra.mxu0 %v1315
    %2057 = vmatpush.bf16.msra.mxu0 %v1311
    %2058 = vmatpush.bf16.msra.mxu0 %v1307
    %2059 = vmatpush.bf16.msra.mxu0 %v1303
    %2060 = vmatpush.bf16.msra.mxu0 %v1299
    %2061 = vmatpush.bf16.msra.mxu0 %v1295
    %2062 = vmatpush.bf16.msra.mxu0 %v1291
    %2063 = vmatmul.bf16.gmra.mxu0 %v153
    %v2064 = vpop.f32.mrf.mxu0
    %v2065 = vadd.f32 %v2052, %v2064
    %v2066 = vpop.f32.mrf.mxu0
    %2067 = vdwg.mxu0
    %2068 = vmatpush.bf16.msra.mxu0 %v1351
    %2069 = vmatpush.bf16.msra.mxu0 %v1347
    %2070 = vmatpush.bf16.msra.mxu0 %v1343
    %2071 = vmatpush.bf16.msra.mxu0 %v1339
    %2072 = vmatpush.bf16.msra.mxu0 %v1335
    %2073 = vmatpush.bf16.msra.mxu0 %v1331
    %2074 = vmatpush.bf16.msra.mxu0 %v1327
    %2075 = vmatpush.bf16.msra.mxu0 %v1323
    %2076 = vmatmul.bf16.gmra.mxu0 %v154
    %v2077 = vpop.f32.mrf.mxu0
    %v2078 = vadd.f32 %v2065, %v2077
    %v2079 = vpop.f32.mrf.mxu0
    %2080 = vdwg.mxu0
    %2081 = vmatpush.bf16.msra.mxu0 %v1383
    %2082 = vmatpush.bf16.msra.mxu0 %v1379
    %2083 = vmatpush.bf16.msra.mxu0 %v1375
    %2084 = vmatpush.bf16.msra.mxu0 %v1371
    %2085 = vmatpush.bf16.msra.mxu0 %v1367
    %2086 = vmatpush.bf16.msra.mxu0 %v1363
    %2087 = vmatpush.bf16.msra.mxu0 %v1359
    %2088 = vmatpush.bf16.msra.mxu0 %v1355
    %2089 = vmatmul.bf16.gmra.mxu0 %v155
    %v2090 = vpop.f32.mrf.mxu0
    %v2091 = vadd.f32 %v2078, %v2090
    %v2092 = vpop.f32.mrf.mxu0
    %2093 = vdwg.mxu0
    %2094 = vmatpush.bf16.msra.mxu0 %v1415
    %2095 = vmatpush.bf16.msra.mxu0 %v1411
    %2096 = vmatpush.bf16.msra.mxu0 %v1407
    %2097 = vmatpush.bf16.msra.mxu0 %v1403
    %2098 = vmatpush.bf16.msra.mxu0 %v1399
    %2099 = vmatpush.bf16.msra.mxu0 %v1395
    %2100 = vmatpush.bf16.msra.mxu0 %v1391
    %2101 = vmatpush.bf16.msra.mxu0 %v1387
    %2102 = vmatmul.bf16.gmra.mxu0 %v156
    %v2103 = vpop.f32.mrf.mxu0
    %v2104 = vadd.f32 %v2091, %v2103
    %v2105 = vpop.f32.mrf.mxu0
    %2106 = vdwg.mxu0
    %2107 = vmatpush.bf16.msra.mxu0 %v1447
    %2108 = vmatpush.bf16.msra.mxu0 %v1443
    %2109 = vmatpush.bf16.msra.mxu0 %v1439
    %2110 = vmatpush.bf16.msra.mxu0 %v1435
    %2111 = vmatpush.bf16.msra.mxu0 %v1431
    %2112 = vmatpush.bf16.msra.mxu0 %v1427
    %2113 = vmatpush.bf16.msra.mxu0 %v1423
    %2114 = vmatpush.bf16.msra.mxu0 %v1419
    %2115 = vmatmul.bf16.gmra.mxu0 %v157
    %v2116 = vpop.f32.mrf.mxu0
    %v2117 = vadd.f32 %v2104, %v2116
    %v2118 = vpop.f32.mrf.mxu0
    %2119 = vdwg.mxu0
    %vm2120 = vcmp.gt.f32.partialorder %v1805, 0.0
    %vm2121 = vcmp.gt.f32.partialorder %v1909, 0.0
    %vm2122 = vcmp.gt.f32.partialorder %v2013, 0.0
    %vm2123 = vcmp.gt.f32.partialorder %v2117, 0.0
    %v2124 = vmul.f32 %v1805, 0.2
    %v2125 = vmul.f32 %v1909, 0.2
    %v2126 = vmul.f32 %v2013, 0.2
    %v2127 = vmul.f32 %v2117, 0.2
    %v2128 = vsel %vm2120, %v1805, %v2124
    %v2129 = vsel %vm2121, %v1909, %v2125
    %v2130 = vsel %vm2122, %v2013, %v2126
    %v2131 = vsel %vm2123, %v2117, %v2127
    %v2132 = vpack.c.bf16 %v2128, %v2128
    %v2133 = vpack.c.bf16 %v2129, %v2129
    %v2134 = vpack.c.bf16 %v2130, %v2130
    %v2135 = vpack.c.bf16 %v2131, %v2131
    %v2136 = vld [vmem:[#allocation9] sm:$0xff]
    %v2137 = vld [vmem:[#allocation9 + $0x8] sm:$0xff]
    %v2138 = vld [vmem:[#allocation9 + $0x10] sm:$0xff]
    %v2139 = vld [vmem:[#allocation9 + $0x18] sm:$0xff]
    %v2140 = vld [vmem:[#allocation9 + $0x20] sm:$0xff]
    %v2141 = vld [vmem:[#allocation9 + $0x28] sm:$0xff]
    %v2142 = vld [vmem:[#allocation9 + $0x30] sm:$0xff]
    %v2143 = vld [vmem:[#allocation9 + $0x38] sm:$0xff]
    %v2144 = vld [vmem:[#allocation9 + $0x40] sm:$0xff]
    %v2145 = vld [vmem:[#allocation9 + $0x48] sm:$0xff]
    %v2146 = vld [vmem:[#allocation9 + $0x50] sm:$0xff]
    %v2147 = vld [vmem:[#allocation9 + $0x58] sm:$0xff]
    %v2148 = vld [vmem:[#allocation9 + $0x60] sm:$0xff]
    %v2149 = vld [vmem:[#allocation9 + $0x68] sm:$0xff]
    %v2150 = vld [vmem:[#allocation9 + $0x70] sm:$0xff]
    %v2151 = vld [vmem:[#allocation9 + $0x78] sm:$0xff]
    %v2152 = vld [vmem:[#allocation9 + $0x80] sm:$0xff]
    %v2153 = vld [vmem:[#allocation9 + $0x88] sm:$0xff]
    %v2154 = vld [vmem:[#allocation9 + $0x90] sm:$0xff]
    %v2155 = vld [vmem:[#allocation9 + $0x98] sm:$0xff]
    %v2156 = vld [vmem:[#allocation9 + $0xa0] sm:$0xff]
    %v2157 = vld [vmem:[#allocation9 + $0xa8] sm:$0xff]
    %v2158 = vld [vmem:[#allocation9 + $0xb0] sm:$0xff]
    %v2159 = vld [vmem:[#allocation9 + $0xb8] sm:$0xff]
    %v2160 = vld [vmem:[#allocation9 + $0xc0] sm:$0xff]
    %v2161 = vld [vmem:[#allocation9 + $0xc8] sm:$0xff]
    %v2162 = vld [vmem:[#allocation9 + $0xd0] sm:$0xff]
    %v2163 = vld [vmem:[#allocation9 + $0xd8] sm:$0xff]
    %v2164 = vld [vmem:[#allocation9 + $0xe0] sm:$0xff]
    %v2165 = vld [vmem:[#allocation9 + $0xe8] sm:$0xff]
    %v2166 = vld [vmem:[#allocation9 + $0xf0] sm:$0xff]
    %v2167 = vld [vmem:[#allocation9 + $0xf8] sm:$0xff]
    %v2168 = vld [vmem:[#allocation9 + $0x100] sm:$0xff]
    %v2169 = vld [vmem:[#allocation9 + $0x108] sm:$0xff]
    %v2170 = vld [vmem:[#allocation9 + $0x110] sm:$0xff]
    %v2171 = vld [vmem:[#allocation9 + $0x118] sm:$0xff]
    %v2172 = vld [vmem:[#allocation9 + $0x120] sm:$0xff]
    %v2173 = vld [vmem:[#allocation9 + $0x128] sm:$0xff]
    %v2174 = vld [vmem:[#allocation9 + $0x130] sm:$0xff]
    %v2175 = vld [vmem:[#allocation9 + $0x138] sm:$0xff]
    %v2176 = vld [vmem:[#allocation9 + $0x140] sm:$0xff]
    %v2177 = vld [vmem:[#allocation9 + $0x148] sm:$0xff]
    %v2178 = vld [vmem:[#allocation9 + $0x150] sm:$0xff]
    %v2179 = vld [vmem:[#allocation9 + $0x158] sm:$0xff]
    %v2180 = vld [vmem:[#allocation9 + $0x160] sm:$0xff]
    %v2181 = vld [vmem:[#allocation9 + $0x168] sm:$0xff]
    %v2182 = vld [vmem:[#allocation9 + $0x170] sm:$0xff]
    %v2183 = vld [vmem:[#allocation9 + $0x178] sm:$0xff]
    %v2184 = vld [vmem:[#allocation9 + $0x180] sm:$0xff]
    %v2185 = vld [vmem:[#allocation9 + $0x188] sm:$0xff]
    %v2186 = vld [vmem:[#allocation9 + $0x190] sm:$0xff]
    %v2187 = vld [vmem:[#allocation9 + $0x198] sm:$0xff]
    %v2188 = vld [vmem:[#allocation9 + $0x1a0] sm:$0xff]
    %v2189 = vld [vmem:[#allocation9 + $0x1a8] sm:$0xff]
    %v2190 = vld [vmem:[#allocation9 + $0x1b0] sm:$0xff]
    %v2191 = vld [vmem:[#allocation9 + $0x1b8] sm:$0xff]
    %v2192 = vld [vmem:[#allocation9 + $0x1c0] sm:$0xff]
    %v2193 = vld [vmem:[#allocation9 + $0x1c8] sm:$0xff]
    %v2194 = vld [vmem:[#allocation9 + $0x1d0] sm:$0xff]
    %v2195 = vld [vmem:[#allocation9 + $0x1d8] sm:$0xff]
    %v2196 = vld [vmem:[#allocation9 + $0x1e0] sm:$0xff]
    %v2197 = vld [vmem:[#allocation9 + $0x1e8] sm:$0xff]
    %v2198 = vld [vmem:[#allocation9 + $0x1f0] sm:$0xff]
    %v2199 = vld [vmem:[#allocation9 + $0x1f8] sm:$0xff]
    %v2200 = vld [vmem:[%s4] sm:$0x3]
    %v2202 = vperm.slane %v2200, 0
    %v2203 = vperm.slane %v2200, 1
    %v2270 = vunpack.c.l.b16 %v2136
    %v2271 = vunpack.c.h.b16 %v2136
    %v2272 = vunpack.c.l.b16 %v2137
    %v2273 = vunpack.c.h.b16 %v2137
    %v2274 = vunpack.c.l.b16 %v2138
    %v2275 = vunpack.c.h.b16 %v2138
    %v2276 = vunpack.c.l.b16 %v2139
    %v2277 = vunpack.c.h.b16 %v2139
    %v2278 = vunpack.c.l.b16 %v2140
    %v2279 = vunpack.c.h.b16 %v2140
    %v2280 = vunpack.c.l.b16 %v2141
    %v2281 = vunpack.c.h.b16 %v2141
    %v2282 = vunpack.c.l.b16 %v2142
    %v2283 = vunpack.c.h.b16 %v2142
    %v2284 = vunpack.c.l.b16 %v2143
    %v2285 = vunpack.c.h.b16 %v2143
    %v2286 = vunpack.c.l.b16 %v2144
    %v2287 = vunpack.c.h.b16 %v2144
    %v2288 = vunpack.c.l.b16 %v2145
    %v2289 = vunpack.c.h.b16 %v2145
    %v2290 = vunpack.c.l.b16 %v2146
    %v2291 = vunpack.c.h.b16 %v2146
    %v2292 = vunpack.c.l.b16 %v2147
    %v2293 = vunpack.c.h.b16 %v2147
    %v2294 = vunpack.c.l.b16 %v2148
    %v2295 = vunpack.c.h.b16 %v2148
    %v2296 = vunpack.c.l.b16 %v2149
    %v2297 = vunpack.c.h.b16 %v2149
    %v2298 = vunpack.c.l.b16 %v2150
    %v2299 = vunpack.c.h.b16 %v2150
    %v2300 = vunpack.c.l.b16 %v2151
    %v2301 = vunpack.c.h.b16 %v2151
    %v2302 = vunpack.c.l.b16 %v2152
    %v2303 = vunpack.c.h.b16 %v2152
    %v2304 = vunpack.c.l.b16 %v2153
    %v2305 = vunpack.c.h.b16 %v2153
    %v2306 = vunpack.c.l.b16 %v2154
    %v2307 = vunpack.c.h.b16 %v2154
    %v2308 = vunpack.c.l.b16 %v2155
    %v2309 = vunpack.c.h.b16 %v2155
    %v2310 = vunpack.c.l.b16 %v2156
    %v2311 = vunpack.c.h.b16 %v2156
    %v2312 = vunpack.c.l.b16 %v2157
    %v2313 = vunpack.c.h.b16 %v2157
    %v2314 = vunpack.c.l.b16 %v2158
    %v2315 = vunpack.c.h.b16 %v2158
    %v2316 = vunpack.c.l.b16 %v2159
    %v2317 = vunpack.c.h.b16 %v2159
    %v2318 = vunpack.c.l.b16 %v2160
    %v2319 = vunpack.c.h.b16 %v2160
    %v2320 = vunpack.c.l.b16 %v2161
    %v2321 = vunpack.c.h.b16 %v2161
    %v2322 = vunpack.c.l.b16 %v2162
    %v2323 = vunpack.c.h.b16 %v2162
    %v2324 = vunpack.c.l.b16 %v2163
    %v2325 = vunpack.c.h.b16 %v2163
    %v2326 = vunpack.c.l.b16 %v2164
    %v2327 = vunpack.c.h.b16 %v2164
    %v2328 = vunpack.c.l.b16 %v2165
    %v2329 = vunpack.c.h.b16 %v2165
    %v2330 = vunpack.c.l.b16 %v2166
    %v2331 = vunpack.c.h.b16 %v2166
    %v2332 = vunpack.c.l.b16 %v2167
    %v2333 = vunpack.c.h.b16 %v2167
    %v2334 = vunpack.c.l.b16 %v2168
    %v2335 = vunpack.c.h.b16 %v2168
    %v2336 = vunpack.c.l.b16 %v2169
    %v2337 = vunpack.c.h.b16 %v2169
    %v2338 = vunpack.c.l.b16 %v2170
    %v2339 = vunpack.c.h.b16 %v2170
    %v2340 = vunpack.c.l.b16 %v2171
    %v2341 = vunpack.c.h.b16 %v2171
    %v2342 = vunpack.c.l.b16 %v2172
    %v2343 = vunpack.c.h.b16 %v2172
    %v2344 = vunpack.c.l.b16 %v2173
    %v2345 = vunpack.c.h.b16 %v2173
    %v2346 = vunpack.c.l.b16 %v2174
    %v2347 = vunpack.c.h.b16 %v2174
    %v2348 = vunpack.c.l.b16 %v2175
    %v2349 = vunpack.c.h.b16 %v2175
    %v2350 = vunpack.c.l.b16 %v2176
    %v2351 = vunpack.c.h.b16 %v2176
    %v2352 = vunpack.c.l.b16 %v2177
    %v2353 = vunpack.c.h.b16 %v2177
    %v2354 = vunpack.c.l.b16 %v2178
    %v2355 = vunpack.c.h.b16 %v2178
    %v2356 = vunpack.c.l.b16 %v2179
    %v2357 = vunpack.c.h.b16 %v2179
    %v2358 = vunpack.c.l.b16 %v2180
    %v2359 = vunpack.c.h.b16 %v2180
    %v2360 = vunpack.c.l.b16 %v2181
    %v2361 = vunpack.c.h.b16 %v2181
    %v2362 = vunpack.c.l.b16 %v2182
    %v2363 = vunpack.c.h.b16 %v2182
    %v2364 = vunpack.c.l.b16 %v2183
    %v2365 = vunpack.c.h.b16 %v2183
    %v2366 = vunpack.c.l.b16 %v2184
    %v2367 = vunpack.c.h.b16 %v2184
    %v2368 = vunpack.c.l.b16 %v2185
    %v2369 = vunpack.c.h.b16 %v2185
    %v2370 = vunpack.c.l.b16 %v2186
    %v2371 = vunpack.c.h.b16 %v2186
    %v2372 = vunpack.c.l.b16 %v2187
    %v2373 = vunpack.c.h.b16 %v2187
    %v2374 = vunpack.c.l.b16 %v2188
    %v2375 = vunpack.c.h.b16 %v2188
    %v2376 = vunpack.c.l.b16 %v2189
    %v2377 = vunpack.c.h.b16 %v2189
    %v2378 = vunpack.c.l.b16 %v2190
    %v2379 = vunpack.c.h.b16 %v2190
    %v2380 = vunpack.c.l.b16 %v2191
    %v2381 = vunpack.c.h.b16 %v2191
    %v2382 = vunpack.c.l.b16 %v2192
    %v2383 = vunpack.c.h.b16 %v2192
    %v2384 = vunpack.c.l.b16 %v2193
    %v2385 = vunpack.c.h.b16 %v2193
    %v2386 = vunpack.c.l.b16 %v2194
    %v2387 = vunpack.c.h.b16 %v2194
    %v2388 = vunpack.c.l.b16 %v2195
    %v2389 = vunpack.c.h.b16 %v2195
    %v2390 = vunpack.c.l.b16 %v2196
    %v2391 = vunpack.c.h.b16 %v2196
    %v2392 = vunpack.c.l.b16 %v2197
    %v2393 = vunpack.c.h.b16 %v2197
    %v2394 = vunpack.c.l.b16 %v2198
    %v2395 = vunpack.c.h.b16 %v2198
    %v2396 = vunpack.c.l.b16 %v2199
    %v2397 = vunpack.c.h.b16 %v2199
    %v2398 = vpack.c.b16 %v2272, %v2270
    %v2399 = vpack.c.b16 %v2273, %v2271
    %v2400 = vpack.c.b16 %v2276, %v2274
    %v2401 = vpack.c.b16 %v2277, %v2275
    %v2402 = vpack.c.b16 %v2280, %v2278
    %v2403 = vpack.c.b16 %v2281, %v2279
    %v2404 = vpack.c.b16 %v2284, %v2282
    %v2405 = vpack.c.b16 %v2285, %v2283
    %v2406 = vpack.c.b16 %v2288, %v2286
    %v2407 = vpack.c.b16 %v2289, %v2287
    %v2408 = vpack.c.b16 %v2292, %v2290
    %v2409 = vpack.c.b16 %v2293, %v2291
    %v2410 = vpack.c.b16 %v2296, %v2294
    %v2411 = vpack.c.b16 %v2297, %v2295
    %v2412 = vpack.c.b16 %v2300, %v2298
    %v2413 = vpack.c.b16 %v2301, %v2299
    %v2414 = vpack.c.b16 %v2304, %v2302
    %v2415 = vpack.c.b16 %v2305, %v2303
    %v2416 = vpack.c.b16 %v2308, %v2306
    %v2417 = vpack.c.b16 %v2309, %v2307
    %v2418 = vpack.c.b16 %v2312, %v2310
    %v2419 = vpack.c.b16 %v2313, %v2311
    %v2420 = vpack.c.b16 %v2316, %v2314
    %v2421 = vpack.c.b16 %v2317, %v2315
    %v2422 = vpack.c.b16 %v2320, %v2318
    %v2423 = vpack.c.b16 %v2321, %v2319
    %v2424 = vpack.c.b16 %v2324, %v2322
    %v2425 = vpack.c.b16 %v2325, %v2323
    %v2426 = vpack.c.b16 %v2328, %v2326
    %v2427 = vpack.c.b16 %v2329, %v2327
    %v2428 = vpack.c.b16 %v2332, %v2330
    %v2429 = vpack.c.b16 %v2333, %v2331
    %v2430 = vpack.c.b16 %v2336, %v2334
    %v2431 = vpack.c.b16 %v2337, %v2335
    %v2432 = vpack.c.b16 %v2340, %v2338
    %v2433 = vpack.c.b16 %v2341, %v2339
    %v2434 = vpack.c.b16 %v2344, %v2342
    %v2435 = vpack.c.b16 %v2345, %v2343
    %v2436 = vpack.c.b16 %v2348, %v2346
    %v2437 = vpack.c.b16 %v2349, %v2347
    %v2438 = vpack.c.b16 %v2352, %v2350
    %v2439 = vpack.c.b16 %v2353, %v2351
    %v2440 = vpack.c.b16 %v2356, %v2354
    %v2441 = vpack.c.b16 %v2357, %v2355
    %v2442 = vpack.c.b16 %v2360, %v2358
    %v2443 = vpack.c.b16 %v2361, %v2359
    %v2444 = vpack.c.b16 %v2364, %v2362
    %v2445 = vpack.c.b16 %v2365, %v2363
    %v2446 = vpack.c.b16 %v2368, %v2366
    %v2447 = vpack.c.b16 %v2369, %v2367
    %v2448 = vpack.c.b16 %v2372, %v2370
    %v2449 = vpack.c.b16 %v2373, %v2371
    %v2450 = vpack.c.b16 %v2376, %v2374
    %v2451 = vpack.c.b16 %v2377, %v2375
    %v2452 = vpack.c.b16 %v2380, %v2378
    %v2453 = vpack.c.b16 %v2381, %v2379
    %v2454 = vpack.c.b16 %v2384, %v2382
    %v2455 = vpack.c.b16 %v2385, %v2383
    %v2456 = vpack.c.b16 %v2388, %v2386
    %v2457 = vpack.c.b16 %v2389, %v2387
    %v2458 = vpack.c.b16 %v2392, %v2390
    %v2459 = vpack.c.b16 %v2393, %v2391
    %v2460 = vpack.c.b16 %v2396, %v2394
    %v2461 = vpack.c.b16 %v2397, %v2395
    %2526 = vmatpush.bf16.msra.mxu0 %v2412
    %2527 = vmatpush.bf16.msra.mxu0 %v2410
    %2528 = vmatpush.bf16.msra.mxu0 %v2408
    %2529 = vmatpush.bf16.msra.mxu0 %v2406
    %2530 = vmatpush.bf16.msra.mxu0 %v2404
    %2531 = vmatpush.bf16.msra.mxu0 %v2402
    %2532 = vmatpush.bf16.msra.mxu0 %v2400
    %2533 = vmatpush.bf16.msra.mxu0 %v2398
    %2534 = vmatmul.bf16.gmra.mxu0 %v2132
    %v2535 = vpop.f32.mrf.mxu0
    %v2536 = vadd.f32 %v2202, %v2535
    %v2537 = vpop.f32.mrf.mxu0
    %2538 = vdwg.mxu0
    %2539 = vmatpush.bf16.msra.mxu0 %v2428
    %2540 = vmatpush.bf16.msra.mxu0 %v2426
    %2541 = vmatpush.bf16.msra.mxu0 %v2424
    %2542 = vmatpush.bf16.msra.mxu0 %v2422
    %2543 = vmatpush.bf16.msra.mxu0 %v2420
    %2544 = vmatpush.bf16.msra.mxu0 %v2418
    %2545 = vmatpush.bf16.msra.mxu0 %v2416
    %2546 = vmatpush.bf16.msra.mxu0 %v2414
    %2547 = vmatmul.bf16.gmra.mxu0 %v2133
    %v2548 = vpop.f32.mrf.mxu0
    %v2549 = vadd.f32 %v2536, %v2548
    %v2550 = vpop.f32.mrf.mxu0
    %2551 = vdwg.mxu0
    %2552 = vmatpush.bf16.msra.mxu0 %v2444
    %2553 = vmatpush.bf16.msra.mxu0 %v2442
    %2554 = vmatpush.bf16.msra.mxu0 %v2440
    %2555 = vmatpush.bf16.msra.mxu0 %v2438
    %2556 = vmatpush.bf16.msra.mxu0 %v2436
    %2557 = vmatpush.bf16.msra.mxu0 %v2434
    %2558 = vmatpush.bf16.msra.mxu0 %v2432
    %2559 = vmatpush.bf16.msra.mxu0 %v2430
    %2560 = vmatmul.bf16.gmra.mxu0 %v2134
    %v2561 = vpop.f32.mrf.mxu0
    %v2562 = vadd.f32 %v2549, %v2561
    %v2563 = vpop.f32.mrf.mxu0
    %2564 = vdwg.mxu0
    %2565 = vmatpush.bf16.msra.mxu0 %v2460
    %2566 = vmatpush.bf16.msra.mxu0 %v2458
    %2567 = vmatpush.bf16.msra.mxu0 %v2456
    %2568 = vmatpush.bf16.msra.mxu0 %v2454
    %2569 = vmatpush.bf16.msra.mxu0 %v2452
    %2570 = vmatpush.bf16.msra.mxu0 %v2450
    %2571 = vmatpush.bf16.msra.mxu0 %v2448
    %2572 = vmatpush.bf16.msra.mxu0 %v2446
    %2573 = vmatmul.bf16.gmra.mxu0 %v2135
    %v2574 = vpop.f32.mrf.mxu0
    %v2575 = vadd.f32 %v2562, %v2574
    %v2576 = vpop.f32.mrf.mxu0
    %2577 = vdwg.mxu0
    %2578 = vmatpush.bf16.msra.mxu0 %v2413
    %2579 = vmatpush.bf16.msra.mxu0 %v2411
    %2580 = vmatpush.bf16.msra.mxu0 %v2409
    %2581 = vmatpush.bf16.msra.mxu0 %v2407
    %2582 = vmatpush.bf16.msra.mxu0 %v2405
    %2583 = vmatpush.bf16.msra.mxu0 %v2403
    %2584 = vmatpush.bf16.msra.mxu0 %v2401
    %2585 = vmatpush.bf16.msra.mxu0 %v2399
    %2586 = vmatmul.bf16.gmra.mxu0 %v2132
    %v2587 = vpop.f32.mrf.mxu0
    %v2588 = vadd.f32 %v2203, %v2587
    %v2589 = vpop.f32.mrf.mxu0
    %2590 = vdwg.mxu0
    %2591 = vmatpush.bf16.msra.mxu0 %v2429
    %2592 = vmatpush.bf16.msra.mxu0 %v2427
    %2593 = vmatpush.bf16.msra.mxu0 %v2425
    %2594 = vmatpush.bf16.msra.mxu0 %v2423
    %2595 = vmatpush.bf16.msra.mxu0 %v2421
    %2596 = vmatpush.bf16.msra.mxu0 %v2419
    %2597 = vmatpush.bf16.msra.mxu0 %v2417
    %2598 = vmatpush.bf16.msra.mxu0 %v2415
    %2599 = vmatmul.bf16.gmra.mxu0 %v2133
    %v2600 = vpop.f32.mrf.mxu0
    %v2601 = vadd.f32 %v2588, %v2600
    %v2602 = vpop.f32.mrf.mxu0
    %2603 = vdwg.mxu0
    %2604 = vmatpush.bf16.msra.mxu0 %v2445
    %2605 = vmatpush.bf16.msra.mxu0 %v2443
    %2606 = vmatpush.bf16.msra.mxu0 %v2441
    %2607 = vmatpush.bf16.msra.mxu0 %v2439
    %2608 = vmatpush.bf16.msra.mxu0 %v2437
    %2609 = vmatpush.bf16.msra.mxu0 %v2435
    %2610 = vmatpush.bf16.msra.mxu0 %v2433
    %2611 = vmatpush.bf16.msra.mxu0 %v2431
    %2612 = vmatmul.bf16.gmra.mxu0 %v2134
    %v2613 = vpop.f32.mrf.mxu0
    %v2614 = vadd.f32 %v2601, %v2613
    %v2615 = vpop.f32.mrf.mxu0
    %2616 = vdwg.mxu0
    %2617 = vmatpush.bf16.msra.mxu0 %v2461
    %2618 = vmatpush.bf16.msra.mxu0 %v2459
    %2619 = vmatpush.bf16.msra.mxu0 %v2457
    %2620 = vmatpush.bf16.msra.mxu0 %v2455
    %2621 = vmatpush.bf16.msra.mxu0 %v2453
    %2622 = vmatpush.bf16.msra.mxu0 %v2451
    %2623 = vmatpush.bf16.msra.mxu0 %v2449
    %2624 = vmatpush.bf16.msra.mxu0 %v2447
    %2625 = vmatmul.bf16.gmra.mxu0 %v2135
    %v2626 = vpop.f32.mrf.mxu0
    %v2627 = vadd.f32 %v2614, %v2626
    %v2628 = vpop.f32.mrf.mxu0
    %2629 = vdwg.mxu0
    %vm2630 = vcmp.gt.f32.partialorder %v2575, 0.0
    %vm2631 = vcmp.gt.f32.partialorder %v2627, 0.0
    %v2632 = vmul.f32 %v2575, 0.2
    %v2633 = vmul.f32 %v2627, 0.2
    %v2634 = vsel %vm2630, %v2575, %v2632
    %v2635 = vsel %vm2631, %v2627, %v2633
    %v2636 = vld [vmem:[#allocation11] sm:$0xff]
    %v2637 = vpack.c.bf16 %v2634, %v2634
    %v2638 = vpack.c.bf16 %v2635, %v2635
    %s2639 = sld [smem:[#allocation2]]
    %v2640 = vstv %s2639
    %v2642 = vunpack.c.l.b16 %v2636
    %v2643 = vunpack.c.h.b16 %v2636
    %v2644 = vpack.c.b16 %v2642, %v2642
    %v2645 = vpack.c.b16 %v2643, %v2643
    %2648 = vmatpush.bf16.xpose.msra.mxu0 0
    %2649 = vmatpush.bf16.xpose.msra.mxu0 0
    %2650 = vmatpush.bf16.xpose.msra.mxu0 0
    %2651 = vmatpush.bf16.xpose.msra.mxu0 0
    %2652 = vmatpush.bf16.xpose.msra.mxu0 0
    %2653 = vmatpush.bf16.xpose.msra.mxu0 0
    %2654 = vmatpush.bf16.xpose.msra.mxu0 0
    %2655 = vmatpush.bf16.xpose.msra.mxu0 %v2637
    %2656 = vmatmul.bf16.gmra.mxu0 %v2644
    %v2657 = vpop.f32.mrf.mxu0
    %v2658 = vadd.f32 %v2640, %v2657
    %v2659 = vpop.f32.mrf.mxu0
    %2660 = vdwg.mxu0
    %2661 = vmatpush.bf16.xpose.msra.mxu0 0
    %2662 = vmatpush.bf16.xpose.msra.mxu0 0
    %2663 = vmatpush.bf16.xpose.msra.mxu0 0
    %2664 = vmatpush.bf16.xpose.msra.mxu0 0
    %2665 = vmatpush.bf16.xpose.msra.mxu0 0
    %2666 = vmatpush.bf16.xpose.msra.mxu0 0
    %2667 = vmatpush.bf16.xpose.msra.mxu0 0
    %2668 = vmatpush.bf16.xpose.msra.mxu0 %v2638
    %2669 = vmatmul.bf16.gmra.mxu0 %v2645
    %v2670 = vpop.f32.mrf.mxu0
    %v2671 = vadd.f32 %v2658, %v2670
    %v2672 = vpop.f32.mrf.mxu0
    %2673 = vdwg.mxu0
    %v2674 = vsub.f32 0.0, %v2671
    %v2675 = vmul.f32 %v2674, 1.442695
    %v2676 = vpow.pop %v2675
    %v2677 = vadd.f32 %v2676, 1.0
    %v2678 = vrcp.pop %v2677
    %vm2679 = vcmask 64512
    %2680 = vst.msk [vmem:[#allocation12] sm:$0xff] %vm2679, %v2678
    // Predicated region
    $region50: #{tpu_custom_call.1} parent=1 // pred_check
      _
    $region51: #{tpu_custom_call.1} parent=1 // pred_check_branch
      %2682 = sbr.rel (0) target = $region53
    $region52: #{tpu_custom_call.1} parent=1 // pred_region
      %2684 = vsyncadd [#allocation5], 0
      %s2686 = sshll.u32 [#allocation12], 4
      %s2687 = int_to_ptr.vmem [resolvable:$true] %s2686
      %s2688 = sshll.u32 %s7, 4
      %s2689 = int_to_ptr.hbm [resolvable:$true] %s2688
      %2691 = dma.vmem_to_hbm [thread:$0]  %s2687, 128, %s2689, [#allocation5]
    $region53: #{tpu_custom_call.1} parent=1 // pred_fallthru
      _
    // Predicated region
    $region54: #{tpu_custom_call.1} parent=1 // pred_check
      _
    $region55: #{tpu_custom_call.1} parent=1 // pred_check_branch
      %2693 = sbr.rel (0) target = $region57
    $region56: #{tpu_custom_call.1} parent=1 // pred_region
      %2695 = dma.done [#allocation5], 128
    $region57: #{tpu_custom_call.1} parent=1 // pred_fallthru
      _
    %2696 = vsyncpa [#allocation4], 1
    %2697 = vsyncpa [#allocation7], 1
    %2698 = vsyncpa [#allocation10], 1
    %2699 = vsyncpa [#allocation5], 1

</llo_original>
